<compile_context>
chip_gen: v7x
topology: tpu7x:2x2x1
jax: 0.10.0
libtpu: 0.0.40
codegen_flags: <defaults>
</compile_context>

<pallas_src>
import functools

import jax
import jax.numpy as jnp
from jax.experimental import pallas as pl
from jax.experimental.pallas import tpu as pltpu


ACT_DTYPE = jnp.bfloat16      # inter-kernel activation / weight dtype (f32 accum on MXU)
LN_EPS = 1e-5                 # PyTorch nn.LayerNorm default
_INV_SQRT2 = 0.7071067811865476
_VMEM_LIMIT = 64 * 1024 * 1024


def _cparams(*sems):
    return pltpu.CompilerParams(dimension_semantics=sems,
                                vmem_limit_bytes=_VMEM_LIMIT)


# ---------------------------------------------------------------------------
# Pallas kernels
# ---------------------------------------------------------------------------

def _layernorm_f32(x_ref, g_ref, b_ref):
    x = x_ref[...].astype(jnp.float32)
    mean = jnp.mean(x, axis=-1, keepdims=True)
    var = jnp.mean((x - mean) ** 2, axis=-1, keepdims=True)
    y = (x - mean) * jax.lax.rsqrt(var + LN_EPS)
    return y * g_ref[...] + b_ref[...]


def _ln_matmul_kernel(x_ref, g_ref, b_ref, w_ref, o_ref, y_ref):
    """o = LayerNorm(x) @ W   (no bias; QKV / Q projections).

    LN is computed once per row tile (j==0) and cached in the y_ref VMEM scratch
    for the remaining output-column tiles.
    """
    @pl.when(pl.program_id(1) == 0)
    def _():
        y_ref[...] = _layernorm_f32(x_ref, g_ref, b_ref).astype(y_ref.dtype)
    o_ref[...] = jnp.dot(y_ref[...], w_ref[...],
                         preferred_element_type=jnp.float32).astype(o_ref.dtype)


def _matmul_kernel(x_ref, w_ref, o_ref):
    """o = x @ W   (fused KV projection, no bias)."""
    o_ref[...] = jnp.dot(x_ref[...], w_ref[...],
                         preferred_element_type=jnp.float32).astype(o_ref.dtype)


def _matmul_bias_kernel(x_ref, w_ref, b_ref, o_ref):
    """o = x @ W + b   (fuser 'linear' on grounding tokens)."""
    acc = jnp.dot(x_ref[...], w_ref[...], preferred_element_type=jnp.float32)
    o_ref[...] = (acc + b_ref[...]).astype(o_ref.dtype)


def _out_res_kernel(gate_ref, h_ref, w_ref, b_ref, res_ref, o_ref):
    """o = residual + gate * (h @ Wo + bo)   (gate is a scalar in SMEM)."""
    acc = jnp.dot(h_ref[...], w_ref[...], preferred_element_type=jnp.float32) + b_ref[...]
    o_ref[...] = (res_ref[...].astype(jnp.float32)
                  + gate_ref[0] * acc).astype(o_ref.dtype)


def _ln_geglu_kernel(x_ref, g_ref, b_ref, wa_ref, ba_ref, wg_ref, bg_ref, o_ref, y_ref):
    """o = (LN(x)@Wa + ba) * gelu_exact(LN(x)@Wg + bg)   (GEGLU, split weights)."""
    @pl.when(pl.program_id(1) == 0)
    def _():
        y_ref[...] = _layernorm_f32(x_ref, g_ref, b_ref).astype(y_ref.dtype)
    y = y_ref[...]
    a = jnp.dot(y, wa_ref[...], preferred_element_type=jnp.float32) + ba_ref[...]
    g = jnp.dot(y, wg_ref[...], preferred_element_type=jnp.float32) + bg_ref[...]
    gelu_g = 0.5 * g * (1.0 + jax.lax.erf(g * _INV_SQRT2))
    o_ref[...] = (a * gelu_g).astype(o_ref.dtype)


def _split_heads(x2d, heads, d_head):
    """(S, H*C) -> (H, S, C) via per-head lane slices stacked on a new leading dim."""
    cols = [x2d[:, h * d_head:(h + 1) * d_head][None] for h in range(heads)]
    return jnp.concatenate(cols, axis=0)


def _mha_compute(q2d, kv2d, o_ref, *, heads, d_head):
    """Head-batched attention; q2d (N, H*C), kv2d (M, 2*H*C) = [K | V], all bf16.

    The 1/sqrt(d_head) scale is already folded into Wq; softmax runs in f32; the
    normalizing reciprocal is applied to the small (H,N,C) output.  Output is a
    single lane-dense (N, H*C) bf16 store.
    """
    inner = heads * d_head
    q = _split_heads(q2d, heads, d_head)                    # (H, N, C) bf16
    k = _split_heads(kv2d[:, :inner], heads, d_head)        # (H, M, C) bf16
    v = _split_heads(kv2d[:, inner:], heads, d_head)        # (H, M, C) bf16
    s = jnp.einsum('hnc,hmc->hnm', q, k,
                   preferred_element_type=jnp.float32)      # f32 scores
    s = s - jnp.max(s, axis=-1, keepdims=True)
    p = jnp.exp(s)
    inv = pl.reciprocal(jnp.sum(p, axis=-1, keepdims=True), approx=True)   # (H,N,1)
    out = jnp.einsum('hnm,hmc->hnc', p.astype(v.dtype), v,
                     preferred_element_type=jnp.float32)    # (H, N, C) f32
    out = out * inv
    merged = jnp.concatenate([out[h] for h in range(heads)], axis=-1)      # (N, H*C)
    o_ref[0] = merged.astype(o_ref.dtype)


def _self_mha_kernel(qkv_ref, o_ref, *, heads, d_head):
    # qkv_ref: (1, S, 3*H*C) bf16  ->  o_ref: (1, S, H*C) bf16
    inner = heads * d_head
    qkv = qkv_ref[0]
    _mha_compute(qkv[:, :inner], qkv[:, inner:], o_ref, heads=heads, d_head=d_head)


def _fuser_mha_kernel(qkvx_ref, qkvo_ref, o_ref, *, heads, d_head):
    # qkvx_ref: (1, N, 3*H*C), qkvo_ref: (1, Ng, 3*H*C) -> o_ref: (1, N, H*C).
    # K/V rows of visual + grounding tokens are concatenated in VMEM; queries are
    # computed only for the visual tokens (the PyTorch code discards the rest).
    inner = heads * d_head
    qkvx = qkvx_ref[0]
    qkvo = qkvo_ref[0]
    kv = jnp.concatenate([qkvx[:, inner:], qkvo[:, inner:]], axis=0)
    _mha_compute(qkvx[:, :inner], kv, o_ref, heads=heads, d_head=d_head)


def _cross_mha_kernel(q_ref, kv_ref, o_ref, *, heads, d_head):
    # q_ref: (1, N, H*C), kv_ref: (1, M, 2*H*C)  ->  o_ref: (1, N, H*C)
    _mha_compute(q_ref[0], kv_ref[0], o_ref, heads=heads, d_head=d_head)


# ---------------------------------------------------------------------------
# Tiling helpers + pallas_call wrappers
# ---------------------------------------------------------------------------

def _row_tile(m, cap=512):
    """Largest row tile <= cap dividing m, multiple of 16 (bf16 vreg packing)."""
    if m <= cap:
        return m
    t = (cap // 16) * 16
    while t >= 16:
        if m % t == 0:
            return t
        t -= 16
    return m


def _col_tile(n, cap=1024):
    """Largest lane tile <= cap dividing n; prefer 256-multiples, else 128."""
    if n <= cap:
        return n
    for step in (256, 128):
        t = (cap // step) * step
        while t >= step:
            if n % t == 0:
                return t
            t -= step
    return n


def ln_matmul(x2d, gamma, beta, w):
    m, d = x2d.shape
    n = w.shape[1]
    tm, tn = _row_tile(m), _col_tile(n)
    return pl.pallas_call(
        _ln_matmul_kernel,
        grid=(m // tm, n // tn),
        in_specs=[
            pl.BlockSpec((tm, d), lambda i, j: (i, 0)),
            pl.BlockSpec((1, d), lambda i, j: (0, 0)),
            pl.BlockSpec((1, d), lambda i, j: (0, 0)),
            pl.BlockSpec((d, tn), lambda i, j: (0, j)),
        ],
        out_specs=pl.BlockSpec((tm, tn), lambda i, j: (i, j)),
        out_shape=jax.ShapeDtypeStruct((m, n), ACT_DTYPE),
        scratch_shapes=[pltpu.VMEM((tm, d), ACT_DTYPE)],
        compiler_params=_cparams("parallel", "arbitrary"),
    )(x2d, gamma, beta, w)


def matmul_nobias(x2d, w):
    m, k = x2d.shape
    n = w.shape[1]
    tm, tn = _row_tile(m), _col_tile(n)
    return pl.pallas_call(
        _matmul_kernel,
        grid=(m // tm, n // tn),
        in_specs=[pl.BlockSpec((tm, k), lambda i, j: (i, 0)),
                  pl.BlockSpec((k, tn), lambda i, j: (0, j))],
        out_specs=pl.BlockSpec((tm, tn), lambda i, j: (i, j)),
        out_shape=jax.ShapeDtypeStruct((m, n), ACT_DTYPE),
        compiler_params=_cparams("parallel", "parallel"),
    )(x2d, w)


def matmul_bias(x2d, w, b):
    m, k = x2d.shape
    n = w.shape[1]
    tm, tn = _row_tile(m), _col_tile(n)
    return pl.pallas_call(
        _matmul_bias_kernel,
        grid=(m // tm, n // tn),
        in_specs=[pl.BlockSpec((tm, k), lambda i, j: (i, 0)),
                  pl.BlockSpec((k, tn), lambda i, j: (0, j)),
                  pl.BlockSpec((1, tn), lambda i, j: (0, j))],
        out_specs=pl.BlockSpec((tm, tn), lambda i, j: (i, j)),
        out_shape=jax.ShapeDtypeStruct((m, n), ACT_DTYPE),
        compiler_params=_cparams("parallel", "parallel"),
    )(x2d, w, b)


def ln_geglu(x2d, gamma, beta, wa, ba, wg, bg):
    m, d = x2d.shape
    n = wa.shape[1]
    tm, tn = _row_tile(m), _col_tile(n)
    return pl.pallas_call(
        _ln_geglu_kernel,
        grid=(m // tm, n // tn),
        in_specs=[
            pl.BlockSpec((tm, d), lambda i, j: (i, 0)),
            pl.BlockSpec((1, d), lambda i, j: (0, 0)),
            pl.BlockSpec((1, d), lambda i, j: (0, 0)),
            pl.BlockSpec((d, tn), lambda i, j: (0, j)),
            pl.BlockSpec((1, tn), lambda i, j: (0, j)),
            pl.BlockSpec((d, tn), lambda i, j: (0, j)),
            pl.BlockSpec((1, tn), lambda i, j: (0, j)),
        ],
        out_specs=pl.BlockSpec((tm, tn), lambda i, j: (i, j)),
        out_shape=jax.ShapeDtypeStruct((m, n), ACT_DTYPE),
        scratch_shapes=[pltpu.VMEM((tm, d), ACT_DTYPE)],
        compiler_params=_cparams("parallel", "arbitrary"),
    )(x2d, gamma, beta, wa, ba, wg, bg)


def out_proj_residual(h2d, w, b, res2d, gate):
    m, k = h2d.shape
    d = w.shape[1]
    tm, tn = _row_tile(m), _col_tile(d, cap=512)   # column tiling keeps weight blocks VMEM-friendly on v7x
    return pl.pallas_call(
        _out_res_kernel,
        grid=(m // tm, d // tn),
        in_specs=[
            pl.BlockSpec(memory_space=pltpu.MemorySpace.SMEM),   # gate scalar (1,)
            pl.BlockSpec((tm, k), lambda i, j: (i, 0)),
            pl.BlockSpec((k, tn), lambda i, j: (0, j)),
            pl.BlockSpec((1, tn), lambda i, j: (0, j)),
            pl.BlockSpec((tm, tn), lambda i, j: (i, j)),
        ],
        out_specs=pl.BlockSpec((tm, tn), lambda i, j: (i, j)),
        out_shape=jax.ShapeDtypeStruct((m, d), ACT_DTYPE),
        compiler_params=_cparams("parallel", "parallel"),
    )(gate, h2d, w, b, res2d)


def mha_self(qkv, heads, d_head):
    b, s, w3 = qkv.shape
    inner = heads * d_head
    kern = functools.partial(_self_mha_kernel, heads=heads, d_head=d_head)
    return pl.pallas_call(
        kern,
        grid=(b,),
        in_specs=[pl.BlockSpec((1, s, w3), lambda i: (i, 0, 0))],
        out_specs=pl.BlockSpec((1, s, inner), lambda i: (i, 0, 0)),
        out_shape=jax.ShapeDtypeStruct((b, s, inner), ACT_DTYPE),
        compiler_params=_cparams("parallel"),
    )(qkv)


def mha_fuser(qkv_x, qkv_objs, heads, d_head):
    b, n, w3 = qkv_x.shape
    _, ng, _ = qkv_objs.shape
    inner = heads * d_head
    kern = functools.partial(_fuser_mha_kernel, heads=heads, d_head=d_head)
    return pl.pallas_call(
        kern,
        grid=(b,),
        in_specs=[pl.BlockSpec((1, n, w3), lambda i: (i, 0, 0)),
                  pl.BlockSpec((1, ng, w3), lambda i: (i, 0, 0))],
        out_specs=pl.BlockSpec((1, n, inner), lambda i: (i, 0, 0)),
        out_shape=jax.ShapeDtypeStruct((b, n, inner), ACT_DTYPE),
        compiler_params=_cparams("parallel"),
    )(qkv_x, qkv_objs)


def mha_cross(q, kv, heads, d_head):
    b, n, inner = q.shape
    _, m, w2 = kv.shape
    kern = functools.partial(_cross_mha_kernel, heads=heads, d_head=d_head)
    return pl.pallas_call(
        kern,
        grid=(b,),
        in_specs=[pl.BlockSpec((1, n, inner), lambda i: (i, 0, 0)),
                  pl.BlockSpec((1, m, w2), lambda i: (i, 0, 0))],
        out_specs=pl.BlockSpec((1, n, inner), lambda i: (i, 0, 0)),
        out_shape=jax.ShapeDtypeStruct((b, n, inner), ACT_DTYPE),
        compiler_params=_cparams("parallel"),
    )(q, kv)


# ---------------------------------------------------------------------------
# Module-level blocks (thin JAX glue between fused kernels)
# ---------------------------------------------------------------------------

def attention_block(x, ln_g, ln_b, attn_p, gate, heads, d_head):
    """x + gate * SelfAttention(LayerNorm(x))   (residual length == seq length)."""
    b, s, d = x.shape
    inner = heads * d_head
    qkv = ln_matmul(x.reshape(b * s, d), ln_g, ln_b, attn_p["wqkv"])
    ctx = mha_self(qkv.reshape(b, s, 3 * inner), heads, d_head)
    out = out_proj_residual(ctx.reshape(b * s, inner), attn_p["wo"], attn_p["bo"],
                            x.reshape(b * s, d), gate)
    return out.reshape(b, s, d)


def cross_attention_block(x, ln_g, ln_b, attn_p, context, gate, heads, d_head):
    """x + gate * CrossAttention(LayerNorm(x), context, context)."""
    b, n, d = x.shape
    _, m, dk = context.shape
    inner = heads * d_head
    q = ln_matmul(x.reshape(b * n, d), ln_g, ln_b, attn_p["wq"]).reshape(b, n, inner)
    kv = matmul_nobias(context.reshape(b * m, dk), attn_p["wkv"]).reshape(b, m, 2 * inner)
    ctx = mha_cross(q, kv, heads, d_head)
    out = out_proj_residual(ctx.reshape(b * n, inner), attn_p["wo"], attn_p["bo"],
                            x.reshape(b * n, d), gate)
    return out.reshape(b, n, d)


def feedforward_block(x, ln_g, ln_b, ff_p, gate):
    """x + gate * FeedForward_GEGLU(LayerNorm(x))."""
    b, n, d = x.shape
    h = ln_geglu(x.reshape(b * n, d), ln_g, ln_b,
                 ff_p["w1a"], ff_p["b1a"], ff_p["w1g"], ff_p["b1g"])
    out = out_proj_residual(h, ff_p["w2"], ff_p["b2"], x.reshape(b * n, d), gate)
    return out.reshape(b, n, d)


def gated_self_attention_dense(x, objs, p, heads, d_head):
    """GatedSelfAttentionDense.forward (scale = 1), without the HBM concat/slice:
    x and projected objs are LN+QKV'd separately; the attention kernel joins K/V
    rows in VMEM and only computes queries for the visual tokens."""
    b, n, d = x.shape
    _, ng, dk = objs.shape
    inner = heads * d_head
    objs_p = matmul_bias(objs.reshape(b * ng, dk), p["lin_w"], p["lin_b"])   # (b*ng, d)
    qkv_x = ln_matmul(x.reshape(b * n, d), p["norm1_g"], p["norm1_b"], p["attn"]["wqkv"])
    qkv_o = ln_matmul(objs_p, p["norm1_g"], p["norm1_b"], p["attn"]["wqkv"])
    ctx = mha_fuser(qkv_x.reshape(b, n, 3 * inner), qkv_o.reshape(b, ng, 3 * inner),
                    heads, d_head)
    gate_attn = jnp.tanh(p["alpha_attn"]).reshape(1).astype(jnp.float32)
    gate_ff = jnp.tanh(p["alpha_dense"]).reshape(1).astype(jnp.float32)
    x = out_proj_residual(ctx.reshape(b * n, inner), p["attn"]["wo"], p["attn"]["bo"],
                          x.reshape(b * n, d), gate_attn).reshape(b, n, d)
    x = feedforward_block(x, p["norm2_g"], p["norm2_b"], p["ff"], gate_ff)
    return x


def basic_transformer_block(params, x, context, objs):
    heads, d_head = params["n_heads"], params["d_head"]
    one = jnp.ones((1,), jnp.float32)
    x = x.astype(ACT_DTYPE)
    context = context.astype(ACT_DTYPE)
    objs = objs.astype(ACT_DTYPE)
    # x = attn1(norm1(x)) + x
    x = attention_block(x, params["norm1_g"], params["norm1_b"], params["attn1"],
                        one, heads, d_head)
    # x = fuser(x, objs)            (gatedSA)
    x = gated_self_attention_dense(x, objs, params["fuser"], heads, d_head)
    # x = attn2(norm2(x), context, context) + x
    x = cross_attention_block(x, params["norm2_g"], params["norm2_b"], params["attn2"],
                              context, one, heads, d_head)
    # x = ff(norm3(x)) + x
    x = feedforward_block(x, params["norm3_g"], params["norm3_b"], params["ff"], one)
    return x.astype(jnp.float32)


# ---------------------------------------------------------------------------
# Deterministic synthetic parameter init (fused weight layouts, scale folded in Wq)
# ---------------------------------------------------------------------------

def _init_w(key, d_in, d_out):
    return jax.random.normal(key, (d_in, d_out), jnp.float32) * (d_in ** -0.5)


def _init_b(key, d_out):
    return (jax.random.normal(key, (d_out,), jnp.float32) * 0.02).reshape(1, d_out)


def _init_self_attn(key, dim, inner, d_head):
    kqkv, kwo, kbo = jax.random.split(key, 3)
    wqkv = _init_w(kqkv, dim, 3 * inner)                         # fused Wq|Wk|Wv
    wqkv = wqkv.at[:, :inner].multiply(float(d_head) ** -0.5)    # fold attention scale
    return {"wqkv": wqkv.astype(ACT_DTYPE),
            "wo": _init_w(kwo, inner, dim).astype(ACT_DTYPE),
            "bo": _init_b(kbo, dim)}


def _init_cross_attn(key, q_dim, kv_dim, inner, d_head):
    kq, kkv, kwo, kbo = jax.random.split(key, 4)
    wq = _init_w(kq, q_dim, inner) * (float(d_head) ** -0.5)     # fold attention scale
    return {"wq": wq.astype(ACT_DTYPE),
            "wkv": _init_w(kkv, kv_dim, 2 * inner).astype(ACT_DTYPE),   # fused Wk|Wv
            "wo": _init_w(kwo, inner, q_dim).astype(ACT_DTYPE),
            "bo": _init_b(kbo, q_dim)}


def _init_ff(key, dim, mult=4):
    inner = dim * mult
    k1w, k1b, k2w, k2b, k3w, k3b = jax.random.split(key, 6)
    return {"w1a": _init_w(k1w, dim, inner).astype(ACT_DTYPE), "b1a": _init_b(k1b, inner),
            "w1g": _init_w(k2w, dim, inner).astype(ACT_DTYPE), "b1g": _init_b(k2b, inner),
            "w2": _init_w(k3w, inner, dim).astype(ACT_DTYPE), "b2": _init_b(k3b, dim)}


def _init_ln(dim):
    return jnp.ones((1, dim), jnp.float32), jnp.zeros((1, dim), jnp.float32)


def init_params(key, query_dim, key_dim, value_dim, n_heads, d_head):
    assert key_dim == value_dim, "fused KV projection assumes key_dim == value_dim"
    inner = n_heads * d_head
    keys = jax.random.split(key, 7)
    d = query_dim
    n1g, n1b = _init_ln(d)
    n2g, n2b = _init_ln(d)
    n3g, n3b = _init_ln(d)
    f1g, f1b = _init_ln(d)
    f2g, f2b = _init_ln(d)
    return {
        "n_heads": n_heads, "d_head": d_head,
        "attn1": _init_self_attn(keys[0], d, inner, d_head),
        "attn2": _init_cross_attn(keys[1], d, key_dim, inner, d_head),
        "ff": _init_ff(keys[2], d),
        "norm1_g": n1g, "norm1_b": n1b,
        "norm2_g": n2g, "norm2_b": n2b,
        "norm3_g": n3g, "norm3_b": n3b,
        "fuser": {
            "lin_w": _init_w(keys[3], key_dim, d).astype(ACT_DTYPE),
            "lin_b": _init_b(keys[6], d),
            "attn": _init_self_attn(keys[4], d, inner, d_head),
            "ff": _init_ff(keys[5], d),
            "norm1_g": f1g, "norm1_b": f1b,
            "norm2_g": f2g, "norm2_b": f2b,
            # NOTE: PyTorch inits alpha_attn/alpha_dense to 0.0 (tanh(0)=0 -> gated
            # branches vanish); 0.1 here so the gated Pallas compute is exercised.
            "alpha_attn": jnp.float32(0.1),
            "alpha_dense": jnp.float32(0.1),
        },
    }


# ---------------------------------------------------------------------------
# Main
# ---------------------------------------------------------------------------

if __name__ == "__main__":
    query_dim = 32      # D
    key_dim = 32        # context / objs feature dim
    value_dim = 32
    n_heads = 4
    d_head = 8
    B, N, M, Ng = 2, 16, 8, 4

    key = jax.random.PRNGKey(0)
    kp, kx, kc, ko = jax.random.split(key, 4)

    params = init_params(kp, query_dim, key_dim, value_dim, n_heads, d_head)
    x = jax.random.normal(kx, (B, N, query_dim), jnp.float32)
    context = jax.random.normal(kc, (B, M, key_dim), jnp.float32)
    objs = jax.random.normal(ko, (B, Ng, key_dim), jnp.float32)

    fwd = jax.jit(functools.partial(basic_transformer_block, params))
    out = jax.block_until_ready(fwd(x, context, objs))

    assert out.shape == (B, N, query_dim)
    assert bool(jnp.all(jnp.isfinite(out)))
    print("KERNEL_OK")
</pallas_src>

<mosaic_0001>
module attributes {stable_mosaic.version = 11 : i64} {
  func.func @_ln_matmul_kernel(%arg0: i32, %arg1: i32, %arg2: memref<32x32xbf16, #tpu.memory_space<vmem>>, %arg3: memref<1x32xf32, #tpu.memory_space<vmem>>, %arg4: memref<1x32xf32, #tpu.memory_space<vmem>>, %arg5: memref<32x96xbf16, #tpu.memory_space<vmem>>, %arg6: memref<32x96xbf16, #tpu.memory_space<vmem>>, %arg7: memref<32x32xbf16, #tpu.memory_space<vmem>>) attributes {dimension_semantics = [#tpu.dimension_semantics<parallel>, #tpu.dimension_semantics<arbitrary>], iteration_bounds = array<i64: 1, 1>, scalar_prefetch = 0 : i64, scratch_operands = 1 : i64, tpu.core_type = #tpu.core_type<tc>, window_params = [{transform_indices = @transform_0, window_bounds = array<i64: 32, 32>}, {pipeline_mode = #tpu.pipeline_mode<synchronous>, transform_indices = @transform_1, window_bounds = array<i64: 1, 32>}, {pipeline_mode = #tpu.pipeline_mode<synchronous>, transform_indices = @transform_2, window_bounds = array<i64: 1, 32>}, {transform_indices = @transform_3, window_bounds = array<i64: 32, 96>}, {transform_indices = @transform_4, window_bounds = array<i64: 32, 96>}]} {
    %c0_i32 = arith.constant 0 : i32
    %0 = arith.cmpi eq, %arg1, %c0_i32 : i32
    %1 = arith.extui %0 : i1 to i32
    %c0_i32_0 = arith.constant 0 : i32
    %2 = arith.cmpi ne, %1, %c0_i32_0 : i32
    scf.if %2 {
      %c0_6 = arith.constant 0 : index
      %c0_7 = arith.constant 0 : index
      %8 = vector.load %arg2[%c0_6, %c0_7] : memref<32x32xbf16, #tpu.memory_space<vmem>>, vector<32x32xbf16>
      %9 = arith.extf %8 : vector<32x32xbf16> to vector<32x32xf32>
      %cst_8 = arith.constant dense<0.000000e+00> : vector<32xf32>
      %10 = vector.multi_reduction <add>, %9, %cst_8 [1] : vector<32x32xf32> to vector<32xf32>
      %11 = vector.shape_cast %10 : vector<32xf32> to vector<32x1xf32>
      %cst_9 = arith.constant 3.200000e+01 : f32
      %12 = vector.broadcast %cst_9 : f32 to vector<32x1xf32>
      %13 = arith.divf %11, %12 : vector<32x1xf32>
      %14 = vector.broadcast %13 : vector<32x1xf32> to vector<32x32xf32>
      %15 = arith.subf %9, %14 : vector<32x32xf32>
      %16 = arith.mulf %15, %15 : vector<32x32xf32>
      %cst_10 = arith.constant dense<0.000000e+00> : vector<32xf32>
      %17 = vector.multi_reduction <add>, %16, %cst_10 [1] : vector<32x32xf32> to vector<32xf32>
      %18 = vector.shape_cast %17 : vector<32xf32> to vector<32x1xf32>
      %cst_11 = arith.constant 3.200000e+01 : f32
      %19 = vector.broadcast %cst_11 : f32 to vector<32x1xf32>
      %20 = arith.divf %18, %19 : vector<32x1xf32>
      %21 = vector.broadcast %13 : vector<32x1xf32> to vector<32x32xf32>
      %22 = arith.subf %9, %21 : vector<32x32xf32>
      %cst_12 = arith.constant 9.99999974E-6 : f32
      %23 = vector.broadcast %cst_12 : f32 to vector<32x1xf32>
      %24 = arith.addf %20, %23 : vector<32x1xf32>
      %25 = math.rsqrt %24 : vector<32x1xf32>
      %26 = vector.broadcast %25 : vector<32x1xf32> to vector<32x32xf32>
      %27 = arith.mulf %22, %26 : vector<32x32xf32>
      %c0_13 = arith.constant 0 : index
      %c0_14 = arith.constant 0 : index
      %28 = vector.load %arg3[%c0_13, %c0_14] : memref<1x32xf32, #tpu.memory_space<vmem>>, vector<1x32xf32>
      %29 = vector.broadcast %28 : vector<1x32xf32> to vector<32x32xf32>
      %30 = arith.mulf %27, %29 : vector<32x32xf32>
      %c0_15 = arith.constant 0 : index
      %c0_16 = arith.constant 0 : index
      %31 = vector.load %arg4[%c0_15, %c0_16] : memref<1x32xf32, #tpu.memory_space<vmem>>, vector<1x32xf32>
      %32 = vector.broadcast %31 : vector<1x32xf32> to vector<32x32xf32>
      %33 = arith.addf %30, %32 : vector<32x32xf32>
      %34 = arith.truncf %33 : vector<32x32xf32> to vector<32x32xbf16>
      %c0_17 = arith.constant 0 : index
      %c0_18 = arith.constant 0 : index
      %35 = vector.load %arg7[%c0_17, %c0_18] : memref<32x32xbf16, #tpu.memory_space<vmem>>, vector<32x32xbf16>
      tpu.vector_store %arg7[%c0_17, %c0_18], %34 {strides = array<i32>} : memref<32x32xbf16, #tpu.memory_space<vmem>>, vector<32x32xbf16>,
    } else {
    }
    %c0 = arith.constant 0 : index
    %c0_1 = arith.constant 0 : index
    %3 = vector.load %arg7[%c0, %c0_1] : memref<32x32xbf16, #tpu.memory_space<vmem>>, vector<32x32xbf16>
    %c0_2 = arith.constant 0 : index
    %c0_3 = arith.constant 0 : index
    %4 = vector.load %arg5[%c0_2, %c0_3] : memref<32x96xbf16, #tpu.memory_space<vmem>>, vector<32x96xbf16>
    %cst = arith.constant dense<0.000000e+00> : vector<32x96xf32>
    %5 = tpu.matmul %3, %4, %cst {dimension_numbers = #tpu.dot_dimension_numbers<[1], [0], [0], [1], [0, 0, 1, 1], [], []>} : vector<32x32xbf16>, vector<32x96xbf16>, vector<32x96xf32> -> vector<32x96xf32>
    %6 = arith.truncf %5 : vector<32x96xf32> to vector<32x96xbf16>
    %c0_4 = arith.constant 0 : index
    %c0_5 = arith.constant 0 : index
    %7 = vector.load %arg6[%c0_4, %c0_5] : memref<32x96xbf16, #tpu.memory_space<vmem>>, vector<32x96xbf16>
    tpu.vector_store %arg6[%c0_4, %c0_5], %6 {strides = array<i32>} : memref<32x96xbf16, #tpu.memory_space<vmem>>, vector<32x96xbf16>,
    return
  }
  func.func @transform_0(%arg0: i32, %arg1: i32) -> (i32, i32) {
    %c0_i32 = arith.constant 0 : i32
    %c0_i32_0 = arith.constant 0 : i32
    return %arg0, %c0_i32 : i32, i32
  }
  func.func @transform_1(%arg0: i32, %arg1: i32) -> (i32, i32) {
    %c0_i32 = arith.constant 0 : i32
    %c0_i32_0 = arith.constant 0 : i32
    %c0_i32_1 = arith.constant 0 : i32
    return %c0_i32, %c0_i32_0 : i32, i32
  }
  func.func @transform_2(%arg0: i32, %arg1: i32) -> (i32, i32) {
    %c0_i32 = arith.constant 0 : i32
    %c0_i32_0 = arith.constant 0 : i32
    %c0_i32_1 = arith.constant 0 : i32
    return %c0_i32, %c0_i32_0 : i32, i32
  }
  func.func @transform_3(%arg0: i32, %arg1: i32) -> (i32, i32) {
    %c0_i32 = arith.constant 0 : i32
    %c0_i32_0 = arith.constant 0 : i32
    return %c0_i32, %arg1 : i32, i32
  }
  func.func @transform_4(%arg0: i32, %arg1: i32) -> (i32, i32) {
    %c0_i32 = arith.constant 0 : i32
    return %arg0, %arg1 : i32, i32
  }
}

module attributes {stable_mosaic.version = 11 : i64} {
  func.func @_self_mha_kernel(%arg0: i32, %arg1: memref<1x16x96xbf16, #tpu.memory_space<vmem>>, %arg2: memref<1x16x32xbf16, #tpu.memory_space<vmem>>) attributes {dimension_semantics = [#tpu.dimension_semantics<parallel>], iteration_bounds = array<i64: 2>, scalar_prefetch = 0 : i64, scratch_operands = 0 : i64, tpu.core_type = #tpu.core_type<tc>, window_params = [{transform_indices = @transform_0, window_bounds = array<i64: 1, 16, 96>}, {transform_indices = @transform_1, window_bounds = array<i64: 1, 16, 32>}]} {
    %c0 = arith.constant 0 : index
    %c0_0 = arith.constant 0 : index
    %c0_1 = arith.constant 0 : index
    %0 = vector.load %arg1[%c0, %c0_0, %c0_1] : memref<1x16x96xbf16, #tpu.memory_space<vmem>>, vector<1x16x96xbf16>
    %1 = vector.shape_cast %0 : vector<1x16x96xbf16> to vector<16x96xbf16>
    %2 = vector.extract_strided_slice %1 {offsets = [0, 0], sizes = [16, 32], strides = [1, 1]} : vector<16x96xbf16> to vector<16x32xbf16>
    %3 = vector.extract_strided_slice %1 {offsets = [0, 32], sizes = [16, 64], strides = [1, 1]} : vector<16x96xbf16> to vector<16x64xbf16>
    %4 = vector.extract_strided_slice %2 {offsets = [0, 0], sizes = [16, 8], strides = [1, 1]} : vector<16x32xbf16> to vector<16x8xbf16>
    %5 = vector.shape_cast %4 : vector<16x8xbf16> to vector<1x16x8xbf16>
    %6 = vector.extract_strided_slice %2 {offsets = [0, 8], sizes = [16, 8], strides = [1, 1]} : vector<16x32xbf16> to vector<16x8xbf16>
    %7 = vector.shape_cast %6 : vector<16x8xbf16> to vector<1x16x8xbf16>
    %8 = vector.extract_strided_slice %2 {offsets = [0, 16], sizes = [16, 8], strides = [1, 1]} : vector<16x32xbf16> to vector<16x8xbf16>
    %9 = vector.shape_cast %8 : vector<16x8xbf16> to vector<1x16x8xbf16>
    %10 = vector.extract_strided_slice %2 {offsets = [0, 24], sizes = [16, 8], strides = [1, 1]} : vector<16x32xbf16> to vector<16x8xbf16>
    %11 = vector.shape_cast %10 : vector<16x8xbf16> to vector<1x16x8xbf16>
    %12 = tpu.concatenate %5, %7, %9, %11 in 0 : vector<1x16x8xbf16>, vector<1x16x8xbf16>, vector<1x16x8xbf16>, vector<1x16x8xbf16> -> vector<4x16x8xbf16>
    %13 = vector.extract_strided_slice %3 {offsets = [0, 0], sizes = [16, 32], strides = [1, 1]} : vector<16x64xbf16> to vector<16x32xbf16>
    %14 = vector.extract_strided_slice %13 {offsets = [0, 0], sizes = [16, 8], strides = [1, 1]} : vector<16x32xbf16> to vector<16x8xbf16>
    %15 = vector.shape_cast %14 : vector<16x8xbf16> to vector<1x16x8xbf16>
    %16 = vector.extract_strided_slice %13 {offsets = [0, 8], sizes = [16, 8], strides = [1, 1]} : vector<16x32xbf16> to vector<16x8xbf16>
    %17 = vector.shape_cast %16 : vector<16x8xbf16> to vector<1x16x8xbf16>
    %18 = vector.extract_strided_slice %13 {offsets = [0, 16], sizes = [16, 8], strides = [1, 1]} : vector<16x32xbf16> to vector<16x8xbf16>
    %19 = vector.shape_cast %18 : vector<16x8xbf16> to vector<1x16x8xbf16>
    %20 = vector.extract_strided_slice %13 {offsets = [0, 24], sizes = [16, 8], strides = [1, 1]} : vector<16x32xbf16> to vector<16x8xbf16>
    %21 = vector.shape_cast %20 : vector<16x8xbf16> to vector<1x16x8xbf16>
    %22 = tpu.concatenate %15, %17, %19, %21 in 0 : vector<1x16x8xbf16>, vector<1x16x8xbf16>, vector<1x16x8xbf16>, vector<1x16x8xbf16> -> vector<4x16x8xbf16>
    %23 = vector.extract_strided_slice %3 {offsets = [0, 32], sizes = [16, 32], strides = [1, 1]} : vector<16x64xbf16> to vector<16x32xbf16>
    %24 = vector.extract_strided_slice %23 {offsets = [0, 0], sizes = [16, 8], strides = [1, 1]} : vector<16x32xbf16> to vector<16x8xbf16>
    %25 = vector.shape_cast %24 : vector<16x8xbf16> to vector<1x16x8xbf16>
    %26 = vector.extract_strided_slice %23 {offsets = [0, 8], sizes = [16, 8], strides = [1, 1]} : vector<16x32xbf16> to vector<16x8xbf16>
    %27 = vector.shape_cast %26 : vector<16x8xbf16> to vector<1x16x8xbf16>
    %28 = vector.extract_strided_slice %23 {offsets = [0, 16], sizes = [16, 8], strides = [1, 1]} : vector<16x32xbf16> to vector<16x8xbf16>
    %29 = vector.shape_cast %28 : vector<16x8xbf16> to vector<1x16x8xbf16>
    %30 = vector.extract_strided_slice %23 {offsets = [0, 24], sizes = [16, 8], strides = [1, 1]} : vector<16x32xbf16> to vector<16x8xbf16>
    %31 = vector.shape_cast %30 : vector<16x8xbf16> to vector<1x16x8xbf16>
    %32 = tpu.concatenate %25, %27, %29, %31 in 0 : vector<1x16x8xbf16>, vector<1x16x8xbf16>, vector<1x16x8xbf16>, vector<1x16x8xbf16> -> vector<4x16x8xbf16>
    "tpu.trace_start"() <{level = 10 : i32, message = "hnc,hmc->hnm"}> : () -> ()
    %cst = arith.constant dense<0.000000e+00> : vector<4x16x16xf32>
    %33 = tpu.matmul %12, %22, %cst {dimension_numbers = #tpu.dot_dimension_numbers<[2], [2], [1], [1], [0, 0, 0, 1, 1, 1], [0], [0]>} : vector<4x16x8xbf16>, vector<4x16x8xbf16>, vector<4x16x16xf32> -> vector<4x16x16xf32>
    "tpu.trace_stop"() : () -> ()
    %cst_2 = arith.constant dense<0xFF800000> : vector<4x16xf32>
    %34 = vector.multi_reduction <maximumf>, %33, %cst_2 [2] : vector<4x16x16xf32> to vector<4x16xf32>
    %35 = vector.shape_cast %34 : vector<4x16xf32> to vector<4x16x1xf32>
    %36 = vector.broadcast %35 : vector<4x16x1xf32> to vector<4x16x16xf32>
    %37 = arith.subf %33, %36 : vector<4x16x16xf32>
    %38 = math.exp %37 : vector<4x16x16xf32>
    %cst_3 = arith.constant dense<0.000000e+00> : vector<4x16xf32>
    %39 = vector.multi_reduction <add>, %38, %cst_3 [2] : vector<4x16x16xf32> to vector<4x16xf32>
    %40 = vector.shape_cast %39 : vector<4x16xf32> to vector<4x16x1xf32>
    %41 = tpu.reciprocal %40 {approx = true} : vector<4x16x1xf32> -> vector<4x16x1xf32>
    %42 = arith.truncf %38 : vector<4x16x16xf32> to vector<4x16x16xbf16>
    "tpu.trace_start"() <{level = 10 : i32, message = "hnm,hmc->hnc"}> : () -> ()
    %cst_4 = arith.constant dense<0.000000e+00> : vector<4x16x8xf32>
    %43 = tpu.matmul %42, %32, %cst_4 {dimension_numbers = #tpu.dot_dimension_numbers<[2], [1], [1], [2], [0, 0, 0, 1, 1, 2], [0], [0]>} : vector<4x16x16xbf16>, vector<4x16x8xbf16>, vector<4x16x8xf32> -> vector<4x16x8xf32>
    "tpu.trace_stop"() : () -> ()
    %44 = vector.broadcast %41 : vector<4x16x1xf32> to vector<4x16x8xf32>
    %45 = arith.mulf %43, %44 : vector<4x16x8xf32>
    %46 = vector.extract_strided_slice %45 {offsets = [0, 0, 0], sizes = [1, 16, 8], strides = [1, 1, 1]} : vector<4x16x8xf32> to vector<1x16x8xf32>
    %47 = vector.shape_cast %46 : vector<1x16x8xf32> to vector<16x8xf32>
    %48 = vector.extract_strided_slice %45 {offsets = [1, 0, 0], sizes = [1, 16, 8], strides = [1, 1, 1]} : vector<4x16x8xf32> to vector<1x16x8xf32>
    %49 = vector.shape_cast %48 : vector<1x16x8xf32> to vector<16x8xf32>
    %50 = vector.extract_strided_slice %45 {offsets = [2, 0, 0], sizes = [1, 16, 8], strides = [1, 1, 1]} : vector<4x16x8xf32> to vector<1x16x8xf32>
    %51 = vector.shape_cast %50 : vector<1x16x8xf32> to vector<16x8xf32>
    %52 = vector.extract_strided_slice %45 {offsets = [3, 0, 0], sizes = [1, 16, 8], strides = [1, 1, 1]} : vector<4x16x8xf32> to vector<1x16x8xf32>
    %53 = vector.shape_cast %52 : vector<1x16x8xf32> to vector<16x8xf32>
    %54 = tpu.concatenate %47, %49, %51, %53 in 1 : vector<16x8xf32>, vector<16x8xf32>, vector<16x8xf32>, vector<16x8xf32> -> vector<16x32xf32>
    %55 = arith.truncf %54 : vector<16x32xf32> to vector<16x32xbf16>
    %c0_5 = arith.constant 0 : index
    %c0_6 = arith.constant 0 : index
    %c0_7 = arith.constant 0 : index
    %56 = vector.load %arg2[%c0_5, %c0_6, %c0_7] : memref<1x16x32xbf16, #tpu.memory_space<vmem>>, vector<1x16x32xbf16>
    %57 = vector.shape_cast %56 : vector<1x16x32xbf16> to vector<16x32xbf16>
    %58 = vector.shape_cast %55 : vector<16x32xbf16> to vector<1x16x32xbf16>
    tpu.vector_store %arg2[%c0_5, %c0_6, %c0_7], %58 {strides = array<i32>} : memref<1x16x32xbf16, #tpu.memory_space<vmem>>, vector<1x16x32xbf16>,
    return
  }
  func.func @transform_0(%arg0: i32) -> (i32, i32, i32) {
    %c0_i32 = arith.constant 0 : i32
    %c0_i32_0 = arith.constant 0 : i32
    %c0_i32_1 = arith.constant 0 : i32
    return %arg0, %c0_i32, %c0_i32_0 : i32, i32, i32
  }
  func.func @transform_1(%arg0: i32) -> (i32, i32, i32) {
    %c0_i32 = arith.constant 0 : i32
    %c0_i32_0 = arith.constant 0 : i32
    %c0_i32_1 = arith.constant 0 : i32
    return %arg0, %c0_i32, %c0_i32_0 : i32, i32, i32
  }
}

module attributes {stable_mosaic.version = 11 : i64} {
  func.func @_out_res_kernel(%arg0: i32, %arg1: i32, %arg2: memref<1xf32, #tpu.memory_space<smem>>, %arg3: memref<32x32xbf16, #tpu.memory_space<vmem>>, %arg4: memref<32x32xbf16, #tpu.memory_space<vmem>>, %arg5: memref<1x32xf32, #tpu.memory_space<vmem>>, %arg6: memref<32x32xbf16, #tpu.memory_space<vmem>>, %arg7: memref<32x32xbf16, #tpu.memory_space<vmem>>) attributes {dimension_semantics = [#tpu.dimension_semantics<parallel>, #tpu.dimension_semantics<parallel>], iteration_bounds = array<i64: 1, 1>, scalar_prefetch = 0 : i64, scratch_operands = 0 : i64, tpu.core_type = #tpu.core_type<tc>, window_params = [{transform_indices = @transform_0, window_bounds = array<i64: 1>}, {transform_indices = @transform_1, window_bounds = array<i64: 32, 32>}, {transform_indices = @transform_2, window_bounds = array<i64: 32, 32>}, {transform_indices = @transform_3, window_bounds = array<i64: 1, 32>}, {transform_indices = @transform_4, window_bounds = array<i64: 32, 32>}, {transform_indices = @transform_5, window_bounds = array<i64: 32, 32>}]} {
    %c0 = arith.constant 0 : index
    %c0_0 = arith.constant 0 : index
    %0 = vector.load %arg3[%c0, %c0_0] : memref<32x32xbf16, #tpu.memory_space<vmem>>, vector<32x32xbf16>
    %c0_1 = arith.constant 0 : index
    %c0_2 = arith.constant 0 : index
    %1 = vector.load %arg4[%c0_1, %c0_2] : memref<32x32xbf16, #tpu.memory_space<vmem>>, vector<32x32xbf16>
    %cst = arith.constant dense<0.000000e+00> : vector<32x32xf32>
    %2 = tpu.matmul %0, %1, %cst {dimension_numbers = #tpu.dot_dimension_numbers<[1], [0], [0], [1], [0, 0, 1, 1], [], []>} : vector<32x32xbf16>, vector<32x32xbf16>, vector<32x32xf32> -> vector<32x32xf32>
    %c0_3 = arith.constant 0 : index
    %c0_4 = arith.constant 0 : index
    %3 = vector.load %arg5[%c0_3, %c0_4] : memref<1x32xf32, #tpu.memory_space<vmem>>, vector<1x32xf32>
    %4 = vector.broadcast %3 : vector<1x32xf32> to vector<32x32xf32>
    %5 = arith.addf %2, %4 : vector<32x32xf32>
    %c0_5 = arith.constant 0 : index
    %c0_6 = arith.constant 0 : index
    %6 = vector.load %arg6[%c0_5, %c0_6] : memref<32x32xbf16, #tpu.memory_space<vmem>>, vector<32x32xbf16>
    %7 = arith.extf %6 : vector<32x32xbf16> to vector<32x32xf32>
    %c0_7 = arith.constant 0 : index
    %8 = memref.load %arg2[%c0_7] : memref<1xf32, #tpu.memory_space<smem>>
    %9 = vector.broadcast %8 : f32 to vector<32x32xf32>
    %10 = arith.mulf %9, %5 : vector<32x32xf32>
    %11 = arith.addf %7, %10 : vector<32x32xf32>
    %12 = arith.truncf %11 : vector<32x32xf32> to vector<32x32xbf16>
    %c0_8 = arith.constant 0 : index
    %c0_9 = arith.constant 0 : index
    %13 = vector.load %arg7[%c0_8, %c0_9] : memref<32x32xbf16, #tpu.memory_space<vmem>>, vector<32x32xbf16>
    tpu.vector_store %arg7[%c0_8, %c0_9], %12 {strides = array<i32>} : memref<32x32xbf16, #tpu.memory_space<vmem>>, vector<32x32xbf16>,
    return
  }
  func.func @transform_0(%arg0: i32, %arg1: i32) -> i32 {
    %c0_i32 = arith.constant 0 : i32
    %c0_i32_0 = arith.constant 0 : i32
    return %c0_i32 : i32
  }
  func.func @transform_1(%arg0: i32, %arg1: i32) -> (i32, i32) {
    %c0_i32 = arith.constant 0 : i32
    %c0_i32_0 = arith.constant 0 : i32
    return %arg0, %c0_i32 : i32, i32
  }
  func.func @transform_2(%arg0: i32, %arg1: i32) -> (i32, i32) {
    %c0_i32 = arith.constant 0 : i32
    %c0_i32_0 = arith.constant 0 : i32
    return %c0_i32, %arg1 : i32, i32
  }
  func.func @transform_3(%arg0: i32, %arg1: i32) -> (i32, i32) {
    %c0_i32 = arith.constant 0 : i32
    %c0_i32_0 = arith.constant 0 : i32
    return %c0_i32, %arg1 : i32, i32
  }
  func.func @transform_4(%arg0: i32, %arg1: i32) -> (i32, i32) {
    %c0_i32 = arith.constant 0 : i32
    return %arg0, %arg1 : i32, i32
  }
  func.func @transform_5(%arg0: i32, %arg1: i32) -> (i32, i32) {
    %c0_i32 = arith.constant 0 : i32
    return %arg0, %arg1 : i32, i32
  }
}

module attributes {stable_mosaic.version = 11 : i64} {
  func.func @_matmul_bias_kernel(%arg0: i32, %arg1: i32, %arg2: memref<8x32xbf16, #tpu.memory_space<vmem>>, %arg3: memref<32x32xbf16, #tpu.memory_space<vmem>>, %arg4: memref<1x32xf32, #tpu.memory_space<vmem>>, %arg5: memref<8x32xbf16, #tpu.memory_space<vmem>>) attributes {dimension_semantics = [#tpu.dimension_semantics<parallel>, #tpu.dimension_semantics<parallel>], iteration_bounds = array<i64: 1, 1>, scalar_prefetch = 0 : i64, scratch_operands = 0 : i64, tpu.core_type = #tpu.core_type<tc>, window_params = [{transform_indices = @transform_0, window_bounds = array<i64: 8, 32>}, {transform_indices = @transform_1, window_bounds = array<i64: 32, 32>}, {transform_indices = @transform_2, window_bounds = array<i64: 1, 32>}, {transform_indices = @transform_3, window_bounds = array<i64: 8, 32>}]} {
    %c0 = arith.constant 0 : index
    %c0_0 = arith.constant 0 : index
    %0 = vector.load %arg2[%c0, %c0_0] : memref<8x32xbf16, #tpu.memory_space<vmem>>, vector<8x32xbf16>
    %c0_1 = arith.constant 0 : index
    %c0_2 = arith.constant 0 : index
    %1 = vector.load %arg3[%c0_1, %c0_2] : memref<32x32xbf16, #tpu.memory_space<vmem>>, vector<32x32xbf16>
    %cst = arith.constant dense<0.000000e+00> : vector<8x32xf32>
    %2 = tpu.matmul %0, %1, %cst {dimension_numbers = #tpu.dot_dimension_numbers<[1], [0], [0], [1], [0, 0, 1, 1], [], []>} : vector<8x32xbf16>, vector<32x32xbf16>, vector<8x32xf32> -> vector<8x32xf32>
    %c0_3 = arith.constant 0 : index
    %c0_4 = arith.constant 0 : index
    %3 = vector.load %arg4[%c0_3, %c0_4] : memref<1x32xf32, #tpu.memory_space<vmem>>, vector<1x32xf32>
    %4 = vector.broadcast %3 : vector<1x32xf32> to vector<8x32xf32>
    %5 = arith.addf %2, %4 : vector<8x32xf32>
    %6 = arith.truncf %5 : vector<8x32xf32> to vector<8x32xbf16>
    %c0_5 = arith.constant 0 : index
    %c0_6 = arith.constant 0 : index
    %7 = vector.load %arg5[%c0_5, %c0_6] : memref<8x32xbf16, #tpu.memory_space<vmem>>, vector<8x32xbf16>
    tpu.vector_store %arg5[%c0_5, %c0_6], %6 {strides = array<i32>} : memref<8x32xbf16, #tpu.memory_space<vmem>>, vector<8x32xbf16>,
    return
  }
  func.func @transform_0(%arg0: i32, %arg1: i32) -> (i32, i32) {
    %c0_i32 = arith.constant 0 : i32
    %c0_i32_0 = arith.constant 0 : i32
    return %arg0, %c0_i32 : i32, i32
  }
  func.func @transform_1(%arg0: i32, %arg1: i32) -> (i32, i32) {
    %c0_i32 = arith.constant 0 : i32
    %c0_i32_0 = arith.constant 0 : i32
    return %c0_i32, %arg1 : i32, i32
  }
  func.func @transform_2(%arg0: i32, %arg1: i32) -> (i32, i32) {
    %c0_i32 = arith.constant 0 : i32
    %c0_i32_0 = arith.constant 0 : i32
    return %c0_i32, %arg1 : i32, i32
  }
  func.func @transform_3(%arg0: i32, %arg1: i32) -> (i32, i32) {
    %c0_i32 = arith.constant 0 : i32
    return %arg0, %arg1 : i32, i32
  }
}

module attributes {stable_mosaic.version = 11 : i64} {
  func.func @_fuser_mha_kernel(%arg0: i32, %arg1: memref<1x16x96xbf16, #tpu.memory_space<vmem>>, %arg2: memref<1x4x96xbf16, #tpu.memory_space<vmem>>, %arg3: memref<1x16x32xbf16, #tpu.memory_space<vmem>>) attributes {dimension_semantics = [#tpu.dimension_semantics<parallel>], iteration_bounds = array<i64: 2>, scalar_prefetch = 0 : i64, scratch_operands = 0 : i64, tpu.core_type = #tpu.core_type<tc>, window_params = [{transform_indices = @transform_0, window_bounds = array<i64: 1, 16, 96>}, {transform_indices = @transform_1, window_bounds = array<i64: 1, 4, 96>}, {transform_indices = @transform_2, window_bounds = array<i64: 1, 16, 32>}]} {
    %c0 = arith.constant 0 : index
    %c0_0 = arith.constant 0 : index
    %c0_1 = arith.constant 0 : index
    %0 = vector.load %arg1[%c0, %c0_0, %c0_1] : memref<1x16x96xbf16, #tpu.memory_space<vmem>>, vector<1x16x96xbf16>
    %1 = vector.shape_cast %0 : vector<1x16x96xbf16> to vector<16x96xbf16>
    %c0_2 = arith.constant 0 : index
    %c0_3 = arith.constant 0 : index
    %c0_4 = arith.constant 0 : index
    %2 = vector.load %arg2[%c0_2, %c0_3, %c0_4] : memref<1x4x96xbf16, #tpu.memory_space<vmem>>, vector<1x4x96xbf16>
    %3 = vector.shape_cast %2 : vector<1x4x96xbf16> to vector<4x96xbf16>
    %4 = vector.extract_strided_slice %1 {offsets = [0, 32], sizes = [16, 64], strides = [1, 1]} : vector<16x96xbf16> to vector<16x64xbf16>
    %5 = vector.extract_strided_slice %3 {offsets = [0, 32], sizes = [4, 64], strides = [1, 1]} : vector<4x96xbf16> to vector<4x64xbf16>
    %6 = tpu.concatenate %4, %5 in 0 : vector<16x64xbf16>, vector<4x64xbf16> -> vector<20x64xbf16>
    %7 = vector.extract_strided_slice %1 {offsets = [0, 0], sizes = [16, 32], strides = [1, 1]} : vector<16x96xbf16> to vector<16x32xbf16>
    %8 = vector.extract_strided_slice %7 {offsets = [0, 0], sizes = [16, 8], strides = [1, 1]} : vector<16x32xbf16> to vector<16x8xbf16>
    %9 = vector.shape_cast %8 : vector<16x8xbf16> to vector<1x16x8xbf16>
    %10 = vector.extract_strided_slice %7 {offsets = [0, 8], sizes = [16, 8], strides = [1, 1]} : vector<16x32xbf16> to vector<16x8xbf16>
    %11 = vector.shape_cast %10 : vector<16x8xbf16> to vector<1x16x8xbf16>
    %12 = vector.extract_strided_slice %7 {offsets = [0, 16], sizes = [16, 8], strides = [1, 1]} : vector<16x32xbf16> to vector<16x8xbf16>
    %13 = vector.shape_cast %12 : vector<16x8xbf16> to vector<1x16x8xbf16>
    %14 = vector.extract_strided_slice %7 {offsets = [0, 24], sizes = [16, 8], strides = [1, 1]} : vector<16x32xbf16> to vector<16x8xbf16>
    %15 = vector.shape_cast %14 : vector<16x8xbf16> to vector<1x16x8xbf16>
    %16 = tpu.concatenate %9, %11, %13, %15 in 0 : vector<1x16x8xbf16>, vector<1x16x8xbf16>, vector<1x16x8xbf16>, vector<1x16x8xbf16> -> vector<4x16x8xbf16>
    %17 = vector.extract_strided_slice %6 {offsets = [0, 0], sizes = [20, 32], strides = [1, 1]} : vector<20x64xbf16> to vector<20x32xbf16>
    %18 = vector.extract_strided_slice %17 {offsets = [0, 0], sizes = [20, 8], strides = [1, 1]} : vector<20x32xbf16> to vector<20x8xbf16>
    %19 = vector.shape_cast %18 : vector<20x8xbf16> to vector<1x20x8xbf16>
    %20 = vector.extract_strided_slice %17 {offsets = [0, 8], sizes = [20, 8], strides = [1, 1]} : vector<20x32xbf16> to vector<20x8xbf16>
    %21 = vector.shape_cast %20 : vector<20x8xbf16> to vector<1x20x8xbf16>
    %22 = vector.extract_strided_slice %17 {offsets = [0, 16], sizes = [20, 8], strides = [1, 1]} : vector<20x32xbf16> to vector<20x8xbf16>
    %23 = vector.shape_cast %22 : vector<20x8xbf16> to vector<1x20x8xbf16>
    %24 = vector.extract_strided_slice %17 {offsets = [0, 24], sizes = [20, 8], strides = [1, 1]} : vector<20x32xbf16> to vector<20x8xbf16>
    %25 = vector.shape_cast %24 : vector<20x8xbf16> to vector<1x20x8xbf16>
    %26 = tpu.concatenate %19, %21, %23, %25 in 0 : vector<1x20x8xbf16>, vector<1x20x8xbf16>, vector<1x20x8xbf16>, vector<1x20x8xbf16> -> vector<4x20x8xbf16>
    %27 = vector.extract_strided_slice %6 {offsets = [0, 32], sizes = [20, 32], strides = [1, 1]} : vector<20x64xbf16> to vector<20x32xbf16>
    %28 = vector.extract_strided_slice %27 {offsets = [0, 0], sizes = [20, 8], strides = [1, 1]} : vector<20x32xbf16> to vector<20x8xbf16>
    %29 = vector.shape_cast %28 : vector<20x8xbf16> to vector<1x20x8xbf16>
    %30 = vector.extract_strided_slice %27 {offsets = [0, 8], sizes = [20, 8], strides = [1, 1]} : vector<20x32xbf16> to vector<20x8xbf16>
    %31 = vector.shape_cast %30 : vector<20x8xbf16> to vector<1x20x8xbf16>
    %32 = vector.extract_strided_slice %27 {offsets = [0, 16], sizes = [20, 8], strides = [1, 1]} : vector<20x32xbf16> to vector<20x8xbf16>
    %33 = vector.shape_cast %32 : vector<20x8xbf16> to vector<1x20x8xbf16>
    %34 = vector.extract_strided_slice %27 {offsets = [0, 24], sizes = [20, 8], strides = [1, 1]} : vector<20x32xbf16> to vector<20x8xbf16>
    %35 = vector.shape_cast %34 : vector<20x8xbf16> to vector<1x20x8xbf16>
    %36 = tpu.concatenate %29, %31, %33, %35 in 0 : vector<1x20x8xbf16>, vector<1x20x8xbf16>, vector<1x20x8xbf16>, vector<1x20x8xbf16> -> vector<4x20x8xbf16>
    "tpu.trace_start"() <{level = 10 : i32, message = "hnc,hmc->hnm"}> : () -> ()
    %cst = arith.constant dense<0.000000e+00> : vector<4x16x20xf32>
    %37 = tpu.matmul %16, %26, %cst {dimension_numbers = #tpu.dot_dimension_numbers<[2], [2], [1], [1], [0, 0, 0, 1, 1, 1], [0], [0]>} : vector<4x16x8xbf16>, vector<4x20x8xbf16>, vector<4x16x20xf32> -> vector<4x16x20xf32>
    "tpu.trace_stop"() : () -> ()
    %cst_5 = arith.constant dense<0xFF800000> : vector<4x16xf32>
    %38 = vector.multi_reduction <maximumf>, %37, %cst_5 [2] : vector<4x16x20xf32> to vector<4x16xf32>
    %39 = vector.shape_cast %38 : vector<4x16xf32> to vector<4x16x1xf32>
    %40 = vector.broadcast %39 : vector<4x16x1xf32> to vector<4x16x20xf32>
    %41 = arith.subf %37, %40 : vector<4x16x20xf32>
    %42 = math.exp %41 : vector<4x16x20xf32>
    %cst_6 = arith.constant dense<0.000000e+00> : vector<4x16xf32>
    %43 = vector.multi_reduction <add>, %42, %cst_6 [2] : vector<4x16x20xf32> to vector<4x16xf32>
    %44 = vector.shape_cast %43 : vector<4x16xf32> to vector<4x16x1xf32>
    %45 = tpu.reciprocal %44 {approx = true} : vector<4x16x1xf32> -> vector<4x16x1xf32>
    %46 = arith.truncf %42 : vector<4x16x20xf32> to vector<4x16x20xbf16>
    "tpu.trace_start"() <{level = 10 : i32, message = "hnm,hmc->hnc"}> : () -> ()
    %cst_7 = arith.constant dense<0.000000e+00> : vector<4x16x8xf32>
    %47 = tpu.matmul %46, %36, %cst_7 {dimension_numbers = #tpu.dot_dimension_numbers<[2], [1], [1], [2], [0, 0, 0, 1, 1, 2], [0], [0]>} : vector<4x16x20xbf16>, vector<4x20x8xbf16>, vector<4x16x8xf32> -> vector<4x16x8xf32>
    "tpu.trace_stop"() : () -> ()
    %48 = vector.broadcast %45 : vector<4x16x1xf32> to vector<4x16x8xf32>
    %49 = arith.mulf %47, %48 : vector<4x16x8xf32>
    %50 = vector.extract_strided_slice %49 {offsets = [0, 0, 0], sizes = [1, 16, 8], strides = [1, 1, 1]} : vector<4x16x8xf32> to vector<1x16x8xf32>
    %51 = vector.shape_cast %50 : vector<1x16x8xf32> to vector<16x8xf32>
    %52 = vector.extract_strided_slice %49 {offsets = [1, 0, 0], sizes = [1, 16, 8], strides = [1, 1, 1]} : vector<4x16x8xf32> to vector<1x16x8xf32>
    %53 = vector.shape_cast %52 : vector<1x16x8xf32> to vector<16x8xf32>
    %54 = vector.extract_strided_slice %49 {offsets = [2, 0, 0], sizes = [1, 16, 8], strides = [1, 1, 1]} : vector<4x16x8xf32> to vector<1x16x8xf32>
    %55 = vector.shape_cast %54 : vector<1x16x8xf32> to vector<16x8xf32>
    %56 = vector.extract_strided_slice %49 {offsets = [3, 0, 0], sizes = [1, 16, 8], strides = [1, 1, 1]} : vector<4x16x8xf32> to vector<1x16x8xf32>
    %57 = vector.shape_cast %56 : vector<1x16x8xf32> to vector<16x8xf32>
    %58 = tpu.concatenate %51, %53, %55, %57 in 1 : vector<16x8xf32>, vector<16x8xf32>, vector<16x8xf32>, vector<16x8xf32> -> vector<16x32xf32>
    %59 = arith.truncf %58 : vector<16x32xf32> to vector<16x32xbf16>
    %c0_8 = arith.constant 0 : index
    %c0_9 = arith.constant 0 : index
    %c0_10 = arith.constant 0 : index
    %60 = vector.load %arg3[%c0_8, %c0_9, %c0_10] : memref<1x16x32xbf16, #tpu.memory_space<vmem>>, vector<1x16x32xbf16>
    %61 = vector.shape_cast %60 : vector<1x16x32xbf16> to vector<16x32xbf16>
    %62 = vector.shape_cast %59 : vector<16x32xbf16> to vector<1x16x32xbf16>
    tpu.vector_store %arg3[%c0_8, %c0_9, %c0_10], %62 {strides = array<i32>} : memref<1x16x32xbf16, #tpu.memory_space<vmem>>, vector<1x16x32xbf16>,
    return
  }
  func.func @transform_0(%arg0: i32) -> (i32, i32, i32) {
    %c0_i32 = arith.constant 0 : i32
    %c0_i32_0 = arith.constant 0 : i32
    %c0_i32_1 = arith.constant 0 : i32
    return %arg0, %c0_i32, %c0_i32_0 : i32, i32, i32
  }
  func.func @transform_1(%arg0: i32) -> (i32, i32, i32) {
    %c0_i32 = arith.constant 0 : i32
    %c0_i32_0 = arith.constant 0 : i32
    %c0_i32_1 = arith.constant 0 : i32
    return %arg0, %c0_i32, %c0_i32_0 : i32, i32, i32
  }
  func.func @transform_2(%arg0: i32) -> (i32, i32, i32) {
    %c0_i32 = arith.constant 0 : i32
    %c0_i32_0 = arith.constant 0 : i32
    %c0_i32_1 = arith.constant 0 : i32
    return %arg0, %c0_i32, %c0_i32_0 : i32, i32, i32
  }
}

module attributes {stable_mosaic.version = 11 : i64} {
  func.func @_ln_matmul_kernel(%arg0: i32, %arg1: i32, %arg2: memref<8x32xbf16, #tpu.memory_space<vmem>>, %arg3: memref<1x32xf32, #tpu.memory_space<vmem>>, %arg4: memref<1x32xf32, #tpu.memory_space<vmem>>, %arg5: memref<32x96xbf16, #tpu.memory_space<vmem>>, %arg6: memref<8x96xbf16, #tpu.memory_space<vmem>>, %arg7: memref<8x32xbf16, #tpu.memory_space<vmem>>) attributes {dimension_semantics = [#tpu.dimension_semantics<parallel>, #tpu.dimension_semantics<arbitrary>], iteration_bounds = array<i64: 1, 1>, scalar_prefetch = 0 : i64, scratch_operands = 1 : i64, tpu.core_type = #tpu.core_type<tc>, window_params = [{transform_indices = @transform_0, window_bounds = array<i64: 8, 32>}, {pipeline_mode = #tpu.pipeline_mode<synchronous>, transform_indices = @transform_1, window_bounds = array<i64: 1, 32>}, {pipeline_mode = #tpu.pipeline_mode<synchronous>, transform_indices = @transform_2, window_bounds = array<i64: 1, 32>}, {transform_indices = @transform_3, window_bounds = array<i64: 32, 96>}, {transform_indices = @transform_4, window_bounds = array<i64: 8, 96>}]} {
    %c0_i32 = arith.constant 0 : i32
    %0 = arith.cmpi eq, %arg1, %c0_i32 : i32
    %1 = arith.extui %0 : i1 to i32
    %c0_i32_0 = arith.constant 0 : i32
    %2 = arith.cmpi ne, %1, %c0_i32_0 : i32
    scf.if %2 {
      %c0_6 = arith.constant 0 : index
      %c0_7 = arith.constant 0 : index
      %8 = vector.load %arg2[%c0_6, %c0_7] : memref<8x32xbf16, #tpu.memory_space<vmem>>, vector<8x32xbf16>
      %9 = arith.extf %8 : vector<8x32xbf16> to vector<8x32xf32>
      %cst_8 = arith.constant dense<0.000000e+00> : vector<8xf32>
      %10 = vector.multi_reduction <add>, %9, %cst_8 [1] : vector<8x32xf32> to vector<8xf32>
      %11 = vector.shape_cast %10 : vector<8xf32> to vector<8x1xf32>
      %cst_9 = arith.constant 3.200000e+01 : f32
      %12 = vector.broadcast %cst_9 : f32 to vector<8x1xf32>
      %13 = arith.divf %11, %12 : vector<8x1xf32>
      %14 = vector.broadcast %13 : vector<8x1xf32> to vector<8x32xf32>
      %15 = arith.subf %9, %14 : vector<8x32xf32>
      %16 = arith.mulf %15, %15 : vector<8x32xf32>
      %cst_10 = arith.constant dense<0.000000e+00> : vector<8xf32>
      %17 = vector.multi_reduction <add>, %16, %cst_10 [1] : vector<8x32xf32> to vector<8xf32>
      %18 = vector.shape_cast %17 : vector<8xf32> to vector<8x1xf32>
      %cst_11 = arith.constant 3.200000e+01 : f32
      %19 = vector.broadcast %cst_11 : f32 to vector<8x1xf32>
      %20 = arith.divf %18, %19 : vector<8x1xf32>
      %21 = vector.broadcast %13 : vector<8x1xf32> to vector<8x32xf32>
      %22 = arith.subf %9, %21 : vector<8x32xf32>
      %cst_12 = arith.constant 9.99999974E-6 : f32
      %23 = vector.broadcast %cst_12 : f32 to vector<8x1xf32>
      %24 = arith.addf %20, %23 : vector<8x1xf32>
      %25 = math.rsqrt %24 : vector<8x1xf32>
      %26 = vector.broadcast %25 : vector<8x1xf32> to vector<8x32xf32>
      %27 = arith.mulf %22, %26 : vector<8x32xf32>
      %c0_13 = arith.constant 0 : index
      %c0_14 = arith.constant 0 : index
      %28 = vector.load %arg3[%c0_13, %c0_14] : memref<1x32xf32, #tpu.memory_space<vmem>>, vector<1x32xf32>
      %29 = vector.broadcast %28 : vector<1x32xf32> to vector<8x32xf32>
      %30 = arith.mulf %27, %29 : vector<8x32xf32>
      %c0_15 = arith.constant 0 : index
      %c0_16 = arith.constant 0 : index
      %31 = vector.load %arg4[%c0_15, %c0_16] : memref<1x32xf32, #tpu.memory_space<vmem>>, vector<1x32xf32>
      %32 = vector.broadcast %31 : vector<1x32xf32> to vector<8x32xf32>
      %33 = arith.addf %30, %32 : vector<8x32xf32>
      %34 = arith.truncf %33 : vector<8x32xf32> to vector<8x32xbf16>
      %c0_17 = arith.constant 0 : index
      %c0_18 = arith.constant 0 : index
      %35 = vector.load %arg7[%c0_17, %c0_18] : memref<8x32xbf16, #tpu.memory_space<vmem>>, vector<8x32xbf16>
      tpu.vector_store %arg7[%c0_17, %c0_18], %34 {strides = array<i32>} : memref<8x32xbf16, #tpu.memory_space<vmem>>, vector<8x32xbf16>,
    } else {
    }
    %c0 = arith.constant 0 : index
    %c0_1 = arith.constant 0 : index
    %3 = vector.load %arg7[%c0, %c0_1] : memref<8x32xbf16, #tpu.memory_space<vmem>>, vector<8x32xbf16>
    %c0_2 = arith.constant 0 : index
    %c0_3 = arith.constant 0 : index
    %4 = vector.load %arg5[%c0_2, %c0_3] : memref<32x96xbf16, #tpu.memory_space<vmem>>, vector<32x96xbf16>
    %cst = arith.constant dense<0.000000e+00> : vector<8x96xf32>
    %5 = tpu.matmul %3, %4, %cst {dimension_numbers = #tpu.dot_dimension_numbers<[1], [0], [0], [1], [0, 0, 1, 1], [], []>} : vector<8x32xbf16>, vector<32x96xbf16>, vector<8x96xf32> -> vector<8x96xf32>
    %6 = arith.truncf %5 : vector<8x96xf32> to vector<8x96xbf16>
    %c0_4 = arith.constant 0 : index
    %c0_5 = arith.constant 0 : index
    %7 = vector.load %arg6[%c0_4, %c0_5] : memref<8x96xbf16, #tpu.memory_space<vmem>>, vector<8x96xbf16>
    tpu.vector_store %arg6[%c0_4, %c0_5], %6 {strides = array<i32>} : memref<8x96xbf16, #tpu.memory_space<vmem>>, vector<8x96xbf16>,
    return
  }
  func.func @transform_0(%arg0: i32, %arg1: i32) -> (i32, i32) {
    %c0_i32 = arith.constant 0 : i32
    %c0_i32_0 = arith.constant 0 : i32
    return %arg0, %c0_i32 : i32, i32
  }
  func.func @transform_1(%arg0: i32, %arg1: i32) -> (i32, i32) {
    %c0_i32 = arith.constant 0 : i32
    %c0_i32_0 = arith.constant 0 : i32
    %c0_i32_1 = arith.constant 0 : i32
    return %c0_i32, %c0_i32_0 : i32, i32
  }
  func.func @transform_2(%arg0: i32, %arg1: i32) -> (i32, i32) {
    %c0_i32 = arith.constant 0 : i32
    %c0_i32_0 = arith.constant 0 : i32
    %c0_i32_1 = arith.constant 0 : i32
    return %c0_i32, %c0_i32_0 : i32, i32
  }
  func.func @transform_3(%arg0: i32, %arg1: i32) -> (i32, i32) {
    %c0_i32 = arith.constant 0 : i32
    %c0_i32_0 = arith.constant 0 : i32
    return %c0_i32, %arg1 : i32, i32
  }
  func.func @transform_4(%arg0: i32, %arg1: i32) -> (i32, i32) {
    %c0_i32 = arith.constant 0 : i32
    return %arg0, %arg1 : i32, i32
  }
}

module attributes {stable_mosaic.version = 11 : i64} {
  func.func @_ln_geglu_kernel(%arg0: i32, %arg1: i32, %arg2: memref<32x32xbf16, #tpu.memory_space<vmem>>, %arg3: memref<1x32xf32, #tpu.memory_space<vmem>>, %arg4: memref<1x32xf32, #tpu.memory_space<vmem>>, %arg5: memref<32x128xbf16, #tpu.memory_space<vmem>>, %arg6: memref<1x128xf32, #tpu.memory_space<vmem>>, %arg7: memref<32x128xbf16, #tpu.memory_space<vmem>>, %arg8: memref<1x128xf32, #tpu.memory_space<vmem>>, %arg9: memref<32x128xbf16, #tpu.memory_space<vmem>>, %arg10: memref<32x32xbf16, #tpu.memory_space<vmem>>) attributes {dimension_semantics = [#tpu.dimension_semantics<parallel>, #tpu.dimension_semantics<arbitrary>], iteration_bounds = array<i64: 1, 1>, scalar_prefetch = 0 : i64, scratch_operands = 1 : i64, tpu.core_type = #tpu.core_type<tc>, window_params = [{transform_indices = @transform_0, window_bounds = array<i64: 32, 32>}, {pipeline_mode = #tpu.pipeline_mode<synchronous>, transform_indices = @transform_1, window_bounds = array<i64: 1, 32>}, {pipeline_mode = #tpu.pipeline_mode<synchronous>, transform_indices = @transform_2, window_bounds = array<i64: 1, 32>}, {transform_indices = @transform_3, window_bounds = array<i64: 32, 128>}, {transform_indices = @transform_4, window_bounds = array<i64: 1, 128>}, {transform_indices = @transform_5, window_bounds = array<i64: 32, 128>}, {transform_indices = @transform_6, window_bounds = array<i64: 1, 128>}, {transform_indices = @transform_7, window_bounds = array<i64: 32, 128>}]} {
    %c0_i32 = arith.constant 0 : i32
    %0 = arith.cmpi eq, %arg1, %c0_i32 : i32
    %1 = arith.extui %0 : i1 to i32
    %c0_i32_0 = arith.constant 0 : i32
    %2 = arith.cmpi ne, %1, %c0_i32_0 : i32
    scf.if %2 {
      %c0_16 = arith.constant 0 : index
      %c0_17 = arith.constant 0 : index
      %25 = vector.load %arg2[%c0_16, %c0_17] : memref<32x32xbf16, #tpu.memory_space<vmem>>, vector<32x32xbf16>
      %26 = arith.extf %25 : vector<32x32xbf16> to vector<32x32xf32>
      %cst_18 = arith.constant dense<0.000000e+00> : vector<32xf32>
      %27 = vector.multi_reduction <add>, %26, %cst_18 [1] : vector<32x32xf32> to vector<32xf32>
      %28 = vector.shape_cast %27 : vector<32xf32> to vector<32x1xf32>
      %cst_19 = arith.constant 3.200000e+01 : f32
      %29 = vector.broadcast %cst_19 : f32 to vector<32x1xf32>
      %30 = arith.divf %28, %29 : vector<32x1xf32>
      %31 = vector.broadcast %30 : vector<32x1xf32> to vector<32x32xf32>
      %32 = arith.subf %26, %31 : vector<32x32xf32>
      %33 = arith.mulf %32, %32 : vector<32x32xf32>
      %cst_20 = arith.constant dense<0.000000e+00> : vector<32xf32>
      %34 = vector.multi_reduction <add>, %33, %cst_20 [1] : vector<32x32xf32> to vector<32xf32>
      %35 = vector.shape_cast %34 : vector<32xf32> to vector<32x1xf32>
      %cst_21 = arith.constant 3.200000e+01 : f32
      %36 = vector.broadcast %cst_21 : f32 to vector<32x1xf32>
      %37 = arith.divf %35, %36 : vector<32x1xf32>
      %38 = vector.broadcast %30 : vector<32x1xf32> to vector<32x32xf32>
      %39 = arith.subf %26, %38 : vector<32x32xf32>
      %cst_22 = arith.constant 9.99999974E-6 : f32
      %40 = vector.broadcast %cst_22 : f32 to vector<32x1xf32>
      %41 = arith.addf %37, %40 : vector<32x1xf32>
      %42 = math.rsqrt %41 : vector<32x1xf32>
      %43 = vector.broadcast %42 : vector<32x1xf32> to vector<32x32xf32>
      %44 = arith.mulf %39, %43 : vector<32x32xf32>
      %c0_23 = arith.constant 0 : index
      %c0_24 = arith.constant 0 : index
      %45 = vector.load %arg3[%c0_23, %c0_24] : memref<1x32xf32, #tpu.memory_space<vmem>>, vector<1x32xf32>
      %46 = vector.broadcast %45 : vector<1x32xf32> to vector<32x32xf32>
      %47 = arith.mulf %44, %46 : vector<32x32xf32>
      %c0_25 = arith.constant 0 : index
      %c0_26 = arith.constant 0 : index
      %48 = vector.load %arg4[%c0_25, %c0_26] : memref<1x32xf32, #tpu.memory_space<vmem>>, vector<1x32xf32>
      %49 = vector.broadcast %48 : vector<1x32xf32> to vector<32x32xf32>
      %50 = arith.addf %47, %49 : vector<32x32xf32>
      %51 = arith.truncf %50 : vector<32x32xf32> to vector<32x32xbf16>
      %c0_27 = arith.constant 0 : index
      %c0_28 = arith.constant 0 : index
      %52 = vector.load %arg10[%c0_27, %c0_28] : memref<32x32xbf16, #tpu.memory_space<vmem>>, vector<32x32xbf16>
      tpu.vector_store %arg10[%c0_27, %c0_28], %51 {strides = array<i32>} : memref<32x32xbf16, #tpu.memory_space<vmem>>, vector<32x32xbf16>,
    } else {
    }
    %c0 = arith.constant 0 : index
    %c0_1 = arith.constant 0 : index
    %3 = vector.load %arg10[%c0, %c0_1] : memref<32x32xbf16, #tpu.memory_space<vmem>>, vector<32x32xbf16>
    %c0_2 = arith.constant 0 : index
    %c0_3 = arith.constant 0 : index
    %4 = vector.load %arg5[%c0_2, %c0_3] : memref<32x128xbf16, #tpu.memory_space<vmem>>, vector<32x128xbf16>
    %cst = arith.constant dense<0.000000e+00> : vector<32x128xf32>
    %5 = tpu.matmul %3, %4, %cst {dimension_numbers = #tpu.dot_dimension_numbers<[1], [0], [0], [1], [0, 0, 1, 1], [], []>} : vector<32x32xbf16>, vector<32x128xbf16>, vector<32x128xf32> -> vector<32x128xf32>
    %c0_4 = arith.constant 0 : index
    %c0_5 = arith.constant 0 : index
    %6 = vector.load %arg6[%c0_4, %c0_5] : memref<1x128xf32, #tpu.memory_space<vmem>>, vector<1x128xf32>
    %7 = vector.broadcast %6 : vector<1x128xf32> to vector<32x128xf32>
    %8 = arith.addf %5, %7 : vector<32x128xf32>
    %c0_6 = arith.constant 0 : index
    %c0_7 = arith.constant 0 : index
    %9 = vector.load %arg7[%c0_6, %c0_7] : memref<32x128xbf16, #tpu.memory_space<vmem>>, vector<32x128xbf16>
    %cst_8 = arith.constant dense<0.000000e+00> : vector<32x128xf32>
    %10 = tpu.matmul %3, %9, %cst_8 {dimension_numbers = #tpu.dot_dimension_numbers<[1], [0], [0], [1], [0, 0, 1, 1], [], []>} : vector<32x32xbf16>, vector<32x128xbf16>, vector<32x128xf32> -> vector<32x128xf32>
    %c0_9 = arith.constant 0 : index
    %c0_10 = arith.constant 0 : index
    %11 = vector.load %arg8[%c0_9, %c0_10] : memref<1x128xf32, #tpu.memory_space<vmem>>, vector<1x128xf32>
    %12 = vector.broadcast %11 : vector<1x128xf32> to vector<32x128xf32>
    %13 = arith.addf %10, %12 : vector<32x128xf32>
    %cst_11 = arith.constant 5.000000e-01 : f32
    %14 = vector.broadcast %cst_11 : f32 to vector<32x128xf32>
    %15 = arith.mulf %14, %13 : vector<32x128xf32>
    %cst_12 = arith.constant 0.707106769 : f32
    %16 = vector.broadcast %cst_12 : f32 to vector<32x128xf32>
    %17 = arith.mulf %13, %16 : vector<32x128xf32>
    %18 = math.erf %17 : vector<32x128xf32>
    %cst_13 = arith.constant 1.000000e+00 : f32
    %19 = vector.broadcast %cst_13 : f32 to vector<32x128xf32>
    %20 = arith.addf %19, %18 : vector<32x128xf32>
    %21 = arith.mulf %15, %20 : vector<32x128xf32>
    %22 = arith.mulf %8, %21 : vector<32x128xf32>
    %23 = arith.truncf %22 : vector<32x128xf32> to vector<32x128xbf16>
    %c0_14 = arith.constant 0 : index
    %c0_15 = arith.constant 0 : index
    %24 = vector.load %arg9[%c0_14, %c0_15] : memref<32x128xbf16, #tpu.memory_space<vmem>>, vector<32x128xbf16>
    tpu.vector_store %arg9[%c0_14, %c0_15], %23 {strides = array<i32>} : memref<32x128xbf16, #tpu.memory_space<vmem>>, vector<32x128xbf16>,
    return
  }
  func.func @transform_0(%arg0: i32, %arg1: i32) -> (i32, i32) {
    %c0_i32 = arith.constant 0 : i32
    %c0_i32_0 = arith.constant 0 : i32
    return %arg0, %c0_i32 : i32, i32
  }
  func.func @transform_1(%arg0: i32, %arg1: i32) -> (i32, i32) {
    %c0_i32 = arith.constant 0 : i32
    %c0_i32_0 = arith.constant 0 : i32
    %c0_i32_1 = arith.constant 0 : i32
    return %c0_i32, %c0_i32_0 : i32, i32
  }
  func.func @transform_2(%arg0: i32, %arg1: i32) -> (i32, i32) {
    %c0_i32 = arith.constant 0 : i32
    %c0_i32_0 = arith.constant 0 : i32
    %c0_i32_1 = arith.constant 0 : i32
    return %c0_i32, %c0_i32_0 : i32, i32
  }
  func.func @transform_3(%arg0: i32, %arg1: i32) -> (i32, i32) {
    %c0_i32 = arith.constant 0 : i32
    %c0_i32_0 = arith.constant 0 : i32
    return %c0_i32, %arg1 : i32, i32
  }
  func.func @transform_4(%arg0: i32, %arg1: i32) -> (i32, i32) {
    %c0_i32 = arith.constant 0 : i32
    %c0_i32_0 = arith.constant 0 : i32
    return %c0_i32, %arg1 : i32, i32
  }
  func.func @transform_5(%arg0: i32, %arg1: i32) -> (i32, i32) {
    %c0_i32 = arith.constant 0 : i32
    %c0_i32_0 = arith.constant 0 : i32
    return %c0_i32, %arg1 : i32, i32
  }
  func.func @transform_6(%arg0: i32, %arg1: i32) -> (i32, i32) {
    %c0_i32 = arith.constant 0 : i32
    %c0_i32_0 = arith.constant 0 : i32
    return %c0_i32, %arg1 : i32, i32
  }
  func.func @transform_7(%arg0: i32, %arg1: i32) -> (i32, i32) {
    %c0_i32 = arith.constant 0 : i32
    return %arg0, %arg1 : i32, i32
  }
}

module attributes {stable_mosaic.version = 11 : i64} {
  func.func @_out_res_kernel(%arg0: i32, %arg1: i32, %arg2: memref<1xf32, #tpu.memory_space<smem>>, %arg3: memref<32x128xbf16, #tpu.memory_space<vmem>>, %arg4: memref<128x32xbf16, #tpu.memory_space<vmem>>, %arg5: memref<1x32xf32, #tpu.memory_space<vmem>>, %arg6: memref<32x32xbf16, #tpu.memory_space<vmem>>, %arg7: memref<32x32xbf16, #tpu.memory_space<vmem>>) attributes {dimension_semantics = [#tpu.dimension_semantics<parallel>, #tpu.dimension_semantics<parallel>], iteration_bounds = array<i64: 1, 1>, scalar_prefetch = 0 : i64, scratch_operands = 0 : i64, tpu.core_type = #tpu.core_type<tc>, window_params = [{transform_indices = @transform_0, window_bounds = array<i64: 1>}, {transform_indices = @transform_1, window_bounds = array<i64: 32, 128>}, {transform_indices = @transform_2, window_bounds = array<i64: 128, 32>}, {transform_indices = @transform_3, window_bounds = array<i64: 1, 32>}, {transform_indices = @transform_4, window_bounds = array<i64: 32, 32>}, {transform_indices = @transform_5, window_bounds = array<i64: 32, 32>}]} {
    %c0 = arith.constant 0 : index
    %c0_0 = arith.constant 0 : index
    %0 = vector.load %arg3[%c0, %c0_0] : memref<32x128xbf16, #tpu.memory_space<vmem>>, vector<32x128xbf16>
    %c0_1 = arith.constant 0 : index
    %c0_2 = arith.constant 0 : index
    %1 = vector.load %arg4[%c0_1, %c0_2] : memref<128x32xbf16, #tpu.memory_space<vmem>>, vector<128x32xbf16>
    %cst = arith.constant dense<0.000000e+00> : vector<32x32xf32>
    %2 = tpu.matmul %0, %1, %cst {dimension_numbers = #tpu.dot_dimension_numbers<[1], [0], [0], [1], [0, 0, 1, 1], [], []>} : vector<32x128xbf16>, vector<128x32xbf16>, vector<32x32xf32> -> vector<32x32xf32>
    %c0_3 = arith.constant 0 : index
    %c0_4 = arith.constant 0 : index
    %3 = vector.load %arg5[%c0_3, %c0_4] : memref<1x32xf32, #tpu.memory_space<vmem>>, vector<1x32xf32>
    %4 = vector.broadcast %3 : vector<1x32xf32> to vector<32x32xf32>
    %5 = arith.addf %2, %4 : vector<32x32xf32>
    %c0_5 = arith.constant 0 : index
    %c0_6 = arith.constant 0 : index
    %6 = vector.load %arg6[%c0_5, %c0_6] : memref<32x32xbf16, #tpu.memory_space<vmem>>, vector<32x32xbf16>
    %7 = arith.extf %6 : vector<32x32xbf16> to vector<32x32xf32>
    %c0_7 = arith.constant 0 : index
    %8 = memref.load %arg2[%c0_7] : memref<1xf32, #tpu.memory_space<smem>>
    %9 = vector.broadcast %8 : f32 to vector<32x32xf32>
    %10 = arith.mulf %9, %5 : vector<32x32xf32>
    %11 = arith.addf %7, %10 : vector<32x32xf32>
    %12 = arith.truncf %11 : vector<32x32xf32> to vector<32x32xbf16>
    %c0_8 = arith.constant 0 : index
    %c0_9 = arith.constant 0 : index
    %13 = vector.load %arg7[%c0_8, %c0_9] : memref<32x32xbf16, #tpu.memory_space<vmem>>, vector<32x32xbf16>
    tpu.vector_store %arg7[%c0_8, %c0_9], %12 {strides = array<i32>} : memref<32x32xbf16, #tpu.memory_space<vmem>>, vector<32x32xbf16>,
    return
  }
  func.func @transform_0(%arg0: i32, %arg1: i32) -> i32 {
    %c0_i32 = arith.constant 0 : i32
    %c0_i32_0 = arith.constant 0 : i32
    return %c0_i32 : i32
  }
  func.func @transform_1(%arg0: i32, %arg1: i32) -> (i32, i32) {
    %c0_i32 = arith.constant 0 : i32
    %c0_i32_0 = arith.constant 0 : i32
    return %arg0, %c0_i32 : i32, i32
  }
  func.func @transform_2(%arg0: i32, %arg1: i32) -> (i32, i32) {
    %c0_i32 = arith.constant 0 : i32
    %c0_i32_0 = arith.constant 0 : i32
    return %c0_i32, %arg1 : i32, i32
  }
  func.func @transform_3(%arg0: i32, %arg1: i32) -> (i32, i32) {
    %c0_i32 = arith.constant 0 : i32
    %c0_i32_0 = arith.constant 0 : i32
    return %c0_i32, %arg1 : i32, i32
  }
  func.func @transform_4(%arg0: i32, %arg1: i32) -> (i32, i32) {
    %c0_i32 = arith.constant 0 : i32
    return %arg0, %arg1 : i32, i32
  }
  func.func @transform_5(%arg0: i32, %arg1: i32) -> (i32, i32) {
    %c0_i32 = arith.constant 0 : i32
    return %arg0, %arg1 : i32, i32
  }
}

module attributes {stable_mosaic.version = 11 : i64} {
  func.func @_ln_matmul_kernel(%arg0: i32, %arg1: i32, %arg2: memref<32x32xbf16, #tpu.memory_space<vmem>>, %arg3: memref<1x32xf32, #tpu.memory_space<vmem>>, %arg4: memref<1x32xf32, #tpu.memory_space<vmem>>, %arg5: memref<32x32xbf16, #tpu.memory_space<vmem>>, %arg6: memref<32x32xbf16, #tpu.memory_space<vmem>>, %arg7: memref<32x32xbf16, #tpu.memory_space<vmem>>) attributes {dimension_semantics = [#tpu.dimension_semantics<parallel>, #tpu.dimension_semantics<arbitrary>], iteration_bounds = array<i64: 1, 1>, scalar_prefetch = 0 : i64, scratch_operands = 1 : i64, tpu.core_type = #tpu.core_type<tc>, window_params = [{transform_indices = @transform_0, window_bounds = array<i64: 32, 32>}, {pipeline_mode = #tpu.pipeline_mode<synchronous>, transform_indices = @transform_1, window_bounds = array<i64: 1, 32>}, {pipeline_mode = #tpu.pipeline_mode<synchronous>, transform_indices = @transform_2, window_bounds = array<i64: 1, 32>}, {transform_indices = @transform_3, window_bounds = array<i64: 32, 32>}, {transform_indices = @transform_4, window_bounds = array<i64: 32, 32>}]} {
    %c0_i32 = arith.constant 0 : i32
    %0 = arith.cmpi eq, %arg1, %c0_i32 : i32
    %1 = arith.extui %0 : i1 to i32
    %c0_i32_0 = arith.constant 0 : i32
    %2 = arith.cmpi ne, %1, %c0_i32_0 : i32
    scf.if %2 {
      %c0_6 = arith.constant 0 : index
      %c0_7 = arith.constant 0 : index
      %8 = vector.load %arg2[%c0_6, %c0_7] : memref<32x32xbf16, #tpu.memory_space<vmem>>, vector<32x32xbf16>
      %9 = arith.extf %8 : vector<32x32xbf16> to vector<32x32xf32>
      %cst_8 = arith.constant dense<0.000000e+00> : vector<32xf32>
      %10 = vector.multi_reduction <add>, %9, %cst_8 [1] : vector<32x32xf32> to vector<32xf32>
      %11 = vector.shape_cast %10 : vector<32xf32> to vector<32x1xf32>
      %cst_9 = arith.constant 3.200000e+01 : f32
      %12 = vector.broadcast %cst_9 : f32 to vector<32x1xf32>
      %13 = arith.divf %11, %12 : vector<32x1xf32>
      %14 = vector.broadcast %13 : vector<32x1xf32> to vector<32x32xf32>
      %15 = arith.subf %9, %14 : vector<32x32xf32>
      %16 = arith.mulf %15, %15 : vector<32x32xf32>
      %cst_10 = arith.constant dense<0.000000e+00> : vector<32xf32>
      %17 = vector.multi_reduction <add>, %16, %cst_10 [1] : vector<32x32xf32> to vector<32xf32>
      %18 = vector.shape_cast %17 : vector<32xf32> to vector<32x1xf32>
      %cst_11 = arith.constant 3.200000e+01 : f32
      %19 = vector.broadcast %cst_11 : f32 to vector<32x1xf32>
      %20 = arith.divf %18, %19 : vector<32x1xf32>
      %21 = vector.broadcast %13 : vector<32x1xf32> to vector<32x32xf32>
      %22 = arith.subf %9, %21 : vector<32x32xf32>
      %cst_12 = arith.constant 9.99999974E-6 : f32
      %23 = vector.broadcast %cst_12 : f32 to vector<32x1xf32>
      %24 = arith.addf %20, %23 : vector<32x1xf32>
      %25 = math.rsqrt %24 : vector<32x1xf32>
      %26 = vector.broadcast %25 : vector<32x1xf32> to vector<32x32xf32>
      %27 = arith.mulf %22, %26 : vector<32x32xf32>
      %c0_13 = arith.constant 0 : index
      %c0_14 = arith.constant 0 : index
      %28 = vector.load %arg3[%c0_13, %c0_14] : memref<1x32xf32, #tpu.memory_space<vmem>>, vector<1x32xf32>
      %29 = vector.broadcast %28 : vector<1x32xf32> to vector<32x32xf32>
      %30 = arith.mulf %27, %29 : vector<32x32xf32>
      %c0_15 = arith.constant 0 : index
      %c0_16 = arith.constant 0 : index
      %31 = vector.load %arg4[%c0_15, %c0_16] : memref<1x32xf32, #tpu.memory_space<vmem>>, vector<1x32xf32>
      %32 = vector.broadcast %31 : vector<1x32xf32> to vector<32x32xf32>
      %33 = arith.addf %30, %32 : vector<32x32xf32>
      %34 = arith.truncf %33 : vector<32x32xf32> to vector<32x32xbf16>
      %c0_17 = arith.constant 0 : index
      %c0_18 = arith.constant 0 : index
      %35 = vector.load %arg7[%c0_17, %c0_18] : memref<32x32xbf16, #tpu.memory_space<vmem>>, vector<32x32xbf16>
      tpu.vector_store %arg7[%c0_17, %c0_18], %34 {strides = array<i32>} : memref<32x32xbf16, #tpu.memory_space<vmem>>, vector<32x32xbf16>,
    } else {
    }
    %c0 = arith.constant 0 : index
    %c0_1 = arith.constant 0 : index
    %3 = vector.load %arg7[%c0, %c0_1] : memref<32x32xbf16, #tpu.memory_space<vmem>>, vector<32x32xbf16>
    %c0_2 = arith.constant 0 : index
    %c0_3 = arith.constant 0 : index
    %4 = vector.load %arg5[%c0_2, %c0_3] : memref<32x32xbf16, #tpu.memory_space<vmem>>, vector<32x32xbf16>
    %cst = arith.constant dense<0.000000e+00> : vector<32x32xf32>
    %5 = tpu.matmul %3, %4, %cst {dimension_numbers = #tpu.dot_dimension_numbers<[1], [0], [0], [1], [0, 0, 1, 1], [], []>} : vector<32x32xbf16>, vector<32x32xbf16>, vector<32x32xf32> -> vector<32x32xf32>
    %6 = arith.truncf %5 : vector<32x32xf32> to vector<32x32xbf16>
    %c0_4 = arith.constant 0 : index
    %c0_5 = arith.constant 0 : index
    %7 = vector.load %arg6[%c0_4, %c0_5] : memref<32x32xbf16, #tpu.memory_space<vmem>>, vector<32x32xbf16>
    tpu.vector_store %arg6[%c0_4, %c0_5], %6 {strides = array<i32>} : memref<32x32xbf16, #tpu.memory_space<vmem>>, vector<32x32xbf16>,
    return
  }
  func.func @transform_0(%arg0: i32, %arg1: i32) -> (i32, i32) {
    %c0_i32 = arith.constant 0 : i32
    %c0_i32_0 = arith.constant 0 : i32
    return %arg0, %c0_i32 : i32, i32
  }
  func.func @transform_1(%arg0: i32, %arg1: i32) -> (i32, i32) {
    %c0_i32 = arith.constant 0 : i32
    %c0_i32_0 = arith.constant 0 : i32
    %c0_i32_1 = arith.constant 0 : i32
    return %c0_i32, %c0_i32_0 : i32, i32
  }
  func.func @transform_2(%arg0: i32, %arg1: i32) -> (i32, i32) {
    %c0_i32 = arith.constant 0 : i32
    %c0_i32_0 = arith.constant 0 : i32
    %c0_i32_1 = arith.constant 0 : i32
    return %c0_i32, %c0_i32_0 : i32, i32
  }
  func.func @transform_3(%arg0: i32, %arg1: i32) -> (i32, i32) {
    %c0_i32 = arith.constant 0 : i32
    %c0_i32_0 = arith.constant 0 : i32
    return %c0_i32, %arg1 : i32, i32
  }
  func.func @transform_4(%arg0: i32, %arg1: i32) -> (i32, i32) {
    %c0_i32 = arith.constant 0 : i32
    return %arg0, %arg1 : i32, i32
  }
}

module attributes {stable_mosaic.version = 11 : i64} {
  func.func @_matmul_kernel(%arg0: i32, %arg1: i32, %arg2: memref<16x32xbf16, #tpu.memory_space<vmem>>, %arg3: memref<32x64xbf16, #tpu.memory_space<vmem>>, %arg4: memref<16x64xbf16, #tpu.memory_space<vmem>>) attributes {dimension_semantics = [#tpu.dimension_semantics<parallel>, #tpu.dimension_semantics<parallel>], iteration_bounds = array<i64: 1, 1>, scalar_prefetch = 0 : i64, scratch_operands = 0 : i64, tpu.core_type = #tpu.core_type<tc>, window_params = [{transform_indices = @transform_0, window_bounds = array<i64: 16, 32>}, {transform_indices = @transform_1, window_bounds = array<i64: 32, 64>}, {transform_indices = @transform_2, window_bounds = array<i64: 16, 64>}]} {
    %c0 = arith.constant 0 : index
    %c0_0 = arith.constant 0 : index
    %0 = vector.load %arg2[%c0, %c0_0] : memref<16x32xbf16, #tpu.memory_space<vmem>>, vector<16x32xbf16>
    %c0_1 = arith.constant 0 : index
    %c0_2 = arith.constant 0 : index
    %1 = vector.load %arg3[%c0_1, %c0_2] : memref<32x64xbf16, #tpu.memory_space<vmem>>, vector<32x64xbf16>
    %cst = arith.constant dense<0.000000e+00> : vector<16x64xf32>
    %2 = tpu.matmul %0, %1, %cst {dimension_numbers = #tpu.dot_dimension_numbers<[1], [0], [0], [1], [0, 0, 1, 1], [], []>} : vector<16x32xbf16>, vector<32x64xbf16>, vector<16x64xf32> -> vector<16x64xf32>
    %3 = arith.truncf %2 : vector<16x64xf32> to vector<16x64xbf16>
    %c0_3 = arith.constant 0 : index
    %c0_4 = arith.constant 0 : index
    %4 = vector.load %arg4[%c0_3, %c0_4] : memref<16x64xbf16, #tpu.memory_space<vmem>>, vector<16x64xbf16>
    tpu.vector_store %arg4[%c0_3, %c0_4], %3 {strides = array<i32>} : memref<16x64xbf16, #tpu.memory_space<vmem>>, vector<16x64xbf16>,
    return
  }
  func.func @transform_0(%arg0: i32, %arg1: i32) -> (i32, i32) {
    %c0_i32 = arith.constant 0 : i32
    %c0_i32_0 = arith.constant 0 : i32
    return %arg0, %c0_i32 : i32, i32
  }
  func.func @transform_1(%arg0: i32, %arg1: i32) -> (i32, i32) {
    %c0_i32 = arith.constant 0 : i32
    %c0_i32_0 = arith.constant 0 : i32
    return %c0_i32, %arg1 : i32, i32
  }
  func.func @transform_2(%arg0: i32, %arg1: i32) -> (i32, i32) {
    %c0_i32 = arith.constant 0 : i32
    return %arg0, %arg1 : i32, i32
  }
}

module attributes {stable_mosaic.version = 11 : i64} {
  func.func @_cross_mha_kernel(%arg0: i32, %arg1: memref<1x16x32xbf16, #tpu.memory_space<vmem>>, %arg2: memref<1x8x64xbf16, #tpu.memory_space<vmem>>, %arg3: memref<1x16x32xbf16, #tpu.memory_space<vmem>>) attributes {dimension_semantics = [#tpu.dimension_semantics<parallel>], iteration_bounds = array<i64: 2>, scalar_prefetch = 0 : i64, scratch_operands = 0 : i64, tpu.core_type = #tpu.core_type<tc>, window_params = [{transform_indices = @transform_0, window_bounds = array<i64: 1, 16, 32>}, {transform_indices = @transform_1, window_bounds = array<i64: 1, 8, 64>}, {transform_indices = @transform_2, window_bounds = array<i64: 1, 16, 32>}]} {
    %c0 = arith.constant 0 : index
    %c0_0 = arith.constant 0 : index
    %c0_1 = arith.constant 0 : index
    %0 = vector.load %arg1[%c0, %c0_0, %c0_1] : memref<1x16x32xbf16, #tpu.memory_space<vmem>>, vector<1x16x32xbf16>
    %1 = vector.shape_cast %0 : vector<1x16x32xbf16> to vector<16x32xbf16>
    %c0_2 = arith.constant 0 : index
    %c0_3 = arith.constant 0 : index
    %c0_4 = arith.constant 0 : index
    %2 = vector.load %arg2[%c0_2, %c0_3, %c0_4] : memref<1x8x64xbf16, #tpu.memory_space<vmem>>, vector<1x8x64xbf16>
    %3 = vector.shape_cast %2 : vector<1x8x64xbf16> to vector<8x64xbf16>
    %4 = vector.extract_strided_slice %1 {offsets = [0, 0], sizes = [16, 8], strides = [1, 1]} : vector<16x32xbf16> to vector<16x8xbf16>
    %5 = vector.shape_cast %4 : vector<16x8xbf16> to vector<1x16x8xbf16>
    %6 = vector.extract_strided_slice %1 {offsets = [0, 8], sizes = [16, 8], strides = [1, 1]} : vector<16x32xbf16> to vector<16x8xbf16>
    %7 = vector.shape_cast %6 : vector<16x8xbf16> to vector<1x16x8xbf16>
    %8 = vector.extract_strided_slice %1 {offsets = [0, 16], sizes = [16, 8], strides = [1, 1]} : vector<16x32xbf16> to vector<16x8xbf16>
    %9 = vector.shape_cast %8 : vector<16x8xbf16> to vector<1x16x8xbf16>
    %10 = vector.extract_strided_slice %1 {offsets = [0, 24], sizes = [16, 8], strides = [1, 1]} : vector<16x32xbf16> to vector<16x8xbf16>
    %11 = vector.shape_cast %10 : vector<16x8xbf16> to vector<1x16x8xbf16>
    %12 = tpu.concatenate %5, %7, %9, %11 in 0 : vector<1x16x8xbf16>, vector<1x16x8xbf16>, vector<1x16x8xbf16>, vector<1x16x8xbf16> -> vector<4x16x8xbf16>
    %13 = vector.extract_strided_slice %3 {offsets = [0, 0], sizes = [8, 32], strides = [1, 1]} : vector<8x64xbf16> to vector<8x32xbf16>
    %14 = vector.extract_strided_slice %13 {offsets = [0, 0], sizes = [8, 8], strides = [1, 1]} : vector<8x32xbf16> to vector<8x8xbf16>
    %15 = vector.shape_cast %14 : vector<8x8xbf16> to vector<1x8x8xbf16>
    %16 = vector.extract_strided_slice %13 {offsets = [0, 8], sizes = [8, 8], strides = [1, 1]} : vector<8x32xbf16> to vector<8x8xbf16>
    %17 = vector.shape_cast %16 : vector<8x8xbf16> to vector<1x8x8xbf16>
    %18 = vector.extract_strided_slice %13 {offsets = [0, 16], sizes = [8, 8], strides = [1, 1]} : vector<8x32xbf16> to vector<8x8xbf16>
    %19 = vector.shape_cast %18 : vector<8x8xbf16> to vector<1x8x8xbf16>
    %20 = vector.extract_strided_slice %13 {offsets = [0, 24], sizes = [8, 8], strides = [1, 1]} : vector<8x32xbf16> to vector<8x8xbf16>
    %21 = vector.shape_cast %20 : vector<8x8xbf16> to vector<1x8x8xbf16>
    %22 = tpu.concatenate %15, %17, %19, %21 in 0 : vector<1x8x8xbf16>, vector<1x8x8xbf16>, vector<1x8x8xbf16>, vector<1x8x8xbf16> -> vector<4x8x8xbf16>
    %23 = vector.extract_strided_slice %3 {offsets = [0, 32], sizes = [8, 32], strides = [1, 1]} : vector<8x64xbf16> to vector<8x32xbf16>
    %24 = vector.extract_strided_slice %23 {offsets = [0, 0], sizes = [8, 8], strides = [1, 1]} : vector<8x32xbf16> to vector<8x8xbf16>
    %25 = vector.shape_cast %24 : vector<8x8xbf16> to vector<1x8x8xbf16>
    %26 = vector.extract_strided_slice %23 {offsets = [0, 8], sizes = [8, 8], strides = [1, 1]} : vector<8x32xbf16> to vector<8x8xbf16>
    %27 = vector.shape_cast %26 : vector<8x8xbf16> to vector<1x8x8xbf16>
    %28 = vector.extract_strided_slice %23 {offsets = [0, 16], sizes = [8, 8], strides = [1, 1]} : vector<8x32xbf16> to vector<8x8xbf16>
    %29 = vector.shape_cast %28 : vector<8x8xbf16> to vector<1x8x8xbf16>
    %30 = vector.extract_strided_slice %23 {offsets = [0, 24], sizes = [8, 8], strides = [1, 1]} : vector<8x32xbf16> to vector<8x8xbf16>
    %31 = vector.shape_cast %30 : vector<8x8xbf16> to vector<1x8x8xbf16>
    %32 = tpu.concatenate %25, %27, %29, %31 in 0 : vector<1x8x8xbf16>, vector<1x8x8xbf16>, vector<1x8x8xbf16>, vector<1x8x8xbf16> -> vector<4x8x8xbf16>
    "tpu.trace_start"() <{level = 10 : i32, message = "hnc,hmc->hnm"}> : () -> ()
    %cst = arith.constant dense<0.000000e+00> : vector<4x16x8xf32>
    %33 = tpu.matmul %12, %22, %cst {dimension_numbers = #tpu.dot_dimension_numbers<[2], [2], [1], [1], [0, 0, 0, 1, 1, 1], [0], [0]>} : vector<4x16x8xbf16>, vector<4x8x8xbf16>, vector<4x16x8xf32> -> vector<4x16x8xf32>
    "tpu.trace_stop"() : () -> ()
    %cst_5 = arith.constant dense<0xFF800000> : vector<4x16xf32>
    %34 = vector.multi_reduction <maximumf>, %33, %cst_5 [2] : vector<4x16x8xf32> to vector<4x16xf32>
    %35 = vector.shape_cast %34 : vector<4x16xf32> to vector<4x16x1xf32>
    %36 = vector.broadcast %35 : vector<4x16x1xf32> to vector<4x16x8xf32>
    %37 = arith.subf %33, %36 : vector<4x16x8xf32>
    %38 = math.exp %37 : vector<4x16x8xf32>
    %cst_6 = arith.constant dense<0.000000e+00> : vector<4x16xf32>
    %39 = vector.multi_reduction <add>, %38, %cst_6 [2] : vector<4x16x8xf32> to vector<4x16xf32>
    %40 = vector.shape_cast %39 : vector<4x16xf32> to vector<4x16x1xf32>
    %41 = tpu.reciprocal %40 {approx = true} : vector<4x16x1xf32> -> vector<4x16x1xf32>
    %42 = arith.truncf %38 : vector<4x16x8xf32> to vector<4x16x8xbf16>
    "tpu.trace_start"() <{level = 10 : i32, message = "hnm,hmc->hnc"}> : () -> ()
    %cst_7 = arith.constant dense<0.000000e+00> : vector<4x16x8xf32>
    %43 = tpu.matmul %42, %32, %cst_7 {dimension_numbers = #tpu.dot_dimension_numbers<[2], [1], [1], [2], [0, 0, 0, 1, 1, 2], [0], [0]>} : vector<4x16x8xbf16>, vector<4x8x8xbf16>, vector<4x16x8xf32> -> vector<4x16x8xf32>
    "tpu.trace_stop"() : () -> ()
    %44 = vector.broadcast %41 : vector<4x16x1xf32> to vector<4x16x8xf32>
    %45 = arith.mulf %43, %44 : vector<4x16x8xf32>
    %46 = vector.extract_strided_slice %45 {offsets = [0, 0, 0], sizes = [1, 16, 8], strides = [1, 1, 1]} : vector<4x16x8xf32> to vector<1x16x8xf32>
    %47 = vector.shape_cast %46 : vector<1x16x8xf32> to vector<16x8xf32>
    %48 = vector.extract_strided_slice %45 {offsets = [1, 0, 0], sizes = [1, 16, 8], strides = [1, 1, 1]} : vector<4x16x8xf32> to vector<1x16x8xf32>
    %49 = vector.shape_cast %48 : vector<1x16x8xf32> to vector<16x8xf32>
    %50 = vector.extract_strided_slice %45 {offsets = [2, 0, 0], sizes = [1, 16, 8], strides = [1, 1, 1]} : vector<4x16x8xf32> to vector<1x16x8xf32>
    %51 = vector.shape_cast %50 : vector<1x16x8xf32> to vector<16x8xf32>
    %52 = vector.extract_strided_slice %45 {offsets = [3, 0, 0], sizes = [1, 16, 8], strides = [1, 1, 1]} : vector<4x16x8xf32> to vector<1x16x8xf32>
    %53 = vector.shape_cast %52 : vector<1x16x8xf32> to vector<16x8xf32>
    %54 = tpu.concatenate %47, %49, %51, %53 in 1 : vector<16x8xf32>, vector<16x8xf32>, vector<16x8xf32>, vector<16x8xf32> -> vector<16x32xf32>
    %55 = arith.truncf %54 : vector<16x32xf32> to vector<16x32xbf16>
    %c0_8 = arith.constant 0 : index
    %c0_9 = arith.constant 0 : index
    %c0_10 = arith.constant 0 : index
    %56 = vector.load %arg3[%c0_8, %c0_9, %c0_10] : memref<1x16x32xbf16, #tpu.memory_space<vmem>>, vector<1x16x32xbf16>
    %57 = vector.shape_cast %56 : vector<1x16x32xbf16> to vector<16x32xbf16>
    %58 = vector.shape_cast %55 : vector<16x32xbf16> to vector<1x16x32xbf16>
    tpu.vector_store %arg3[%c0_8, %c0_9, %c0_10], %58 {strides = array<i32>} : memref<1x16x32xbf16, #tpu.memory_space<vmem>>, vector<1x16x32xbf16>,
    return
  }
  func.func @transform_0(%arg0: i32) -> (i32, i32, i32) {
    %c0_i32 = arith.constant 0 : i32
    %c0_i32_0 = arith.constant 0 : i32
    %c0_i32_1 = arith.constant 0 : i32
    return %arg0, %c0_i32, %c0_i32_0 : i32, i32, i32
  }
  func.func @transform_1(%arg0: i32) -> (i32, i32, i32) {
    %c0_i32 = arith.constant 0 : i32
    %c0_i32_0 = arith.constant 0 : i32
    %c0_i32_1 = arith.constant 0 : i32
    return %arg0, %c0_i32, %c0_i32_0 : i32, i32, i32
  }
  func.func @transform_2(%arg0: i32) -> (i32, i32, i32) {
    %c0_i32 = arith.constant 0 : i32
    %c0_i32_0 = arith.constant 0 : i32
    %c0_i32_1 = arith.constant 0 : i32
    return %arg0, %c0_i32, %c0_i32_0 : i32, i32, i32
  }
}

</mosaic_0001>

<llo_original>
// kernel: basic_transformer_block.16
$region0: #{basic_transformer_block.16}
  #allocation0 [shape = 'u32[]', space=smem, size = 0x4, offset = 0x4, fixed_abs, tag = 'smem constant byte address 0x4 - core index']
  #allocation1 [shape = 'u32[144,128]{1,0:T(1,128)}', space=vmem, size = 0x12000, scoped, tag = 'internal scratch']
  #allocation2 [shape = 'bf16[32,32]{1,0:T(16,128)(2,1)}', space=vmem, size = 0x2000, scoped, tag = 'scratch operand']
  %s0 = inlined_call_operand.hbm [shape: bf16[32,32], index: 0, kind: input, shape index: {}]
  %s1 = inlined_call_operand.hbm [shape: f32[1,32], index: 1, kind: input, shape index: {}]
  %s2 = inlined_call_operand.hbm [shape: f32[1,32], index: 2, kind: input, shape index: {}]
  %s3 = inlined_call_operand.hbm [shape: bf16[32,96], index: 3, kind: input, shape index: {}]
  %s4 = inlined_call_operand.hbm [shape: bf16[32,96], index: 4, kind: output, shape index: {}]
  %s5 = sld [smem:[#allocation0]]
  $region46: #{basic_transformer_block.16} parent=0
    _
  %s7 = ssub.s32 1, %s5
  %s8 = scalar_select 0, %s7, %s5
  $region1: #{basic_transformer_block.16} parent=0
    #allocation3 [shape = 'u8[8192]{0}', space=vmem, size = 0x2000, scoped, tag = 'input window, operand 0, single buffered']
    #allocation4 [shape = 's32[1]{0}', space=sflag, size = 0x4, scoped, tag = 'scoped memory for basic_transformer_block.16']
    #allocation5 [shape = 's32[1]{0}', space=sflag, size = 0x4, scoped, tag = 'scoped memory for basic_transformer_block.16']
    #allocation6 [shape = 'u8[512]{0}', space=vmem, size = 0x400, scoped, tag = 'input window, operand 1, single buffered']
    #allocation7 [shape = 's32[1]{0}', space=sflag, size = 0x4, scoped, tag = 'scoped memory for basic_transformer_block.16']
    #allocation8 [shape = 'u8[512]{0}', space=vmem, size = 0x400, scoped, tag = 'input window, operand 2, single buffered']
    #allocation9 [shape = 'u8[8192]{0}', space=vmem, size = 0x2000, scoped, tag = 'input window, operand 3, single buffered']
    #allocation10 [shape = 's32[1]{0}', space=sflag, size = 0x4, scoped, tag = 'scoped memory for basic_transformer_block.16']
    #allocation11 [shape = 'u8[8192]{0}', space=vmem, size = 0x2000, scoped, tag = 'output window, operand 0, single buffered']
    %9 = vsyncpa [#allocation4], 0
    %10 = vsyncpa [#allocation7], 0
    %11 = vsyncpa [#allocation10], 0
    %12 = vsyncpa [#allocation5], 0
    // Predicated region
    $region2: #{basic_transformer_block.16} parent=1 // pred_check
      _
    $region3: #{basic_transformer_block.16} parent=1 // pred_check_branch
      %14 = sbr.rel (0) target = $region5
    $region4: #{basic_transformer_block.16} parent=1 // pred_region
      %s16 = ssub.s32 256, 256
      %17 = vsyncadd [#allocation4], %s16
      %s18 = sshll.u32 [#allocation3], 4
      %s19 = int_to_ptr.vmem [resolvable:$true] %s18
      %24 = dma.hbm_to_vmem [thread:$0]  %s0, 256, %s19, [#allocation4], 64, 64, 4
    $region5: #{basic_transformer_block.16} parent=1 // pred_fallthru
      _
    // Predicated region
    $region6: #{basic_transformer_block.16} parent=1 // pred_check
      _
    $region7: #{basic_transformer_block.16} parent=1 // pred_check_branch
      %26 = sbr.rel (0) target = $region9
    $region8: #{basic_transformer_block.16} parent=1 // pred_region
      %s28 = ssub.s32 16, 16
      %29 = vsyncadd [#allocation7], %s28
      %s31 = sshll.u32 [#allocation6], 4
      %s32 = int_to_ptr.vmem [resolvable:$true] %s31
      %34 = dma.hbm_to_vmem [thread:$0]  %s1, 16, %s32, [#allocation7]
    $region9: #{basic_transformer_block.16} parent=1 // pred_fallthru
      _
    // Predicated region
    $region10: #{basic_transformer_block.16} parent=1 // pred_check
      _
    $region11: #{basic_transformer_block.16} parent=1 // pred_check_branch
      %36 = sbr.rel (0) target = $region13
    $region12: #{basic_transformer_block.16} parent=1 // pred_region
      %s38 = ssub.s32 16, 16
      %39 = vsyncadd [#allocation7], %s38
      %s41 = sshll.u32 [#allocation8], 4
      %s42 = int_to_ptr.vmem [resolvable:$true] %s41
      %44 = dma.hbm_to_vmem [thread:$0]  %s2, 16, %s42, [#allocation7]
    $region13: #{basic_transformer_block.16} parent=1 // pred_fallthru
      _
    // Predicated region
    $region14: #{basic_transformer_block.16} parent=1 // pred_check
      _
    $region15: #{basic_transformer_block.16} parent=1 // pred_check_branch
      %46 = sbr.rel (0) target = $region17
    $region16: #{basic_transformer_block.16} parent=1 // pred_region
      %s48 = ssub.s32 256, 256
      %49 = vsyncadd [#allocation10], %s48
      %s50 = sshll.u32 [#allocation9], 4
      %s51 = int_to_ptr.vmem [resolvable:$true] %s50
      %56 = dma.hbm_to_vmem [thread:$0]  %s3, 256, %s51, [#allocation10], 64, 64, 4
    $region17: #{basic_transformer_block.16} parent=1 // pred_fallthru
      _
    // Predicated region
    $region18: #{basic_transformer_block.16} parent=1 // pred_check
      _
    $region19: #{basic_transformer_block.16} parent=1 // pred_check_branch
      %58 = sbr.rel (0) target = $region21
    $region20: #{basic_transformer_block.16} parent=1 // pred_region
      %59 = dma.done [#allocation4], 256
    $region21: #{basic_transformer_block.16} parent=1 // pred_fallthru
      _
    // Predicated region
    $region22: #{basic_transformer_block.16} parent=1 // pred_check
      _
    $region23: #{basic_transformer_block.16} parent=1 // pred_check_branch
      %61 = sbr.rel (0) target = $region25
    $region24: #{basic_transformer_block.16} parent=1 // pred_region
      %62 = dma.done [#allocation7], 16
    $region25: #{basic_transformer_block.16} parent=1 // pred_fallthru
      _
    // Predicated region
    $region26: #{basic_transformer_block.16} parent=1 // pred_check
      _
    $region27: #{basic_transformer_block.16} parent=1 // pred_check_branch
      %64 = sbr.rel (0) target = $region29
    $region28: #{basic_transformer_block.16} parent=1 // pred_region
      %65 = dma.done [#allocation7], 16
    $region29: #{basic_transformer_block.16} parent=1 // pred_fallthru
      _
    // Predicated region
    $region30: #{basic_transformer_block.16} parent=1 // pred_check
      _
    $region31: #{basic_transformer_block.16} parent=1 // pred_check_branch
      %67 = sbr.rel (0) target = $region33
    $region32: #{basic_transformer_block.16} parent=1 // pred_region
      %68 = dma.done [#allocation10], 256
    $region33: #{basic_transformer_block.16} parent=1 // pred_fallthru
      _
    %p70 = scmp.eq.s32.totalorder 0, 0
    // Predicated region
    $region34: #{basic_transformer_block.16} parent=1 // pred_check
      %p71 = pneg %p70
    $region35: #{basic_transformer_block.16} parent=1 // pred_check_branch
      %73 = sbr.rel (%p71) target = $region37
    $region36: #{basic_transformer_block.16} parent=1 // pred_region
      %v74 = vld [vmem:[#allocation3] sm:$0xf]
      %v75 = vld [vmem:[#allocation3 + $0x4] sm:$0xf]
      %v76 = vld [vmem:[#allocation3 + $0x8] sm:$0xf]
      %v77 = vld [vmem:[#allocation3 + $0xc] sm:$0xf]
      %v78 = vunpack.c.l.bf16 %v74
      %v79 = vunpack.c.l.bf16 %v75
      %v80 = vunpack.c.l.bf16 %v76
      %v81 = vunpack.c.l.bf16 %v77
      %vm82 = vcmask 261120
      %v83 = vsel %vm82, %v78, 0.0
      %84 = vadd.xlane.f32.xlu0 %v83
      %v85 = vpop.xlane.xlu0 %84
      %v86 = vsel %vm82, %v79, 0.0
      %87 = vadd.xlane.f32.xlu0 %v86
      %v88 = vpop.xlane.xlu0 %87
      %v89 = vsel %vm82, %v80, 0.0
      %90 = vadd.xlane.f32.xlu0 %v89
      %v91 = vpop.xlane.xlu0 %90
      %v92 = vsel %vm82, %v81, 0.0
      %93 = vadd.xlane.f32.xlu0 %v92
      %v94 = vpop.xlane.xlu0 %93
      %v95 = vrcp.pop 32.0
      %v96 = vmul.f32 %v85, %v95
      %v97 = vmul.f32 %v88, %v95
      %v98 = vmul.f32 %v91, %v95
      %v99 = vmul.f32 %v94, %v95
      %v100 = vsub.f32 %v78, %v96
      %v101 = vsub.f32 %v79, %v97
      %v102 = vsub.f32 %v80, %v98
      %v103 = vsub.f32 %v81, %v99
      %v104 = vmul.f32 %v100, %v100
      %v105 = vmul.f32 %v101, %v101
      %v106 = vmul.f32 %v102, %v102
      %v107 = vmul.f32 %v103, %v103
      %v108 = vsel %vm82, %v104, 0.0
      %109 = vadd.xlane.f32.xlu0 %v108
      %v110 = vpop.xlane.xlu0 %109
      %v111 = vsel %vm82, %v105, 0.0
      %112 = vadd.xlane.f32.xlu0 %v111
      %v113 = vpop.xlane.xlu0 %112
      %v114 = vsel %vm82, %v106, 0.0
      %115 = vadd.xlane.f32.xlu0 %v114
      %v116 = vpop.xlane.xlu0 %115
      %v117 = vsel %vm82, %v107, 0.0
      %118 = vadd.xlane.f32.xlu0 %v117
      %v119 = vpop.xlane.xlu0 %118
      %v120 = vmul.f32 %v110, %v95
      %v121 = vmul.f32 %v113, %v95
      %v122 = vmul.f32 %v116, %v95
      %v123 = vmul.f32 %v119, %v95
      %v124 = vadd.f32 %v120, 1e-05
      %v125 = vadd.f32 %v121, 1e-05
      %v126 = vadd.f32 %v122, 1e-05
      %v127 = vadd.f32 %v123, 1e-05
      %v128 = vrsqrt.pop %v124
      %v129 = vrsqrt.pop %v125
      %v130 = vrsqrt.pop %v126
      %v131 = vrsqrt.pop %v127
      %v132 = vmul.f32 %v100, %v128
      %v133 = vmul.f32 %v101, %v129
      %v134 = vmul.f32 %v102, %v130
      %v135 = vmul.f32 %v103, %v131
      %v136 = vld [vmem:[#allocation6] sm:$0x1]
      %v138 = vlaneseq
      %v139 = vshrl.u32 %v138, 7
      %v140 = vsub.s32 0, %v139
      %v141 = vrot.slane %v136, %v140
      %v143 = vmul.f32 %v132, %v141
      %v144 = vmul.f32 %v133, %v141
      %v145 = vmul.f32 %v134, %v141
      %v146 = vmul.f32 %v135, %v141
      %v147 = vld [vmem:[#allocation8] sm:$0x1]
      %v149 = vlaneseq
      %v150 = vshrl.u32 %v149, 7
      %v151 = vsub.s32 0, %v150
      %v152 = vrot.slane %v147, %v151
      %v154 = vadd.f32 %v143, %v152
      %v155 = vadd.f32 %v144, %v152
      %v156 = vadd.f32 %v145, %v152
      %v157 = vadd.f32 %v146, %v152
      %v158 = vpack.c.bf16 %v155, %v154
      %v159 = vpack.c.bf16 %v157, %v156
      %160 = vst.msk [vmem:[#allocation2] sm:$0xff] %vm82, %v158
      %161 = vst.msk [vmem:[#allocation2 + $0x8] sm:$0xff] %vm82, %v159
    $region37: #{basic_transformer_block.16} parent=1 // pred_fallthru
      _
    %v162 = vld [vmem:[#allocation2] sm:$0xff]
    %v163 = vld [vmem:[#allocation2 + $0x8] sm:$0xff]
    %v164 = vld [vmem:[#allocation9] sm:$0xf]
    %v165 = vld [vmem:[#allocation9 + $0x4] sm:$0xf]
    %v166 = vld [vmem:[#allocation9 + $0x8] sm:$0xf]
    %v167 = vld [vmem:[#allocation9 + $0xc] sm:$0xf]
    %v172 = vunpack.c.l.b16 %v164
    %v173 = vunpack.c.l.b16 %v165
    %v174 = vunpack.c.l.b16 %v166
    %v175 = vunpack.c.l.b16 %v167
    %v176 = vpack.c.b16 %v173, %v172
    %v177 = vpack.c.b16 %v175, %v174
    %vm180 = vcmask 261120
    %v182 = vsel %vm180, %v162, 0
    %v185 = vsel %vm180, %v163, 0
    %187 = vmatprep.subr.bf16.mxu0 0
    %188 = vmatpush1.bf16.msra.mxu0 %v176
    %189 = vmatprep.subr.bf16.mxu0 0
    %190 = vmatpush1.bf16.msra.mxu0 %v177
    %191 = vmatprep.subr.bf16.mxu0 0
    %192 = vmatpush1.bf16.msra.mxu0 0
    %193 = vmatprep.subr.bf16.mxu0 0
    %194 = vmatpush1.bf16.msra.mxu0 0
    %195 = vmatprep.subr.bf16.mxu0 0
    %196 = vmatpush1.bf16.msra.mxu0 0
    %197 = vmatprep.subr.bf16.mxu0 0
    %198 = vmatpush1.bf16.msra.mxu0 0
    %199 = vmatprep.subr.bf16.mxu0 0
    %200 = vmatpush1.bf16.msra.mxu0 0
    %201 = vmatprep.subr.bf16.mxu0 0
    %202 = vmatpush1.bf16.msra.mxu0 0
    %203 = vmatprep.subr.bf16.mxu0 0
    %204 = vmatpush1.bf16.msra.mxu0 0
    %205 = vmatprep.subr.bf16.mxu0 0
    %206 = vmatpush1.bf16.msra.mxu0 0
    %207 = vmatprep.subr.bf16.mxu0 0
    %208 = vmatpush1.bf16.msra.mxu0 0
    %209 = vmatprep.subr.bf16.mxu0 0
    %210 = vmatpush1.bf16.msra.mxu0 0
    %211 = vmatprep.subr.bf16.mxu0 0
    %212 = vmatpush1.bf16.msra.mxu0 0
    %213 = vmatprep.subr.bf16.mxu0 0
    %214 = vmatpush1.bf16.msra.mxu0 0
    %215 = vmatprep.subr.bf16.mxu0 0
    %216 = vmatpush1.bf16.msra.mxu0 0
    %217 = vmatprep.subr.bf16.mxu0 0
    %218 = vmatpush1.bf16.msra.mxu0 0
    %219 = vmatprep.mubr.bf16.mxu0 0
    %220 = vmatmul.mubr.bf16.gmra.mrb[0].mxu0 %v182
    %v221 = vpop.f32.mrb[0].mxu0
    %v222 = vadd.f32 0.0, %v221
    %v223 = vpop.f32.mrb[0].mxu0
    %v224 = vpop.f32.mrb[0].mxu0
    %v225 = vadd.f32 0.0, %v224
    %v226 = vpop.f32.mrb[0].mxu0
    %227 = vmatprep.mubr.bf16.mxu0 0
    %228 = vmatmul.mubr.bf16.gmra.mrb[0].mxu0 %v185
    %v229 = vpop.f32.mrb[0].mxu0
    %v230 = vadd.f32 0.0, %v229
    %v231 = vpop.f32.mrb[0].mxu0
    %v232 = vpop.f32.mrb[0].mxu0
    %v233 = vadd.f32 0.0, %v232
    %v234 = vpop.f32.mrb[0].mxu0
    %235 = vdwg.mxu0
    %v236 = vpack.c.bf16 %v225, %v222
    %v237 = vpack.c.bf16 %v233, %v230
    %v240 = vunpack.c.l.b16 %v236
    %v241 = vunpack.c.h.b16 %v236
    %v242 = vunpack.c.l.b16 %v237
    %v243 = vunpack.c.h.b16 %v237
    %v244 = vpack.c.b16 %v240, %v240
    %v245 = vpack.c.b16 %v241, %v241
    %v246 = vpack.c.b16 %v242, %v242
    %v247 = vpack.c.b16 %v243, %v243
    %vm252 = vcmask 781312
    %253 = vst.msk [vmem:[#allocation11] sm:$0xf] %vm252, %v244
    %254 = vst.msk [vmem:[#allocation11 + $0x4] sm:$0xf] %vm252, %v245
    %255 = vst.msk [vmem:[#allocation11 + $0x8] sm:$0xf] %vm252, %v246
    %256 = vst.msk [vmem:[#allocation11 + $0xc] sm:$0xf] %vm252, %v247
    // Predicated region
    $region38: #{basic_transformer_block.16} parent=1 // pred_check
      _
    $region39: #{basic_transformer_block.16} parent=1 // pred_check_branch
      %258 = sbr.rel (0) target = $region41
    $region40: #{basic_transformer_block.16} parent=1 // pred_region
      %s260 = ssub.s32 256, 256
      %261 = vsyncadd [#allocation5], %s260
      %s262 = sshll.u32 [#allocation11], 4
      %s263 = int_to_ptr.vmem [resolvable:$true] %s262
      %268 = dma.vmem_to_hbm [thread:$0]  %s263, 256, %s4, [#allocation5], 64, 64, 4
    $region41: #{basic_transformer_block.16} parent=1 // pred_fallthru
      _
    // Predicated region
    $region42: #{basic_transformer_block.16} parent=1 // pred_check
      _
    $region43: #{basic_transformer_block.16} parent=1 // pred_check_branch
      %270 = sbr.rel (0) target = $region45
    $region44: #{basic_transformer_block.16} parent=1 // pred_region
      %271 = dma.done [#allocation5], 256
    $region45: #{basic_transformer_block.16} parent=1 // pred_fallthru
      _
    %272 = vsyncpa [#allocation4], 1
    %273 = vsyncpa [#allocation7], 1
    %274 = vsyncpa [#allocation10], 1
    %275 = vsyncpa [#allocation5], 1

// kernel: basic_transformer_block.17
$region0: #{basic_transformer_block.17}
  #allocation0 [shape = 'u32[]', space=smem, size = 0x4, offset = 0x4, fixed_abs, tag = 'smem constant byte address 0x4 - core index']
  #allocation1 [shape = 'u32[144,128]{1,0:T(1,128)}', space=vmem, size = 0x12000, scoped, tag = 'internal scratch']
  %s0 = inlined_call_operand.hbm [shape: bf16[2,16,96], index: 0, kind: input, shape index: {}]
  %s1 = inlined_call_operand.hbm [shape: bf16[2,16,32], index: 1, kind: output, shape index: {}]
  %s2 = sld [smem:[#allocation0]]
  $region41: #{basic_transformer_block.17} parent=0
    _
  %s4 = ssub.s32 1, %s2
  %s5 = scalar_select 0, %s4, %s2
  $region1: #{basic_transformer_block.17} parent=0
    #allocation2 [shape = 'u8[8192]{0}', space=vmem, size = 0x2000, scoped, tag = 'input window, operand 0']
    #allocation3 [shape = 's32[2]{0}', space=sflag, size = 0x8, scoped, tag = 'scoped memory for basic_transformer_block.17']
    #allocation4 [shape = 's32[2]{0}', space=sflag, size = 0x8, scoped, tag = 'scoped memory for basic_transformer_block.17']
    #allocation5 [shape = 'u8[8192]{0}', space=vmem, size = 0x2000, scoped, tag = 'output window, operand 0']
    %6 = vsyncpa [#allocation3], 0
    %s7 = scalar_lea.sflag [#allocation3], 1
    %8 = vsyncpa %s7, 0
    %9 = vsyncpa [#allocation4], 0
    %s10 = scalar_lea.sflag [#allocation4], 1
    %11 = vsyncpa %s10, 0
    loop: start=0, step=1, limit=4
    $region2: #{basic_transformer_block.17} parent=1 // loop_pre_header
      _
    $region3: #{basic_transformer_block.17} parent=1 // loop_header
      %s13 = sphi 0, %s17
      %p14 = scmp.ge.s32.totalorder %s13, 4
      %s23 = sphi 0, %s25
      %s26 = sphi 0, %s23
      %s27 = sphi 0, %s26
      %s43 = sphi 0, %s27
      %s49 = sphi 0, %s51
      %s52 = sphi 0, %s49
      %s53 = sphi 0, %s52
      %s69 = sphi 0, %s53
    $region4: #{basic_transformer_block.17} parent=1 // loop_header_branch
      %16 = sbr.rel (%p14) target = $region8
    $region5: #{basic_transformer_block.17} parent=1 // loop_body
      %s18 = ssub.s32 %s13, 1
      %s19 = ssub.s32 %s13, 2
      %s20 = sadd.s32 %s13, 1
      %s21 = ssub.s32 %s13, %s20
      %p22 = scmp.eq.s32.totalorder %s21, 0
      %s24 = sadd.s32 %s23, 1
      %s25 = scalar_select %p22, %s23, %s24
      %p28 = pneg %p22
      %p29 = scmp.eq.s32.totalorder %s13, 1
      %p30 = por %p28, %p29
      %p31 = scmp.ne.s32.totalorder %s23, %s26
      %p32 = scmp.eq.s32.totalorder %s13, 0
      %p33 = por %p31, %p32
      %p34 = scmp.ne.s32.totalorder %s23, %s26
      %p35 = scmp.eq.s32.totalorder %s18, 1
      %p36 = por %p34, %p35
      %p37 = scmp.ne.s32.totalorder %s26, %s27
      %p38 = scmp.eq.s32.totalorder %s18, 0
      %p39 = por %p37, %p38
      %p40 = scmp.ne.s32.totalorder %s26, %s27
      %p41 = scmp.eq.s32.totalorder %s19, 1
      %p42 = por %p40, %p41
      %p44 = scmp.ne.s32.totalorder %s27, %s43
      %p45 = scmp.eq.s32.totalorder %s19, 0
      %p46 = por %p44, %p45
      %s47 = ssub.s32 %s13, %s20
      %p48 = scmp.eq.s32.totalorder %s47, 0
      %s50 = sadd.s32 %s49, 1
      %s51 = scalar_select %p48, %s49, %s50
      %p54 = pneg %p48
      %p55 = scmp.eq.s32.totalorder %s13, 1
      %p56 = por %p54, %p55
      %p57 = scmp.ne.s32.totalorder %s49, %s52
      %p58 = scmp.eq.s32.totalorder %s13, 0
      %p59 = por %p57, %p58
      %p60 = scmp.ne.s32.totalorder %s49, %s52
      %p61 = scmp.eq.s32.totalorder %s18, 1
      %p62 = por %p60, %p61
      %p63 = scmp.ne.s32.totalorder %s52, %s53
      %p64 = scmp.eq.s32.totalorder %s18, 0
      %p65 = por %p63, %p64
      %p66 = scmp.ne.s32.totalorder %s52, %s53
      %p67 = scmp.eq.s32.totalorder %s19, 1
      %p68 = por %p66, %p67
      %p70 = scmp.ne.s32.totalorder %s53, %s69
      %p71 = scmp.eq.s32.totalorder %s19, 0
      %p72 = por %p70, %p71
      %p73 = scmp.le.s32.totalorder 1, %s13
      %p74 = scmp.lt.s32.totalorder %s13, 3
      %p75 = pnand %p73, %p74
      %p76 = pneg %p75
      // Predicated region
      $region9: #{basic_transformer_block.17} parent=5 // pred_check
        _
      $region10: #{basic_transformer_block.17} parent=5 // pred_check_branch
        %78 = sbr.rel (%p75) target = $region12
      $region11: #{basic_transformer_block.17} parent=5 // pred_region
        %s79 = ssub.s32 %s13, 1
      $region12: #{basic_transformer_block.17} parent=5 // pred_fallthru
        _
      %p80 = scmp.lt.s32.totalorder %s13, 2
      // Predicated region
      $region13: #{basic_transformer_block.17} parent=5 // pred_check
        %p81 = pneg %p80
      $region14: #{basic_transformer_block.17} parent=5 // pred_check_branch
        %83 = sbr.rel (%p81) target = $region16
      $region15: #{basic_transformer_block.17} parent=5 // pred_region
        // Predicated region
        $region17: #{basic_transformer_block.17} parent=15 // pred_check
          %p84 = pneg %p33
        $region18: #{basic_transformer_block.17} parent=15 // pred_check_branch
          %86 = sbr.rel (%p84) target = $region20
        $region19: #{basic_transformer_block.17} parent=15 // pred_region
          %s87 = sand.u32 %s23, 1
          %s88 = scalar_lea.sflag [#allocation3], %s87
          %s89 = sand.u32 %s23, 1
          %s90 = smul.addr %s89, 8
          %s91 = scalar_lea.vmem [#allocation2], %s90
          %s93 = ssub.s32 128, 128
          %94 = vsyncadd %s88, %s93
          %s95 = smul.addr %s13, 2
          %s96 = smul.addr %s95, 64
          %s97 = scalar_lea.hbm %s0, %s96
          %s98 = sshll.u32 %s91, 4
          %s99 = int_to_ptr.vmem [resolvable:$true] %s98
          %104 = dma.hbm_to_vmem [thread:$0]  %s97, 128, %s99, %s88, 64, 64, 4
        $region20: #{basic_transformer_block.17} parent=15 // pred_fallthru
          _
      $region16: #{basic_transformer_block.17} parent=5 // pred_fallthru
        _
      %p105 = scmp.le.s32.totalorder 1, %s13
      %p106 = scmp.lt.s32.totalorder %s13, 3
      %p107 = pnand %p105, %p106
      %p108 = pneg %p107
      // Predicated region
      $region21: #{basic_transformer_block.17} parent=5 // pred_check
        _
      $region22: #{basic_transformer_block.17} parent=5 // pred_check_branch
        %110 = sbr.rel (%p107) target = $region24
      $region23: #{basic_transformer_block.17} parent=5 // pred_region
        %s111 = ssub.s32 %s13, 1
        %s112 = sand.u32 %s26, 1
        %s113 = scalar_lea.sflag [#allocation3], %s112
        %s114 = sand.u32 %s26, 1
        %s115 = smul.addr %s114, 8
        %s116 = scalar_lea.vmem [#allocation2], %s115
        // Predicated region
        $region25: #{basic_transformer_block.17} parent=23 // pred_check
          %p117 = pneg %p39
        $region26: #{basic_transformer_block.17} parent=23 // pred_check_branch
          %119 = sbr.rel (%p117) target = $region28
        $region27: #{basic_transformer_block.17} parent=23 // pred_region
          %120 = dma.done %s113, 128
        $region28: #{basic_transformer_block.17} parent=23 // pred_fallthru
          _
        %s121 = sand.u32 %s26, 1
        %s122 = scalar_lea.sflag [#allocation3], %s121
        %s123 = sand.u32 %s26, 1
        %s124 = smul.addr %s123, 8
        %s125 = scalar_lea.vmem [#allocation2], %s124
        %p126 = pneg %p39
        %p127 = pneg %p36
        %p128 = pneg %p65
        %p129 = pneg %p62
        %s130 = sand.u32 %s52, 1
        %s131 = scalar_lea.sflag [#allocation4], %s130
        %s132 = sand.u32 %s52, 1
        %s133 = smul.addr %s132, 8
        %s134 = scalar_lea.vmem [#allocation5], %s133
        %v136 = vld [vmem:[%s116] sm:$0xf]
        %v137 = vld [vmem:[%s116 + $0x4] sm:$0xf]
        %140 = vrot.lane.b32.xlu0 %v136, 120
        %v141 = vpop.permute.xlu0 %140
        %142 = vrot.lane.b32.xlu0 %v137, 120
        %v143 = vpop.permute.xlu0 %142
        %144 = vrot.lane.b32.xlu0 %v136, 112
        %v145 = vpop.permute.xlu0 %144
        %146 = vrot.lane.b32.xlu0 %v137, 112
        %v147 = vpop.permute.xlu0 %146
        %148 = vrot.lane.b32.xlu0 %v136, 104
        %v149 = vpop.permute.xlu0 %148
        %150 = vrot.lane.b32.xlu0 %v137, 104
        %v151 = vpop.permute.xlu0 %150
        %v152 = vunpack.c.l.b16 %v136
        %v153 = vunpack.c.l.b16 %v137
        %v154 = vpack.c.b16 %v153, %v152
        %155 = vrot.lane.b32.xlu0 %v154, 96
        %v156 = vpop.permute.xlu0 %155
        %vm157 = vcmask 64512
        %v159 = vsel %vm157, %v154, 0
        %v162 = vsel %vm157, %v156, 0
        %164 = vmatprep.subr.bf16.mxu0 0
        %165 = vmatpush1.bf16.xpose.msra.mxu0 %v162
        %166 = vmatprep.subr.bf16.mxu0 0
        %167 = vmatpush1.bf16.xpose.msra.mxu0 0
        %168 = vmatprep.subr.bf16.mxu0 0
        %169 = vmatpush1.bf16.xpose.msra.mxu0 0
        %170 = vmatprep.subr.bf16.mxu0 0
        %171 = vmatpush1.bf16.xpose.msra.mxu0 0
        %172 = vmatprep.subr.bf16.mxu0 0
        %173 = vmatpush1.bf16.xpose.msra.mxu0 0
        %174 = vmatprep.subr.bf16.mxu0 0
        %175 = vmatpush1.bf16.xpose.msra.mxu0 0
        %176 = vmatprep.subr.bf16.mxu0 0
        %177 = vmatpush1.bf16.xpose.msra.mxu0 0
        %178 = vmatprep.subr.bf16.mxu0 0
        %179 = vmatpush1.bf16.xpose.msra.mxu0 0
        %180 = vmatprep.subr.bf16.mxu0 0
        %181 = vmatpush1.bf16.xpose.msra.mxu0 0
        %182 = vmatprep.subr.bf16.mxu0 0
        %183 = vmatpush1.bf16.xpose.msra.mxu0 0
        %184 = vmatprep.subr.bf16.mxu0 0
        %185 = vmatpush1.bf16.xpose.msra.mxu0 0
        %186 = vmatprep.subr.bf16.mxu0 0
        %187 = vmatpush1.bf16.xpose.msra.mxu0 0
        %188 = vmatprep.subr.bf16.mxu0 0
        %189 = vmatpush1.bf16.xpose.msra.mxu0 0
        %190 = vmatprep.subr.bf16.mxu0 0
        %191 = vmatpush1.bf16.xpose.msra.mxu0 0
        %192 = vmatprep.subr.bf16.mxu0 0
        %193 = vmatpush1.bf16.xpose.msra.mxu0 0
        %194 = vmatprep.subr.bf16.mxu0 0
        %195 = vmatpush1.bf16.xpose.msra.mxu0 0
        %196 = vmatprep.mubr.bf16.mxu0 0
        %197 = vmatmul.mubr.bf16.gmra.mrb[0].mxu0 %v159
        %v198 = vpop.f32.mrb[0].mxu0
        %v199 = vadd.f32 0.0, %v198
        %v200 = vpop.f32.mrb[0].mxu0
        %v201 = vpop.f32.mrb[0].mxu0
        %v202 = vadd.f32 0.0, %v201
        %v203 = vpop.f32.mrb[0].mxu0
        %204 = vdwg.mxu0
        %v205 = vunpack.c.l.b16 %v141
        %v206 = vunpack.c.l.b16 %v143
        %v207 = vpack.c.b16 %v206, %v205
        %208 = vrot.lane.b32.xlu0 %v207, 96
        %v209 = vpop.permute.xlu0 %208
        %v211 = vsel %vm157, %v207, 0
        %v214 = vsel %vm157, %v209, 0
        %216 = vmatprep.subr.bf16.mxu0 0
        %217 = vmatpush1.bf16.xpose.msra.mxu0 %v214
        %218 = vmatprep.subr.bf16.mxu0 0
        %219 = vmatpush1.bf16.xpose.msra.mxu0 0
        %220 = vmatprep.subr.bf16.mxu0 0
        %221 = vmatpush1.bf16.xpose.msra.mxu0 0
        %222 = vmatprep.subr.bf16.mxu0 0
        %223 = vmatpush1.bf16.xpose.msra.mxu0 0
        %224 = vmatprep.subr.bf16.mxu0 0
        %225 = vmatpush1.bf16.xpose.msra.mxu0 0
        %226 = vmatprep.subr.bf16.mxu0 0
        %227 = vmatpush1.bf16.xpose.msra.mxu0 0
        %228 = vmatprep.subr.bf16.mxu0 0
        %229 = vmatpush1.bf16.xpose.msra.mxu0 0
        %230 = vmatprep.subr.bf16.mxu0 0
        %231 = vmatpush1.bf16.xpose.msra.mxu0 0
        %232 = vmatprep.subr.bf16.mxu0 0
        %233 = vmatpush1.bf16.xpose.msra.mxu0 0
        %234 = vmatprep.subr.bf16.mxu0 0
        %235 = vmatpush1.bf16.xpose.msra.mxu0 0
        %236 = vmatprep.subr.bf16.mxu0 0
        %237 = vmatpush1.bf16.xpose.msra.mxu0 0
        %238 = vmatprep.subr.bf16.mxu0 0
        %239 = vmatpush1.bf16.xpose.msra.mxu0 0
        %240 = vmatprep.subr.bf16.mxu0 0
        %241 = vmatpush1.bf16.xpose.msra.mxu0 0
        %242 = vmatprep.subr.bf16.mxu0 0
        %243 = vmatpush1.bf16.xpose.msra.mxu0 0
        %244 = vmatprep.subr.bf16.mxu0 0
        %245 = vmatpush1.bf16.xpose.msra.mxu0 0
        %246 = vmatprep.subr.bf16.mxu0 0
        %247 = vmatpush1.bf16.xpose.msra.mxu0 0
        %248 = vmatprep.mubr.bf16.mxu0 0
        %249 = vmatmul.mubr.bf16.gmra.mrb[0].mxu0 %v211
        %v250 = vpop.f32.mrb[0].mxu0
        %v251 = vadd.f32 0.0, %v250
        %v252 = vpop.f32.mrb[0].mxu0
        %v253 = vpop.f32.mrb[0].mxu0
        %v254 = vadd.f32 0.0, %v253
        %v255 = vpop.f32.mrb[0].mxu0
        %256 = vdwg.mxu0
        %v257 = vunpack.c.l.b16 %v145
        %v258 = vunpack.c.l.b16 %v147
        %v259 = vpack.c.b16 %v258, %v257
        %260 = vrot.lane.b32.xlu0 %v259, 96
        %v261 = vpop.permute.xlu0 %260
        %v263 = vsel %vm157, %v259, 0
        %v266 = vsel %vm157, %v261, 0
        %268 = vmatprep.subr.bf16.mxu0 0
        %269 = vmatpush1.bf16.xpose.msra.mxu0 %v266
        %270 = vmatprep.subr.bf16.mxu0 0
        %271 = vmatpush1.bf16.xpose.msra.mxu0 0
        %272 = vmatprep.subr.bf16.mxu0 0
        %273 = vmatpush1.bf16.xpose.msra.mxu0 0
        %274 = vmatprep.subr.bf16.mxu0 0
        %275 = vmatpush1.bf16.xpose.msra.mxu0 0
        %276 = vmatprep.subr.bf16.mxu0 0
        %277 = vmatpush1.bf16.xpose.msra.mxu0 0
        %278 = vmatprep.subr.bf16.mxu0 0
        %279 = vmatpush1.bf16.xpose.msra.mxu0 0
        %280 = vmatprep.subr.bf16.mxu0 0
        %281 = vmatpush1.bf16.xpose.msra.mxu0 0
        %282 = vmatprep.subr.bf16.mxu0 0
        %283 = vmatpush1.bf16.xpose.msra.mxu0 0
        %284 = vmatprep.subr.bf16.mxu0 0
        %285 = vmatpush1.bf16.xpose.msra.mxu0 0
        %286 = vmatprep.subr.bf16.mxu0 0
        %287 = vmatpush1.bf16.xpose.msra.mxu0 0
        %288 = vmatprep.subr.bf16.mxu0 0
        %289 = vmatpush1.bf16.xpose.msra.mxu0 0
        %290 = vmatprep.subr.bf16.mxu0 0
        %291 = vmatpush1.bf16.xpose.msra.mxu0 0
        %292 = vmatprep.subr.bf16.mxu0 0
        %293 = vmatpush1.bf16.xpose.msra.mxu0 0
        %294 = vmatprep.subr.bf16.mxu0 0
        %295 = vmatpush1.bf16.xpose.msra.mxu0 0
        %296 = vmatprep.subr.bf16.mxu0 0
        %297 = vmatpush1.bf16.xpose.msra.mxu0 0
        %298 = vmatprep.subr.bf16.mxu0 0
        %299 = vmatpush1.bf16.xpose.msra.mxu0 0
        %300 = vmatprep.mubr.bf16.mxu0 0
        %301 = vmatmul.mubr.bf16.gmra.mrb[0].mxu0 %v263
        %v302 = vpop.f32.mrb[0].mxu0
        %v303 = vadd.f32 0.0, %v302
        %v304 = vpop.f32.mrb[0].mxu0
        %v305 = vpop.f32.mrb[0].mxu0
        %v306 = vadd.f32 0.0, %v305
        %v307 = vpop.f32.mrb[0].mxu0
        %308 = vdwg.mxu0
        %v309 = vunpack.c.l.b16 %v149
        %v310 = vunpack.c.l.b16 %v151
        %v311 = vpack.c.b16 %v310, %v309
        %312 = vrot.lane.b32.xlu0 %v311, 96
        %v313 = vpop.permute.xlu0 %312
        %v315 = vsel %vm157, %v311, 0
        %v318 = vsel %vm157, %v313, 0
        %320 = vmatprep.subr.bf16.mxu0 0
        %321 = vmatpush1.bf16.xpose.msra.mxu0 %v318
        %322 = vmatprep.subr.bf16.mxu0 0
        %323 = vmatpush1.bf16.xpose.msra.mxu0 0
        %324 = vmatprep.subr.bf16.mxu0 0
        %325 = vmatpush1.bf16.xpose.msra.mxu0 0
        %326 = vmatprep.subr.bf16.mxu0 0
        %327 = vmatpush1.bf16.xpose.msra.mxu0 0
        %328 = vmatprep.subr.bf16.mxu0 0
        %329 = vmatpush1.bf16.xpose.msra.mxu0 0
        %330 = vmatprep.subr.bf16.mxu0 0
        %331 = vmatpush1.bf16.xpose.msra.mxu0 0
        %332 = vmatprep.subr.bf16.mxu0 0
        %333 = vmatpush1.bf16.xpose.msra.mxu0 0
        %334 = vmatprep.subr.bf16.mxu0 0
        %335 = vmatpush1.bf16.xpose.msra.mxu0 0
        %336 = vmatprep.subr.bf16.mxu0 0
        %337 = vmatpush1.bf16.xpose.msra.mxu0 0
        %338 = vmatprep.subr.bf16.mxu0 0
        %339 = vmatpush1.bf16.xpose.msra.mxu0 0
        %340 = vmatprep.subr.bf16.mxu0 0
        %341 = vmatpush1.bf16.xpose.msra.mxu0 0
        %342 = vmatprep.subr.bf16.mxu0 0
        %343 = vmatpush1.bf16.xpose.msra.mxu0 0
        %344 = vmatprep.subr.bf16.mxu0 0
        %345 = vmatpush1.bf16.xpose.msra.mxu0 0
        %346 = vmatprep.subr.bf16.mxu0 0
        %347 = vmatpush1.bf16.xpose.msra.mxu0 0
        %348 = vmatprep.subr.bf16.mxu0 0
        %349 = vmatpush1.bf16.xpose.msra.mxu0 0
        %350 = vmatprep.subr.bf16.mxu0 0
        %351 = vmatpush1.bf16.xpose.msra.mxu0 0
        %352 = vmatprep.mubr.bf16.mxu0 0
        %353 = vmatmul.mubr.bf16.gmra.mrb[0].mxu0 %v315
        %v354 = vpop.f32.mrb[0].mxu0
        %v355 = vadd.f32 0.0, %v354
        %v356 = vpop.f32.mrb[0].mxu0
        %v357 = vpop.f32.mrb[0].mxu0
        %v358 = vadd.f32 0.0, %v357
        %v359 = vpop.f32.mrb[0].mxu0
        %360 = vdwg.mxu0
        %vm361 = vcmask 130048
        %v362 = vsel %vm361, %v199, -inf
        %363 = vmax.xlane.f32.xlu0 %v362
        %v364 = vpop.xlane.xlu0 %363
        %v365 = vsel %vm361, %v202, -inf
        %366 = vmax.xlane.f32.xlu0 %v365
        %v367 = vpop.xlane.xlu0 %366
        %v368 = vsel %vm361, %v251, -inf
        %369 = vmax.xlane.f32.xlu0 %v368
        %v370 = vpop.xlane.xlu0 %369
        %v371 = vsel %vm361, %v254, -inf
        %372 = vmax.xlane.f32.xlu0 %v371
        %v373 = vpop.xlane.xlu0 %372
        %v374 = vsel %vm361, %v303, -inf
        %375 = vmax.xlane.f32.xlu0 %v374
        %v376 = vpop.xlane.xlu0 %375
        %v377 = vsel %vm361, %v306, -inf
        %378 = vmax.xlane.f32.xlu0 %v377
        %v379 = vpop.xlane.xlu0 %378
        %v380 = vsel %vm361, %v355, -inf
        %381 = vmax.xlane.f32.xlu0 %v380
        %v382 = vpop.xlane.xlu0 %381
        %v383 = vsel %vm361, %v358, -inf
        %384 = vmax.xlane.f32.xlu0 %v383
        %v385 = vpop.xlane.xlu0 %384
        %v386 = vsub.f32 %v199, %v364
        %v387 = vsub.f32 %v202, %v367
        %v388 = vsub.f32 %v251, %v370
        %v389 = vsub.f32 %v254, %v373
        %v390 = vsub.f32 %v303, %v376
        %v391 = vsub.f32 %v306, %v379
        %v392 = vsub.f32 %v355, %v382
        %v393 = vsub.f32 %v358, %v385
        %v394 = vmul.f32 %v386, 1.442695
        %v395 = vpow.pop %v394
        %v396 = vmul.f32 %v387, 1.442695
        %v397 = vpow.pop %v396
        %v398 = vmul.f32 %v388, 1.442695
        %v399 = vpow.pop %v398
        %v400 = vmul.f32 %v389, 1.442695
        %v401 = vpow.pop %v400
        %v402 = vmul.f32 %v390, 1.442695
        %v403 = vpow.pop %v402
        %v404 = vmul.f32 %v391, 1.442695
        %v405 = vpow.pop %v404
        %v406 = vmul.f32 %v392, 1.442695
        %v407 = vpow.pop %v406
        %v408 = vmul.f32 %v393, 1.442695
        %v409 = vpow.pop %v408
        %v410 = vsel %vm361, %v395, 0.0
        %411 = vadd.xlane.f32.xlu0 %v410
        %v412 = vpop.xlane.xlu0 %411
        %v413 = vsel %vm361, %v397, 0.0
        %414 = vadd.xlane.f32.xlu0 %v413
        %v415 = vpop.xlane.xlu0 %414
        %v416 = vsel %vm361, %v399, 0.0
        %417 = vadd.xlane.f32.xlu0 %v416
        %v418 = vpop.xlane.xlu0 %417
        %v419 = vsel %vm361, %v401, 0.0
        %420 = vadd.xlane.f32.xlu0 %v419
        %v421 = vpop.xlane.xlu0 %420
        %v422 = vsel %vm361, %v403, 0.0
        %423 = vadd.xlane.f32.xlu0 %v422
        %v424 = vpop.xlane.xlu0 %423
        %v425 = vsel %vm361, %v405, 0.0
        %426 = vadd.xlane.f32.xlu0 %v425
        %v427 = vpop.xlane.xlu0 %426
        %v428 = vsel %vm361, %v407, 0.0
        %429 = vadd.xlane.f32.xlu0 %v428
        %v430 = vpop.xlane.xlu0 %429
        %v431 = vsel %vm361, %v409, 0.0
        %432 = vadd.xlane.f32.xlu0 %v431
        %v433 = vpop.xlane.xlu0 %432
        %v434 = vrcp.pop %v412
        %v435 = vrcp.pop %v415
        %v436 = vrcp.pop %v418
        %v437 = vrcp.pop %v421
        %v438 = vrcp.pop %v424
        %v439 = vrcp.pop %v427
        %v440 = vrcp.pop %v430
        %v441 = vrcp.pop %v433
        %v442 = vpack.c.bf16 %v397, %v395
        %v443 = vpack.c.bf16 %v401, %v399
        %v444 = vpack.c.bf16 %v405, %v403
        %v445 = vpack.c.bf16 %v409, %v407
        %446 = vrot.lane.b32.xlu0 %v154, 64
        %v447 = vpop.permute.xlu0 %446
        %v450 = vsel %vm361, %v442, 0
        %452 = vmatprep.subr.bf16.mxu0 0
        %453 = vmatpush1.bf16.msra.mxu0 %v447
        %454 = vmatprep.subr.bf16.mxu0 0
        %455 = vmatpush1.bf16.msra.mxu0 0
        %456 = vmatprep.subr.bf16.mxu0 0
        %457 = vmatpush1.bf16.msra.mxu0 0
        %458 = vmatprep.subr.bf16.mxu0 0
        %459 = vmatpush1.bf16.msra.mxu0 0
        %460 = vmatprep.subr.bf16.mxu0 0
        %461 = vmatpush1.bf16.msra.mxu0 0
        %462 = vmatprep.subr.bf16.mxu0 0
        %463 = vmatpush1.bf16.msra.mxu0 0
        %464 = vmatprep.subr.bf16.mxu0 0
        %465 = vmatpush1.bf16.msra.mxu0 0
        %466 = vmatprep.subr.bf16.mxu0 0
        %467 = vmatpush1.bf16.msra.mxu0 0
        %468 = vmatprep.subr.bf16.mxu0 0
        %469 = vmatpush1.bf16.msra.mxu0 0
        %470 = vmatprep.subr.bf16.mxu0 0
        %471 = vmatpush1.bf16.msra.mxu0 0
        %472 = vmatprep.subr.bf16.mxu0 0
        %473 = vmatpush1.bf16.msra.mxu0 0
        %474 = vmatprep.subr.bf16.mxu0 0
        %475 = vmatpush1.bf16.msra.mxu0 0
        %476 = vmatprep.subr.bf16.mxu0 0
        %477 = vmatpush1.bf16.msra.mxu0 0
        %478 = vmatprep.subr.bf16.mxu0 0
        %479 = vmatpush1.bf16.msra.mxu0 0
        %480 = vmatprep.subr.bf16.mxu0 0
        %481 = vmatpush1.bf16.msra.mxu0 0
        %482 = vmatprep.subr.bf16.mxu0 0
        %483 = vmatpush1.bf16.msra.mxu0 0
        %484 = vmatprep.mubr.bf16.mxu0 0
        %485 = vmatmul.mubr.bf16.gmra.mrb[0].mxu0 %v450
        %v486 = vpop.f32.mrb[0].mxu0
        %v487 = vadd.f32 0.0, %v486
        %v488 = vpop.f32.mrb[0].mxu0
        %v489 = vpop.f32.mrb[0].mxu0
        %v490 = vadd.f32 0.0, %v489
        %v491 = vpop.f32.mrb[0].mxu0
        %492 = vdwg.mxu0
        %493 = vrot.lane.b32.xlu0 %v207, 64
        %v494 = vpop.permute.xlu0 %493
        %v497 = vsel %vm361, %v443, 0
        %499 = vmatprep.subr.bf16.mxu0 0
        %500 = vmatpush1.bf16.msra.mxu0 %v494
        %501 = vmatprep.subr.bf16.mxu0 0
        %502 = vmatpush1.bf16.msra.mxu0 0
        %503 = vmatprep.subr.bf16.mxu0 0
        %504 = vmatpush1.bf16.msra.mxu0 0
        %505 = vmatprep.subr.bf16.mxu0 0
        %506 = vmatpush1.bf16.msra.mxu0 0
        %507 = vmatprep.subr.bf16.mxu0 0
        %508 = vmatpush1.bf16.msra.mxu0 0
        %509 = vmatprep.subr.bf16.mxu0 0
        %510 = vmatpush1.bf16.msra.mxu0 0
        %511 = vmatprep.subr.bf16.mxu0 0
        %512 = vmatpush1.bf16.msra.mxu0 0
        %513 = vmatprep.subr.bf16.mxu0 0
        %514 = vmatpush1.bf16.msra.mxu0 0
        %515 = vmatprep.subr.bf16.mxu0 0
        %516 = vmatpush1.bf16.msra.mxu0 0
        %517 = vmatprep.subr.bf16.mxu0 0
        %518 = vmatpush1.bf16.msra.mxu0 0
        %519 = vmatprep.subr.bf16.mxu0 0
        %520 = vmatpush1.bf16.msra.mxu0 0
        %521 = vmatprep.subr.bf16.mxu0 0
        %522 = vmatpush1.bf16.msra.mxu0 0
        %523 = vmatprep.subr.bf16.mxu0 0
        %524 = vmatpush1.bf16.msra.mxu0 0
        %525 = vmatprep.subr.bf16.mxu0 0
        %526 = vmatpush1.bf16.msra.mxu0 0
        %527 = vmatprep.subr.bf16.mxu0 0
        %528 = vmatpush1.bf16.msra.mxu0 0
        %529 = vmatprep.subr.bf16.mxu0 0
        %530 = vmatpush1.bf16.msra.mxu0 0
        %531 = vmatprep.mubr.bf16.mxu0 0
        %532 = vmatmul.mubr.bf16.gmra.mrb[0].mxu0 %v497
        %v533 = vpop.f32.mrb[0].mxu0
        %v534 = vadd.f32 0.0, %v533
        %v535 = vpop.f32.mrb[0].mxu0
        %v536 = vpop.f32.mrb[0].mxu0
        %v537 = vadd.f32 0.0, %v536
        %v538 = vpop.f32.mrb[0].mxu0
        %539 = vdwg.mxu0
        %540 = vrot.lane.b32.xlu0 %v259, 64
        %v541 = vpop.permute.xlu0 %540
        %v544 = vsel %vm361, %v444, 0
        %546 = vmatprep.subr.bf16.mxu0 0
        %547 = vmatpush1.bf16.msra.mxu0 %v541
        %548 = vmatprep.subr.bf16.mxu0 0
        %549 = vmatpush1.bf16.msra.mxu0 0
        %550 = vmatprep.subr.bf16.mxu0 0
        %551 = vmatpush1.bf16.msra.mxu0 0
        %552 = vmatprep.subr.bf16.mxu0 0
        %553 = vmatpush1.bf16.msra.mxu0 0
        %554 = vmatprep.subr.bf16.mxu0 0
        %555 = vmatpush1.bf16.msra.mxu0 0
        %556 = vmatprep.subr.bf16.mxu0 0
        %557 = vmatpush1.bf16.msra.mxu0 0
        %558 = vmatprep.subr.bf16.mxu0 0
        %559 = vmatpush1.bf16.msra.mxu0 0
        %560 = vmatprep.subr.bf16.mxu0 0
        %561 = vmatpush1.bf16.msra.mxu0 0
        %562 = vmatprep.subr.bf16.mxu0 0
        %563 = vmatpush1.bf16.msra.mxu0 0
        %564 = vmatprep.subr.bf16.mxu0 0
        %565 = vmatpush1.bf16.msra.mxu0 0
        %566 = vmatprep.subr.bf16.mxu0 0
        %567 = vmatpush1.bf16.msra.mxu0 0
        %568 = vmatprep.subr.bf16.mxu0 0
        %569 = vmatpush1.bf16.msra.mxu0 0
        %570 = vmatprep.subr.bf16.mxu0 0
        %571 = vmatpush1.bf16.msra.mxu0 0
        %572 = vmatprep.subr.bf16.mxu0 0
        %573 = vmatpush1.bf16.msra.mxu0 0
        %574 = vmatprep.subr.bf16.mxu0 0
        %575 = vmatpush1.bf16.msra.mxu0 0
        %576 = vmatprep.subr.bf16.mxu0 0
        %577 = vmatpush1.bf16.msra.mxu0 0
        %578 = vmatprep.mubr.bf16.mxu0 0
        %579 = vmatmul.mubr.bf16.gmra.mrb[0].mxu0 %v544
        %v580 = vpop.f32.mrb[0].mxu0
        %v581 = vadd.f32 0.0, %v580
        %v582 = vpop.f32.mrb[0].mxu0
        %v583 = vpop.f32.mrb[0].mxu0
        %v584 = vadd.f32 0.0, %v583
        %v585 = vpop.f32.mrb[0].mxu0
        %586 = vdwg.mxu0
        %587 = vrot.lane.b32.xlu0 %v311, 64
        %v588 = vpop.permute.xlu0 %587
        %v591 = vsel %vm361, %v445, 0
        %593 = vmatprep.subr.bf16.mxu0 0
        %594 = vmatpush1.bf16.msra.mxu0 %v588
        %595 = vmatprep.subr.bf16.mxu0 0
        %596 = vmatpush1.bf16.msra.mxu0 0
        %597 = vmatprep.subr.bf16.mxu0 0
        %598 = vmatpush1.bf16.msra.mxu0 0
        %599 = vmatprep.subr.bf16.mxu0 0
        %600 = vmatpush1.bf16.msra.mxu0 0
        %601 = vmatprep.subr.bf16.mxu0 0
        %602 = vmatpush1.bf16.msra.mxu0 0
        %603 = vmatprep.subr.bf16.mxu0 0
        %604 = vmatpush1.bf16.msra.mxu0 0
        %605 = vmatprep.subr.bf16.mxu0 0
        %606 = vmatpush1.bf16.msra.mxu0 0
        %607 = vmatprep.subr.bf16.mxu0 0
        %608 = vmatpush1.bf16.msra.mxu0 0
        %609 = vmatprep.subr.bf16.mxu0 0
        %610 = vmatpush1.bf16.msra.mxu0 0
        %611 = vmatprep.subr.bf16.mxu0 0
        %612 = vmatpush1.bf16.msra.mxu0 0
        %613 = vmatprep.subr.bf16.mxu0 0
        %614 = vmatpush1.bf16.msra.mxu0 0
        %615 = vmatprep.subr.bf16.mxu0 0
        %616 = vmatpush1.bf16.msra.mxu0 0
        %617 = vmatprep.subr.bf16.mxu0 0
        %618 = vmatpush1.bf16.msra.mxu0 0
        %619 = vmatprep.subr.bf16.mxu0 0
        %620 = vmatpush1.bf16.msra.mxu0 0
        %621 = vmatprep.subr.bf16.mxu0 0
        %622 = vmatpush1.bf16.msra.mxu0 0
        %623 = vmatprep.subr.bf16.mxu0 0
        %624 = vmatpush1.bf16.msra.mxu0 0
        %625 = vmatprep.mubr.bf16.mxu0 0
        %626 = vmatmul.mubr.bf16.gmra.mrb[0].mxu0 %v591
        %v627 = vpop.f32.mrb[0].mxu0
        %v628 = vadd.f32 0.0, %v627
        %v629 = vpop.f32.mrb[0].mxu0
        %v630 = vpop.f32.mrb[0].mxu0
        %v631 = vadd.f32 0.0, %v630
        %v632 = vpop.f32.mrb[0].mxu0
        %633 = vdwg.mxu0
        %v634 = vmul.f32 %v487, %v434
        %v635 = vmul.f32 %v490, %v435
        %v636 = vmul.f32 %v534, %v436
        %v637 = vmul.f32 %v537, %v437
        %v638 = vmul.f32 %v581, %v438
        %v639 = vmul.f32 %v584, %v439
        %v640 = vmul.f32 %v628, %v440
        %v641 = vmul.f32 %v631, %v441
        %644 = vrot.lane.b32.xlu0 %v636, 8
        %v645 = vpop.permute.xlu0 %644
        %646 = vrot.lane.b32.xlu0 %v637, 8
        %v647 = vpop.permute.xlu0 %646
        %652 = vrot.lane.b32.xlu0 %v638, 16
        %v653 = vpop.permute.xlu0 %652
        %654 = vrot.lane.b32.xlu0 %v639, 16
        %v655 = vpop.permute.xlu0 %654
        %660 = vrot.lane.b32.xlu0 %v640, 24
        %v661 = vpop.permute.xlu0 %660
        %662 = vrot.lane.b32.xlu0 %v641, 24
        %v663 = vpop.permute.xlu0 %662
        %v666 = vsel %vm157, %v634, %v645
        %v667 = vsel %vm157, %v635, %v647
        %v668 = vsel %vm361, %v666, %v653
        %v669 = vsel %vm361, %v667, %v655
        %vm670 = vcmask 195584
        %v671 = vsel %vm670, %v668, %v661
        %v672 = vsel %vm670, %v669, %v663
        %v673 = vpack.c.bf16 %v672, %v671
        %v675 = vunpack.c.l.b16 %v673
        %v676 = vunpack.c.h.b16 %v673
        %v677 = vpack.c.b16 %v675, %v675
        %v678 = vpack.c.b16 %v676, %v676
        %vm681 = vcmask 257024
        %682 = vst.msk [vmem:[%s134] sm:$0xf] %vm681, %v677
        %683 = vst.msk [vmem:[%s134 + $0x4] sm:$0xf] %vm681, %v678
        %s684 = sand.u32 %s52, 1
        %s685 = scalar_lea.sflag [#allocation4], %s684
        %s686 = sand.u32 %s52, 1
        %s687 = smul.addr %s686, 8
        %s688 = scalar_lea.vmem [#allocation5], %s687
        // Predicated region
        $region29: #{basic_transformer_block.17} parent=23 // pred_check
          %p689 = pneg %p62
        $region30: #{basic_transformer_block.17} parent=23 // pred_check_branch
          %691 = sbr.rel (%p689) target = $region32
        $region31: #{basic_transformer_block.17} parent=23 // pred_region
          %s693 = ssub.s32 128, 128
          %694 = vsyncadd %s685, %s693
          %s695 = smul.addr %s18, 2
          %s696 = smul.addr %s695, 64
          %s697 = scalar_lea.hbm %s1, %s696
          %s698 = sshll.u32 %s688, 4
          %s699 = int_to_ptr.vmem [resolvable:$true] %s698
          %704 = dma.vmem_to_hbm [thread:$0]  %s699, 128, %s697, %s685, 64, 64, 4
        $region32: #{basic_transformer_block.17} parent=23 // pred_fallthru
          _
      $region24: #{basic_transformer_block.17} parent=5 // pred_fallthru
        _
      %p705 = scmp.le.s32.totalorder 2, %s13
      // Predicated region
      $region33: #{basic_transformer_block.17} parent=5 // pred_check
        %p706 = pneg %p705
      $region34: #{basic_transformer_block.17} parent=5 // pred_check_branch
        %708 = sbr.rel (%p706) target = $region36
      $region35: #{basic_transformer_block.17} parent=5 // pred_region
        %s709 = ssub.s32 %s13, 2
        // Predicated region
        $region37: #{basic_transformer_block.17} parent=35 // pred_check
          %p710 = pneg %p68
        $region38: #{basic_transformer_block.17} parent=35 // pred_check_branch
          %712 = sbr.rel (%p710) target = $region40
        $region39: #{basic_transformer_block.17} parent=35 // pred_region
          %s713 = sand.u32 %s53, 1
          %s714 = scalar_lea.sflag [#allocation4], %s713
          %s715 = sand.u32 %s53, 1
          %s716 = smul.addr %s715, 8
          %s717 = scalar_lea.vmem [#allocation5], %s716
          %718 = dma.done %s714, 128
        $region40: #{basic_transformer_block.17} parent=35 // pred_fallthru
          _
      $region36: #{basic_transformer_block.17} parent=5 // pred_fallthru
        _
    $region6: #{basic_transformer_block.17} parent=1 // loop_footer
      %s17 = sadd.s32 1, %s13
    $region7: #{basic_transformer_block.17} parent=1 // loop_footer_branch
      %12 = sbr.rel target = $region3
    $region8: #{basic_transformer_block.17} parent=1 // loop_exit
      _
    %719 = vsyncpa [#allocation3], 1
    %s720 = scalar_lea.sflag [#allocation3], 1
    %721 = vsyncpa %s720, 1
    %722 = vsyncpa [#allocation4], 1
    %s723 = scalar_lea.sflag [#allocation4], 1
    %724 = vsyncpa %s723, 1

// kernel: basic_transformer_block.19
$region0: #{basic_transformer_block.19}
  #allocation0 [shape = 'u32[]', space=smem, size = 0x4, offset = 0x4, fixed_abs, tag = 'smem constant byte address 0x4 - core index']
  #allocation1 [shape = 'u32[144,128]{1,0:T(1,128)}', space=vmem, size = 0x12000, scoped, tag = 'internal scratch']
  %s0 = inlined_call_operand.hbm [shape: bf16[8,32], index: 0, kind: input, shape index: {}]
  %s1 = inlined_call_operand.hbm [shape: bf16[32,32], index: 1, kind: input, shape index: {}]
  %s2 = inlined_call_operand.hbm [shape: f32[1,32], index: 2, kind: input, shape index: {}]
  %s3 = inlined_call_operand.hbm [shape: bf16[8,32], index: 3, kind: output, shape index: {}]
  %s4 = sld [smem:[#allocation0]]
  $region34: #{basic_transformer_block.19} parent=0
    _
  %s6 = ssub.s32 1, %s4
  %s7 = scalar_select 0, %s6, %s4
  $region1: #{basic_transformer_block.19} parent=0
    #allocation2 [shape = 'u8[2048]{0}', space=vmem, size = 0x800, scoped, tag = 'input window, operand 0, single buffered']
    #allocation3 [shape = 's32[1]{0}', space=sflag, size = 0x4, scoped, tag = 'scoped memory for basic_transformer_block.19']
    #allocation4 [shape = 's32[1]{0}', space=sflag, size = 0x4, scoped, tag = 'scoped memory for basic_transformer_block.19']
    #allocation5 [shape = 'u8[8192]{0}', space=vmem, size = 0x2000, scoped, tag = 'input window, operand 1, single buffered']
    #allocation6 [shape = 's32[1]{0}', space=sflag, size = 0x4, scoped, tag = 'scoped memory for basic_transformer_block.19']
    #allocation7 [shape = 'u8[512]{0}', space=vmem, size = 0x400, scoped, tag = 'input window, operand 2, single buffered']
    #allocation8 [shape = 'u8[2048]{0}', space=vmem, size = 0x800, scoped, tag = 'output window, operand 0, single buffered']
    %8 = vsyncpa [#allocation3], 0
    %9 = vsyncpa [#allocation6], 0
    %10 = vsyncpa [#allocation4], 0
    // Predicated region
    $region2: #{basic_transformer_block.19} parent=1 // pred_check
      _
    $region3: #{basic_transformer_block.19} parent=1 // pred_check_branch
      %12 = sbr.rel (0) target = $region5
    $region4: #{basic_transformer_block.19} parent=1 // pred_region
      %s14 = ssub.s32 64, 64
      %15 = vsyncadd [#allocation3], %s14
      %s17 = sshll.u32 [#allocation2], 4
      %s18 = int_to_ptr.vmem [resolvable:$true] %s17
      %20 = dma.hbm_to_vmem [thread:$0]  %s0, 64, %s18, [#allocation3]
    $region5: #{basic_transformer_block.19} parent=1 // pred_fallthru
      _
    // Predicated region
    $region6: #{basic_transformer_block.19} parent=1 // pred_check
      _
    $region7: #{basic_transformer_block.19} parent=1 // pred_check_branch
      %22 = sbr.rel (0) target = $region9
    $region8: #{basic_transformer_block.19} parent=1 // pred_region
      %s24 = ssub.s32 256, 256
      %25 = vsyncadd [#allocation6], %s24
      %s26 = sshll.u32 [#allocation5], 4
      %s27 = int_to_ptr.vmem [resolvable:$true] %s26
      %32 = dma.hbm_to_vmem [thread:$0]  %s1, 256, %s27, [#allocation6], 64, 64, 4
    $region9: #{basic_transformer_block.19} parent=1 // pred_fallthru
      _
    // Predicated region
    $region10: #{basic_transformer_block.19} parent=1 // pred_check
      _
    $region11: #{basic_transformer_block.19} parent=1 // pred_check_branch
      %34 = sbr.rel (0) target = $region13
    $region12: #{basic_transformer_block.19} parent=1 // pred_region
      %s36 = ssub.s32 16, 16
      %37 = vsyncadd [#allocation6], %s36
      %s39 = sshll.u32 [#allocation7], 4
      %s40 = int_to_ptr.vmem [resolvable:$true] %s39
      %42 = dma.hbm_to_vmem [thread:$0]  %s2, 16, %s40, [#allocation6]
    $region13: #{basic_transformer_block.19} parent=1 // pred_fallthru
      _
    // Predicated region
    $region14: #{basic_transformer_block.19} parent=1 // pred_check
      _
    $region15: #{basic_transformer_block.19} parent=1 // pred_check_branch
      %44 = sbr.rel (0) target = $region17
    $region16: #{basic_transformer_block.19} parent=1 // pred_region
      %45 = dma.done [#allocation3], 64
    $region17: #{basic_transformer_block.19} parent=1 // pred_fallthru
      _
    // Predicated region
    $region18: #{basic_transformer_block.19} parent=1 // pred_check
      _
    $region19: #{basic_transformer_block.19} parent=1 // pred_check_branch
      %47 = sbr.rel (0) target = $region21
    $region20: #{basic_transformer_block.19} parent=1 // pred_region
      %48 = dma.done [#allocation6], 256
    $region21: #{basic_transformer_block.19} parent=1 // pred_fallthru
      _
    // Predicated region
    $region22: #{basic_transformer_block.19} parent=1 // pred_check
      _
    $region23: #{basic_transformer_block.19} parent=1 // pred_check_branch
      %50 = sbr.rel (0) target = $region25
    $region24: #{basic_transformer_block.19} parent=1 // pred_region
      %51 = dma.done [#allocation6], 16
    $region25: #{basic_transformer_block.19} parent=1 // pred_fallthru
      _
    %v53 = vld [vmem:[#allocation2] sm:$0xf]
    %v54 = vld [vmem:[#allocation5] sm:$0xf]
    %v55 = vld [vmem:[#allocation5 + $0x4] sm:$0xf]
    %v56 = vld [vmem:[#allocation5 + $0x8] sm:$0xf]
    %v57 = vld [vmem:[#allocation5 + $0xc] sm:$0xf]
    %v58 = vld [vmem:[#allocation7] sm:$0x1]
    %v60 = vlaneseq
    %v61 = vshrl.u32 %v60, 7
    %v62 = vsub.s32 0, %v61
    %v63 = vrot.slane %v58, %v62
    %v69 = vunpack.c.l.b16 %v54
    %v70 = vunpack.c.l.b16 %v55
    %v71 = vunpack.c.l.b16 %v56
    %v72 = vunpack.c.l.b16 %v57
    %v73 = vpack.c.b16 %v70, %v69
    %v74 = vpack.c.b16 %v72, %v71
    %vm77 = vcmask 261120
    %v79 = vsel %vm77, %v53, 0
    %81 = vmatprep.subr.bf16.mxu0 0
    %82 = vmatpush1.bf16.msra.mxu0 %v73
    %83 = vmatprep.subr.bf16.mxu0 0
    %84 = vmatpush1.bf16.msra.mxu0 %v74
    %85 = vmatprep.subr.bf16.mxu0 0
    %86 = vmatpush1.bf16.msra.mxu0 0
    %87 = vmatprep.subr.bf16.mxu0 0
    %88 = vmatpush1.bf16.msra.mxu0 0
    %89 = vmatprep.subr.bf16.mxu0 0
    %90 = vmatpush1.bf16.msra.mxu0 0
    %91 = vmatprep.subr.bf16.mxu0 0
    %92 = vmatpush1.bf16.msra.mxu0 0
    %93 = vmatprep.subr.bf16.mxu0 0
    %94 = vmatpush1.bf16.msra.mxu0 0
    %95 = vmatprep.subr.bf16.mxu0 0
    %96 = vmatpush1.bf16.msra.mxu0 0
    %97 = vmatprep.subr.bf16.mxu0 0
    %98 = vmatpush1.bf16.msra.mxu0 0
    %99 = vmatprep.subr.bf16.mxu0 0
    %100 = vmatpush1.bf16.msra.mxu0 0
    %101 = vmatprep.subr.bf16.mxu0 0
    %102 = vmatpush1.bf16.msra.mxu0 0
    %103 = vmatprep.subr.bf16.mxu0 0
    %104 = vmatpush1.bf16.msra.mxu0 0
    %105 = vmatprep.subr.bf16.mxu0 0
    %106 = vmatpush1.bf16.msra.mxu0 0
    %107 = vmatprep.subr.bf16.mxu0 0
    %108 = vmatpush1.bf16.msra.mxu0 0
    %109 = vmatprep.subr.bf16.mxu0 0
    %110 = vmatpush1.bf16.msra.mxu0 0
    %111 = vmatprep.subr.bf16.mxu0 0
    %112 = vmatpush1.bf16.msra.mxu0 0
    %113 = vmatprep.mubr.bf16.mxu0 0
    %114 = vmatmul.mubr.bf16.gmra.mrb[0].mxu0 %v79
    %v115 = vpop.f32.mrb[0].mxu0
    %v116 = vadd.f32 %v63, %v115
    %v117 = vpop.f32.mrb[0].mxu0
    %v118 = vpop.f32.mrb[0].mxu0
    %v119 = vpop.f32.mrb[0].mxu0
    %120 = vdwg.mxu0
    %v121 = vpack.c.bf16 %v116, %v116
    %vm122 = vcmask 257024
    %123 = vst.msk [vmem:[#allocation8] sm:$0xf] %vm122, %v121
    // Predicated region
    $region26: #{basic_transformer_block.19} parent=1 // pred_check
      _
    $region27: #{basic_transformer_block.19} parent=1 // pred_check_branch
      %125 = sbr.rel (0) target = $region29
    $region28: #{basic_transformer_block.19} parent=1 // pred_region
      %s127 = ssub.s32 64, 64
      %128 = vsyncadd [#allocation4], %s127
      %s130 = sshll.u32 [#allocation8], 4
      %s131 = int_to_ptr.vmem [resolvable:$true] %s130
      %133 = dma.vmem_to_hbm [thread:$0]  %s131, 64, %s3, [#allocation4]
    $region29: #{basic_transformer_block.19} parent=1 // pred_fallthru
      _
    // Predicated region
    $region30: #{basic_transformer_block.19} parent=1 // pred_check
      _
    $region31: #{basic_transformer_block.19} parent=1 // pred_check_branch
      %135 = sbr.rel (0) target = $region33
    $region32: #{basic_transformer_block.19} parent=1 // pred_region
      %136 = dma.done [#allocation4], 64
    $region33: #{basic_transformer_block.19} parent=1 // pred_fallthru
      _
    %137 = vsyncpa [#allocation3], 1
    %138 = vsyncpa [#allocation6], 1
    %139 = vsyncpa [#allocation4], 1

// kernel: basic_transformer_block.18
$region0: #{basic_transformer_block.18}
  #allocation0 [shape = 'u32[]', space=smem, size = 0x4, offset = 0x4, fixed_abs, tag = 'smem constant byte address 0x4 - core index']
  #allocation1 [shape = 'u32[144,128]{1,0:T(1,128)}', space=vmem, size = 0x12000, scoped, tag = 'internal scratch']
  #allocation2 [shape = 'f32[1]{0:T(128)S(6)}', space=smem, size = 0x200, scoped, tag = 'scoped memory for basic_transformer_block.18']
  %s0 = inlined_call_operand.<no memory space> [shape: f32[1], index: 0, kind: input, shape index: {}]
  %s1 = inlined_call_operand.hbm [shape: bf16[32,32], index: 1, kind: input, shape index: {}]
  %s2 = inlined_call_operand.hbm [shape: bf16[32,32], index: 2, kind: input, shape index: {}]
  %s3 = inlined_call_operand.hbm [shape: f32[1,32], index: 3, kind: input, shape index: {}]
  %s4 = inlined_call_operand.hbm [shape: bf16[32,32], index: 4, kind: input, shape index: {}]
  %s5 = inlined_call_operand.hbm [shape: bf16[32,32], index: 5, kind: output, shape index: {}]
  %s6 = sld [smem:[#allocation0]]
  $region46: #{basic_transformer_block.18} parent=0
    _
  %s8 = ssub.s32 1, %s6
  %s9 = scalar_select 0, %s8, %s6
  %10 = sst [smem:[#allocation2]] %s0
  $region1: #{basic_transformer_block.18} parent=0
    #allocation3 [shape = 'u8[8192]{0}', space=vmem, size = 0x2000, scoped, tag = 'input window, operand 1, single buffered']
    #allocation4 [shape = 's32[1]{0}', space=sflag, size = 0x4, scoped, tag = 'scoped memory for basic_transformer_block.18']
    #allocation5 [shape = 's32[1]{0}', space=sflag, size = 0x4, scoped, tag = 'scoped memory for basic_transformer_block.18']
    #allocation6 [shape = 'u8[8192]{0}', space=vmem, size = 0x2000, scoped, tag = 'input window, operand 2, single buffered']
    #allocation7 [shape = 's32[1]{0}', space=sflag, size = 0x4, scoped, tag = 'scoped memory for basic_transformer_block.18']
    #allocation8 [shape = 'u8[512]{0}', space=vmem, size = 0x400, scoped, tag = 'input window, operand 3, single buffered']
    #allocation9 [shape = 'u8[8192]{0}', space=vmem, size = 0x2000, scoped, tag = 'input window, operand 4, single buffered']
    #allocation10 [shape = 's32[1]{0}', space=sflag, size = 0x4, scoped, tag = 'scoped memory for basic_transformer_block.18']
    #allocation11 [shape = 'u8[8192]{0}', space=vmem, size = 0x2000, scoped, tag = 'output window, operand 0, single buffered']
    %11 = vsyncpa [#allocation4], 0
    %12 = vsyncpa [#allocation7], 0
    %13 = vsyncpa [#allocation10], 0
    %14 = vsyncpa [#allocation5], 0
    // Predicated region
    $region2: #{basic_transformer_block.18} parent=1 // pred_check
      _
    $region3: #{basic_transformer_block.18} parent=1 // pred_check_branch
      %16 = sbr.rel (0) target = $region5
    $region4: #{basic_transformer_block.18} parent=1 // pred_region
      _
    $region5: #{basic_transformer_block.18} parent=1 // pred_fallthru
      _
    // Predicated region
    $region6: #{basic_transformer_block.18} parent=1 // pred_check
      _
    $region7: #{basic_transformer_block.18} parent=1 // pred_check_branch
      %18 = sbr.rel (0) target = $region9
    $region8: #{basic_transformer_block.18} parent=1 // pred_region
      %s20 = ssub.s32 256, 256
      %21 = vsyncadd [#allocation4], %s20
      %s22 = sshll.u32 [#allocation3], 4
      %s23 = int_to_ptr.vmem [resolvable:$true] %s22
      %28 = dma.hbm_to_vmem [thread:$0]  %s1, 256, %s23, [#allocation4], 64, 64, 4
    $region9: #{basic_transformer_block.18} parent=1 // pred_fallthru
      _
    // Predicated region
    $region10: #{basic_transformer_block.18} parent=1 // pred_check
      _
    $region11: #{basic_transformer_block.18} parent=1 // pred_check_branch
      %30 = sbr.rel (0) target = $region13
    $region12: #{basic_transformer_block.18} parent=1 // pred_region
      %s32 = ssub.s32 256, 256
      %33 = vsyncadd [#allocation7], %s32
      %s34 = sshll.u32 [#allocation6], 4
      %s35 = int_to_ptr.vmem [resolvable:$true] %s34
      %40 = dma.hbm_to_vmem [thread:$0]  %s2, 256, %s35, [#allocation7], 64, 64, 4
    $region13: #{basic_transformer_block.18} parent=1 // pred_fallthru
      _
    // Predicated region
    $region14: #{basic_transformer_block.18} parent=1 // pred_check
      _
    $region15: #{basic_transformer_block.18} parent=1 // pred_check_branch
      %42 = sbr.rel (0) target = $region17
    $region16: #{basic_transformer_block.18} parent=1 // pred_region
      %s44 = ssub.s32 16, 16
      %45 = vsyncadd [#allocation7], %s44
      %s47 = sshll.u32 [#allocation8], 4
      %s48 = int_to_ptr.vmem [resolvable:$true] %s47
      %50 = dma.hbm_to_vmem [thread:$0]  %s3, 16, %s48, [#allocation7]
    $region17: #{basic_transformer_block.18} parent=1 // pred_fallthru
      _
    // Predicated region
    $region18: #{basic_transformer_block.18} parent=1 // pred_check
      _
    $region19: #{basic_transformer_block.18} parent=1 // pred_check_branch
      %52 = sbr.rel (0) target = $region21
    $region20: #{basic_transformer_block.18} parent=1 // pred_region
      %s54 = ssub.s32 256, 256
      %55 = vsyncadd [#allocation10], %s54
      %s56 = sshll.u32 [#allocation9], 4
      %s57 = int_to_ptr.vmem [resolvable:$true] %s56
      %62 = dma.hbm_to_vmem [thread:$0]  %s4, 256, %s57, [#allocation10], 64, 64, 4
    $region21: #{basic_transformer_block.18} parent=1 // pred_fallthru
      _
    // Predicated region
    $region22: #{basic_transformer_block.18} parent=1 // pred_check
      _
    $region23: #{basic_transformer_block.18} parent=1 // pred_check_branch
      %64 = sbr.rel (0) target = $region25
    $region24: #{basic_transformer_block.18} parent=1 // pred_region
      %65 = dma.done [#allocation4], 256
    $region25: #{basic_transformer_block.18} parent=1 // pred_fallthru
      _
    // Predicated region
    $region26: #{basic_transformer_block.18} parent=1 // pred_check
      _
    $region27: #{basic_transformer_block.18} parent=1 // pred_check_branch
      %67 = sbr.rel (0) target = $region29
    $region28: #{basic_transformer_block.18} parent=1 // pred_region
      %68 = dma.done [#allocation7], 256
    $region29: #{basic_transformer_block.18} parent=1 // pred_fallthru
      _
    // Predicated region
    $region30: #{basic_transformer_block.18} parent=1 // pred_check
      _
    $region31: #{basic_transformer_block.18} parent=1 // pred_check_branch
      %70 = sbr.rel (0) target = $region33
    $region32: #{basic_transformer_block.18} parent=1 // pred_region
      %71 = dma.done [#allocation7], 16
    $region33: #{basic_transformer_block.18} parent=1 // pred_fallthru
      _
    // Predicated region
    $region34: #{basic_transformer_block.18} parent=1 // pred_check
      _
    $region35: #{basic_transformer_block.18} parent=1 // pred_check_branch
      %73 = sbr.rel (0) target = $region37
    $region36: #{basic_transformer_block.18} parent=1 // pred_region
      %74 = dma.done [#allocation10], 256
    $region37: #{basic_transformer_block.18} parent=1 // pred_fallthru
      _
    %v76 = vld [vmem:[#allocation3] sm:$0xf]
    %v77 = vld [vmem:[#allocation3 + $0x4] sm:$0xf]
    %v78 = vld [vmem:[#allocation3 + $0x8] sm:$0xf]
    %v79 = vld [vmem:[#allocation3 + $0xc] sm:$0xf]
    %v80 = vld [vmem:[#allocation6] sm:$0xf]
    %v81 = vld [vmem:[#allocation6 + $0x4] sm:$0xf]
    %v82 = vld [vmem:[#allocation6 + $0x8] sm:$0xf]
    %v83 = vld [vmem:[#allocation6 + $0xc] sm:$0xf]
    %v84 = vld [vmem:[#allocation8] sm:$0x1]
    %v86 = vlaneseq
    %v87 = vshrl.u32 %v86, 7
    %v88 = vsub.s32 0, %v87
    %v89 = vrot.slane %v84, %v88
    %v95 = vunpack.c.l.b16 %v76
    %v96 = vunpack.c.l.b16 %v77
    %v97 = vunpack.c.l.b16 %v78
    %v98 = vunpack.c.l.b16 %v79
    %v99 = vpack.c.b16 %v96, %v95
    %v100 = vpack.c.b16 %v98, %v97
    %v105 = vunpack.c.l.b16 %v80
    %v106 = vunpack.c.l.b16 %v81
    %v107 = vunpack.c.l.b16 %v82
    %v108 = vunpack.c.l.b16 %v83
    %v109 = vpack.c.b16 %v106, %v105
    %v110 = vpack.c.b16 %v108, %v107
    %vm113 = vcmask 261120
    %v115 = vsel %vm113, %v99, 0
    %v118 = vsel %vm113, %v100, 0
    %120 = vmatprep.subr.bf16.mxu0 0
    %121 = vmatpush1.bf16.msra.mxu0 %v109
    %122 = vmatprep.subr.bf16.mxu0 0
    %123 = vmatpush1.bf16.msra.mxu0 %v110
    %124 = vmatprep.subr.bf16.mxu0 0
    %125 = vmatpush1.bf16.msra.mxu0 0
    %126 = vmatprep.subr.bf16.mxu0 0
    %127 = vmatpush1.bf16.msra.mxu0 0
    %128 = vmatprep.subr.bf16.mxu0 0
    %129 = vmatpush1.bf16.msra.mxu0 0
    %130 = vmatprep.subr.bf16.mxu0 0
    %131 = vmatpush1.bf16.msra.mxu0 0
    %132 = vmatprep.subr.bf16.mxu0 0
    %133 = vmatpush1.bf16.msra.mxu0 0
    %134 = vmatprep.subr.bf16.mxu0 0
    %135 = vmatpush1.bf16.msra.mxu0 0
    %136 = vmatprep.subr.bf16.mxu0 0
    %137 = vmatpush1.bf16.msra.mxu0 0
    %138 = vmatprep.subr.bf16.mxu0 0
    %139 = vmatpush1.bf16.msra.mxu0 0
    %140 = vmatprep.subr.bf16.mxu0 0
    %141 = vmatpush1.bf16.msra.mxu0 0
    %142 = vmatprep.subr.bf16.mxu0 0
    %143 = vmatpush1.bf16.msra.mxu0 0
    %144 = vmatprep.subr.bf16.mxu0 0
    %145 = vmatpush1.bf16.msra.mxu0 0
    %146 = vmatprep.subr.bf16.mxu0 0
    %147 = vmatpush1.bf16.msra.mxu0 0
    %148 = vmatprep.subr.bf16.mxu0 0
    %149 = vmatpush1.bf16.msra.mxu0 0
    %150 = vmatprep.subr.bf16.mxu0 0
    %151 = vmatpush1.bf16.msra.mxu0 0
    %152 = vmatprep.mubr.bf16.mxu0 0
    %153 = vmatmul.mubr.bf16.gmra.mrb[0].mxu0 %v115
    %v154 = vpop.f32.mrb[0].mxu0
    %v155 = vadd.f32 %v89, %v154
    %v156 = vpop.f32.mrb[0].mxu0
    %v157 = vpop.f32.mrb[0].mxu0
    %v158 = vadd.f32 %v89, %v157
    %v159 = vpop.f32.mrb[0].mxu0
    %160 = vmatprep.mubr.bf16.mxu0 0
    %161 = vmatmul.mubr.bf16.gmra.mrb[0].mxu0 %v118
    %v162 = vpop.f32.mrb[0].mxu0
    %v163 = vadd.f32 %v89, %v162
    %v164 = vpop.f32.mrb[0].mxu0
    %v165 = vpop.f32.mrb[0].mxu0
    %v166 = vadd.f32 %v89, %v165
    %v167 = vpop.f32.mrb[0].mxu0
    %168 = vdwg.mxu0
    %v169 = vld [vmem:[#allocation9] sm:$0xf]
    %v170 = vld [vmem:[#allocation9 + $0x4] sm:$0xf]
    %v171 = vld [vmem:[#allocation9 + $0x8] sm:$0xf]
    %v172 = vld [vmem:[#allocation9 + $0xc] sm:$0xf]
    %v173 = vunpack.c.l.bf16 %v169
    %v174 = vunpack.c.l.bf16 %v170
    %v175 = vunpack.c.l.bf16 %v171
    %v176 = vunpack.c.l.bf16 %v172
    %s177 = sld [smem:[#allocation2]]
    %v178 = vstv %s177
    %v179 = vmul.f32 %v178, %v155
    %v180 = vmul.f32 %v178, %v158
    %v181 = vmul.f32 %v178, %v163
    %v182 = vmul.f32 %v178, %v166
    %v183 = vadd.f32 %v173, %v179
    %v184 = vadd.f32 %v174, %v180
    %v185 = vadd.f32 %v175, %v181
    %v186 = vadd.f32 %v176, %v182
    %v187 = vpack.c.bf16 %v184, %v183
    %v188 = vpack.c.bf16 %v186, %v185
    %v191 = vunpack.c.l.b16 %v187
    %v192 = vunpack.c.h.b16 %v187
    %v193 = vunpack.c.l.b16 %v188
    %v194 = vunpack.c.h.b16 %v188
    %v195 = vpack.c.b16 %v191, %v191
    %v196 = vpack.c.b16 %v192, %v192
    %v197 = vpack.c.b16 %v193, %v193
    %v198 = vpack.c.b16 %v194, %v194
    %vm203 = vcmask 257024
    %204 = vst.msk [vmem:[#allocation11] sm:$0xf] %vm203, %v195
    %205 = vst.msk [vmem:[#allocation11 + $0x4] sm:$0xf] %vm203, %v196
    %206 = vst.msk [vmem:[#allocation11 + $0x8] sm:$0xf] %vm203, %v197
    %207 = vst.msk [vmem:[#allocation11 + $0xc] sm:$0xf] %vm203, %v198
    // Predicated region
    $region38: #{basic_transformer_block.18} parent=1 // pred_check
      _
    $region39: #{basic_transformer_block.18} parent=1 // pred_check_branch
      %209 = sbr.rel (0) target = $region41
    $region40: #{basic_transformer_block.18} parent=1 // pred_region
      %s211 = ssub.s32 256, 256
      %212 = vsyncadd [#allocation5], %s211
      %s213 = sshll.u32 [#allocation11], 4
      %s214 = int_to_ptr.vmem [resolvable:$true] %s213
      %219 = dma.vmem_to_hbm [thread:$0]  %s214, 256, %s5, [#allocation5], 64, 64, 4
    $region41: #{basic_transformer_block.18} parent=1 // pred_fallthru
      _
    // Predicated region
    $region42: #{basic_transformer_block.18} parent=1 // pred_check
      _
    $region43: #{basic_transformer_block.18} parent=1 // pred_check_branch
      %221 = sbr.rel (0) target = $region45
    $region44: #{basic_transformer_block.18} parent=1 // pred_region
      %222 = dma.done [#allocation5], 256
    $region45: #{basic_transformer_block.18} parent=1 // pred_fallthru
      _
    %223 = vsyncpa [#allocation4], 1
    %224 = vsyncpa [#allocation7], 1
    %225 = vsyncpa [#allocation10], 1
    %226 = vsyncpa [#allocation5], 1

// kernel: basic_transformer_block.21
$region0: #{basic_transformer_block.21}
  #allocation0 [shape = 'u32[]', space=smem, size = 0x4, offset = 0x4, fixed_abs, tag = 'smem constant byte address 0x4 - core index']
  #allocation1 [shape = 'u32[144,128]{1,0:T(1,128)}', space=vmem, size = 0x12000, scoped, tag = 'internal scratch']
  #allocation2 [shape = 'bf16[8,32]{1,0:T(8,128)(2,1)}', space=vmem, size = 0x800, scoped, tag = 'scratch operand']
  %s0 = inlined_call_operand.hbm [shape: bf16[8,32], index: 0, kind: input, shape index: {}]
  %s1 = inlined_call_operand.hbm [shape: f32[1,32], index: 1, kind: input, shape index: {}]
  %s2 = inlined_call_operand.hbm [shape: f32[1,32], index: 2, kind: input, shape index: {}]
  %s3 = inlined_call_operand.hbm [shape: bf16[32,96], index: 3, kind: input, shape index: {}]
  %s4 = inlined_call_operand.hbm [shape: bf16[8,96], index: 4, kind: output, shape index: {}]
  %s5 = sld [smem:[#allocation0]]
  $region46: #{basic_transformer_block.21} parent=0
    _
  %s7 = ssub.s32 1, %s5
  %s8 = scalar_select 0, %s7, %s5
  $region1: #{basic_transformer_block.21} parent=0
    #allocation3 [shape = 'u8[2048]{0}', space=vmem, size = 0x800, scoped, tag = 'input window, operand 0, single buffered']
    #allocation4 [shape = 's32[1]{0}', space=sflag, size = 0x4, scoped, tag = 'scoped memory for basic_transformer_block.21']
    #allocation5 [shape = 's32[1]{0}', space=sflag, size = 0x4, scoped, tag = 'scoped memory for basic_transformer_block.21']
    #allocation6 [shape = 'u8[512]{0}', space=vmem, size = 0x400, scoped, tag = 'input window, operand 1, single buffered']
    #allocation7 [shape = 's32[1]{0}', space=sflag, size = 0x4, scoped, tag = 'scoped memory for basic_transformer_block.21']
    #allocation8 [shape = 'u8[512]{0}', space=vmem, size = 0x400, scoped, tag = 'input window, operand 2, single buffered']
    #allocation9 [shape = 'u8[8192]{0}', space=vmem, size = 0x2000, scoped, tag = 'input window, operand 3, single buffered']
    #allocation10 [shape = 's32[1]{0}', space=sflag, size = 0x4, scoped, tag = 'scoped memory for basic_transformer_block.21']
    #allocation11 [shape = 'u8[2048]{0}', space=vmem, size = 0x800, scoped, tag = 'output window, operand 0, single buffered']
    %9 = vsyncpa [#allocation4], 0
    %10 = vsyncpa [#allocation7], 0
    %11 = vsyncpa [#allocation10], 0
    %12 = vsyncpa [#allocation5], 0
    // Predicated region
    $region2: #{basic_transformer_block.21} parent=1 // pred_check
      _
    $region3: #{basic_transformer_block.21} parent=1 // pred_check_branch
      %14 = sbr.rel (0) target = $region5
    $region4: #{basic_transformer_block.21} parent=1 // pred_region
      %s16 = ssub.s32 64, 64
      %17 = vsyncadd [#allocation4], %s16
      %s19 = sshll.u32 [#allocation3], 4
      %s20 = int_to_ptr.vmem [resolvable:$true] %s19
      %22 = dma.hbm_to_vmem [thread:$0]  %s0, 64, %s20, [#allocation4]
    $region5: #{basic_transformer_block.21} parent=1 // pred_fallthru
      _
    // Predicated region
    $region6: #{basic_transformer_block.21} parent=1 // pred_check
      _
    $region7: #{basic_transformer_block.21} parent=1 // pred_check_branch
      %24 = sbr.rel (0) target = $region9
    $region8: #{basic_transformer_block.21} parent=1 // pred_region
      %s26 = ssub.s32 16, 16
      %27 = vsyncadd [#allocation7], %s26
      %s29 = sshll.u32 [#allocation6], 4
      %s30 = int_to_ptr.vmem [resolvable:$true] %s29
      %32 = dma.hbm_to_vmem [thread:$0]  %s1, 16, %s30, [#allocation7]
    $region9: #{basic_transformer_block.21} parent=1 // pred_fallthru
      _
    // Predicated region
    $region10: #{basic_transformer_block.21} parent=1 // pred_check
      _
    $region11: #{basic_transformer_block.21} parent=1 // pred_check_branch
      %34 = sbr.rel (0) target = $region13
    $region12: #{basic_transformer_block.21} parent=1 // pred_region
      %s36 = ssub.s32 16, 16
      %37 = vsyncadd [#allocation7], %s36
      %s39 = sshll.u32 [#allocation8], 4
      %s40 = int_to_ptr.vmem [resolvable:$true] %s39
      %42 = dma.hbm_to_vmem [thread:$0]  %s2, 16, %s40, [#allocation7]
    $region13: #{basic_transformer_block.21} parent=1 // pred_fallthru
      _
    // Predicated region
    $region14: #{basic_transformer_block.21} parent=1 // pred_check
      _
    $region15: #{basic_transformer_block.21} parent=1 // pred_check_branch
      %44 = sbr.rel (0) target = $region17
    $region16: #{basic_transformer_block.21} parent=1 // pred_region
      %s46 = ssub.s32 256, 256
      %47 = vsyncadd [#allocation10], %s46
      %s48 = sshll.u32 [#allocation9], 4
      %s49 = int_to_ptr.vmem [resolvable:$true] %s48
      %54 = dma.hbm_to_vmem [thread:$0]  %s3, 256, %s49, [#allocation10], 64, 64, 4
    $region17: #{basic_transformer_block.21} parent=1 // pred_fallthru
      _
    // Predicated region
    $region18: #{basic_transformer_block.21} parent=1 // pred_check
      _
    $region19: #{basic_transformer_block.21} parent=1 // pred_check_branch
      %56 = sbr.rel (0) target = $region21
    $region20: #{basic_transformer_block.21} parent=1 // pred_region
      %57 = dma.done [#allocation4], 64
    $region21: #{basic_transformer_block.21} parent=1 // pred_fallthru
      _
    // Predicated region
    $region22: #{basic_transformer_block.21} parent=1 // pred_check
      _
    $region23: #{basic_transformer_block.21} parent=1 // pred_check_branch
      %59 = sbr.rel (0) target = $region25
    $region24: #{basic_transformer_block.21} parent=1 // pred_region
      %60 = dma.done [#allocation7], 16
    $region25: #{basic_transformer_block.21} parent=1 // pred_fallthru
      _
    // Predicated region
    $region26: #{basic_transformer_block.21} parent=1 // pred_check
      _
    $region27: #{basic_transformer_block.21} parent=1 // pred_check_branch
      %62 = sbr.rel (0) target = $region29
    $region28: #{basic_transformer_block.21} parent=1 // pred_region
      %63 = dma.done [#allocation7], 16
    $region29: #{basic_transformer_block.21} parent=1 // pred_fallthru
      _
    // Predicated region
    $region30: #{basic_transformer_block.21} parent=1 // pred_check
      _
    $region31: #{basic_transformer_block.21} parent=1 // pred_check_branch
      %65 = sbr.rel (0) target = $region33
    $region32: #{basic_transformer_block.21} parent=1 // pred_region
      %66 = dma.done [#allocation10], 256
    $region33: #{basic_transformer_block.21} parent=1 // pred_fallthru
      _
    %p68 = scmp.eq.s32.totalorder 0, 0
    // Predicated region
    $region34: #{basic_transformer_block.21} parent=1 // pred_check
      %p69 = pneg %p68
    $region35: #{basic_transformer_block.21} parent=1 // pred_check_branch
      %71 = sbr.rel (%p69) target = $region37
    $region36: #{basic_transformer_block.21} parent=1 // pred_region
      %v72 = vld [vmem:[#allocation3] sm:$0xf]
      %v73 = vunpack.c.l.bf16 %v72
      %vm74 = vcmask 261120
      %v75 = vsel %vm74, %v73, 0.0
      %76 = vadd.xlane.f32.xlu0 %v75
      %v77 = vpop.xlane.xlu0 %76
      %v78 = vrcp.pop 32.0
      %v79 = vmul.f32 %v77, %v78
      %v80 = vsub.f32 %v73, %v79
      %v81 = vmul.f32 %v80, %v80
      %v82 = vsel %vm74, %v81, 0.0
      %83 = vadd.xlane.f32.xlu0 %v82
      %v84 = vpop.xlane.xlu0 %83
      %v85 = vmul.f32 %v84, %v78
      %v86 = vadd.f32 %v85, 1e-05
      %v87 = vrsqrt.pop %v86
      %v88 = vmul.f32 %v80, %v87
      %v89 = vld [vmem:[#allocation6] sm:$0x1]
      %v91 = vlaneseq
      %v92 = vshrl.u32 %v91, 7
      %v93 = vsub.s32 0, %v92
      %v94 = vrot.slane %v89, %v93
      %v96 = vmul.f32 %v88, %v94
      %v97 = vld [vmem:[#allocation8] sm:$0x1]
      %v99 = vlaneseq
      %v100 = vshrl.u32 %v99, 7
      %v101 = vsub.s32 0, %v100
      %v102 = vrot.slane %v97, %v101
      %v104 = vadd.f32 %v96, %v102
      %v105 = vpack.c.bf16 %v104, %v104
      %vm106 = vcmask 257024
      %107 = vst.msk [vmem:[#allocation2] sm:$0xf] %vm106, %v105
    $region37: #{basic_transformer_block.21} parent=1 // pred_fallthru
      _
    %v108 = vld [vmem:[#allocation2] sm:$0xf]
    %v109 = vld [vmem:[#allocation9] sm:$0xf]
    %v110 = vld [vmem:[#allocation9 + $0x4] sm:$0xf]
    %v111 = vld [vmem:[#allocation9 + $0x8] sm:$0xf]
    %v112 = vld [vmem:[#allocation9 + $0xc] sm:$0xf]
    %v117 = vunpack.c.l.b16 %v109
    %v118 = vunpack.c.l.b16 %v110
    %v119 = vunpack.c.l.b16 %v111
    %v120 = vunpack.c.l.b16 %v112
    %v121 = vpack.c.b16 %v118, %v117
    %v122 = vpack.c.b16 %v120, %v119
    %vm125 = vcmask 261120
    %v127 = vsel %vm125, %v108, 0
    %129 = vmatprep.subr.bf16.mxu0 0
    %130 = vmatpush1.bf16.msra.mxu0 %v121
    %131 = vmatprep.subr.bf16.mxu0 0
    %132 = vmatpush1.bf16.msra.mxu0 %v122
    %133 = vmatprep.subr.bf16.mxu0 0
    %134 = vmatpush1.bf16.msra.mxu0 0
    %135 = vmatprep.subr.bf16.mxu0 0
    %136 = vmatpush1.bf16.msra.mxu0 0
    %137 = vmatprep.subr.bf16.mxu0 0
    %138 = vmatpush1.bf16.msra.mxu0 0
    %139 = vmatprep.subr.bf16.mxu0 0
    %140 = vmatpush1.bf16.msra.mxu0 0
    %141 = vmatprep.subr.bf16.mxu0 0
    %142 = vmatpush1.bf16.msra.mxu0 0
    %143 = vmatprep.subr.bf16.mxu0 0
    %144 = vmatpush1.bf16.msra.mxu0 0
    %145 = vmatprep.subr.bf16.mxu0 0
    %146 = vmatpush1.bf16.msra.mxu0 0
    %147 = vmatprep.subr.bf16.mxu0 0
    %148 = vmatpush1.bf16.msra.mxu0 0
    %149 = vmatprep.subr.bf16.mxu0 0
    %150 = vmatpush1.bf16.msra.mxu0 0
    %151 = vmatprep.subr.bf16.mxu0 0
    %152 = vmatpush1.bf16.msra.mxu0 0
    %153 = vmatprep.subr.bf16.mxu0 0
    %154 = vmatpush1.bf16.msra.mxu0 0
    %155 = vmatprep.subr.bf16.mxu0 0
    %156 = vmatpush1.bf16.msra.mxu0 0
    %157 = vmatprep.subr.bf16.mxu0 0
    %158 = vmatpush1.bf16.msra.mxu0 0
    %159 = vmatprep.subr.bf16.mxu0 0
    %160 = vmatpush1.bf16.msra.mxu0 0
    %161 = vmatprep.mubr.bf16.mxu0 0
    %162 = vmatmul.mubr.bf16.gmra.mrb[0].mxu0 %v127
    %v163 = vpop.f32.mrb[0].mxu0
    %v164 = vadd.f32 0.0, %v163
    %v165 = vpop.f32.mrb[0].mxu0
    %v166 = vpop.f32.mrb[0].mxu0
    %v167 = vpop.f32.mrb[0].mxu0
    %168 = vdwg.mxu0
    %v169 = vpack.c.bf16 %v164, %v164
    %vm170 = vcmask 781312
    %171 = vst.msk [vmem:[#allocation11] sm:$0xf] %vm170, %v169
    // Predicated region
    $region38: #{basic_transformer_block.21} parent=1 // pred_check
      _
    $region39: #{basic_transformer_block.21} parent=1 // pred_check_branch
      %173 = sbr.rel (0) target = $region41
    $region40: #{basic_transformer_block.21} parent=1 // pred_region
      %s175 = ssub.s32 64, 64
      %176 = vsyncadd [#allocation5], %s175
      %s178 = sshll.u32 [#allocation11], 4
      %s179 = int_to_ptr.vmem [resolvable:$true] %s178
      %181 = dma.vmem_to_hbm [thread:$0]  %s179, 64, %s4, [#allocation5]
    $region41: #{basic_transformer_block.21} parent=1 // pred_fallthru
      _
    // Predicated region
    $region42: #{basic_transformer_block.21} parent=1 // pred_check
      _
    $region43: #{basic_transformer_block.21} parent=1 // pred_check_branch
      %183 = sbr.rel (0) target = $region45
    $region44: #{basic_transformer_block.21} parent=1 // pred_region
      %184 = dma.done [#allocation5], 64
    $region45: #{basic_transformer_block.21} parent=1 // pred_fallthru
      _
    %185 = vsyncpa [#allocation4], 1
    %186 = vsyncpa [#allocation7], 1
    %187 = vsyncpa [#allocation10], 1
    %188 = vsyncpa [#allocation5], 1

// kernel: basic_transformer_block.25
$region0: #{basic_transformer_block.25}
  #allocation0 [shape = 'u32[]', space=smem, size = 0x4, offset = 0x4, fixed_abs, tag = 'smem constant byte address 0x4 - core index']
  #allocation1 [shape = 'u32[144,128]{1,0:T(1,128)}', space=vmem, size = 0x12000, scoped, tag = 'internal scratch']
  #allocation2 [shape = 'f32[1]{0:T(128)S(6)}', space=smem, size = 0x200, scoped, tag = 'scoped memory for basic_transformer_block.25']
  %s0 = inlined_call_operand.<no memory space> [shape: f32[1], index: 0, kind: input, shape index: {}]
  %s1 = inlined_call_operand.hbm [shape: bf16[32,128], index: 1, kind: input, shape index: {}]
  %s2 = inlined_call_operand.hbm [shape: bf16[128,32], index: 2, kind: input, shape index: {}]
  %s3 = inlined_call_operand.hbm [shape: f32[1,32], index: 3, kind: input, shape index: {}]
  %s4 = inlined_call_operand.hbm [shape: bf16[32,32], index: 4, kind: input, shape index: {}]
  %s5 = inlined_call_operand.hbm [shape: bf16[32,32], index: 5, kind: output, shape index: {}]
  %s6 = sld [smem:[#allocation0]]
  $region46: #{basic_transformer_block.25} parent=0
    _
  %s8 = ssub.s32 1, %s6
  %s9 = scalar_select 0, %s8, %s6
  %10 = sst [smem:[#allocation2]] %s0
  $region1: #{basic_transformer_block.25} parent=0
    #allocation3 [shape = 'u8[8192]{0}', space=vmem, size = 0x2000, scoped, tag = 'input window, operand 1, single buffered']
    #allocation4 [shape = 's32[1]{0}', space=sflag, size = 0x4, scoped, tag = 'scoped memory for basic_transformer_block.25']
    #allocation5 [shape = 's32[1]{0}', space=sflag, size = 0x4, scoped, tag = 'scoped memory for basic_transformer_block.25']
    #allocation6 [shape = 'u8[32768]{0}', space=vmem, size = 0x8000, scoped, tag = 'input window, operand 2, single buffered']
    #allocation7 [shape = 's32[1]{0}', space=sflag, size = 0x4, scoped, tag = 'scoped memory for basic_transformer_block.25']
    #allocation8 [shape = 'u8[512]{0}', space=vmem, size = 0x400, scoped, tag = 'input window, operand 3, single buffered']
    #allocation9 [shape = 'u8[8192]{0}', space=vmem, size = 0x2000, scoped, tag = 'input window, operand 4, single buffered']
    #allocation10 [shape = 's32[1]{0}', space=sflag, size = 0x4, scoped, tag = 'scoped memory for basic_transformer_block.25']
    #allocation11 [shape = 'u8[8192]{0}', space=vmem, size = 0x2000, scoped, tag = 'output window, operand 0, single buffered']
    %11 = vsyncpa [#allocation4], 0
    %12 = vsyncpa [#allocation7], 0
    %13 = vsyncpa [#allocation10], 0
    %14 = vsyncpa [#allocation5], 0
    // Predicated region
    $region2: #{basic_transformer_block.25} parent=1 // pred_check
      _
    $region3: #{basic_transformer_block.25} parent=1 // pred_check_branch
      %16 = sbr.rel (0) target = $region5
    $region4: #{basic_transformer_block.25} parent=1 // pred_region
      _
    $region5: #{basic_transformer_block.25} parent=1 // pred_fallthru
      _
    // Predicated region
    $region6: #{basic_transformer_block.25} parent=1 // pred_check
      _
    $region7: #{basic_transformer_block.25} parent=1 // pred_check_branch
      %18 = sbr.rel (0) target = $region9
    $region8: #{basic_transformer_block.25} parent=1 // pred_region
      %s20 = ssub.s32 256, 256
      %21 = vsyncadd [#allocation4], %s20
      %s22 = sshll.u32 [#allocation3], 4
      %s23 = int_to_ptr.vmem [resolvable:$true] %s22
      %28 = dma.hbm_to_vmem [thread:$0]  %s1, 256, %s23, [#allocation4], 64, 64, 4
    $region9: #{basic_transformer_block.25} parent=1 // pred_fallthru
      _
    // Predicated region
    $region10: #{basic_transformer_block.25} parent=1 // pred_check
      _
    $region11: #{basic_transformer_block.25} parent=1 // pred_check_branch
      %30 = sbr.rel (0) target = $region13
    $region12: #{basic_transformer_block.25} parent=1 // pred_region
      %s32 = ssub.s32 1024, 1024
      %33 = vsyncadd [#allocation7], %s32
      %s34 = sshll.u32 [#allocation6], 4
      %s35 = int_to_ptr.vmem [resolvable:$true] %s34
      %40 = dma.hbm_to_vmem [thread:$0]  %s2, 1024, %s35, [#allocation7], 64, 64, 4
    $region13: #{basic_transformer_block.25} parent=1 // pred_fallthru
      _
    // Predicated region
    $region14: #{basic_transformer_block.25} parent=1 // pred_check
      _
    $region15: #{basic_transformer_block.25} parent=1 // pred_check_branch
      %42 = sbr.rel (0) target = $region17
    $region16: #{basic_transformer_block.25} parent=1 // pred_region
      %s44 = ssub.s32 16, 16
      %45 = vsyncadd [#allocation7], %s44
      %s47 = sshll.u32 [#allocation8], 4
      %s48 = int_to_ptr.vmem [resolvable:$true] %s47
      %50 = dma.hbm_to_vmem [thread:$0]  %s3, 16, %s48, [#allocation7]
    $region17: #{basic_transformer_block.25} parent=1 // pred_fallthru
      _
    // Predicated region
    $region18: #{basic_transformer_block.25} parent=1 // pred_check
      _
    $region19: #{basic_transformer_block.25} parent=1 // pred_check_branch
      %52 = sbr.rel (0) target = $region21
    $region20: #{basic_transformer_block.25} parent=1 // pred_region
      %s54 = ssub.s32 256, 256
      %55 = vsyncadd [#allocation10], %s54
      %s56 = sshll.u32 [#allocation9], 4
      %s57 = int_to_ptr.vmem [resolvable:$true] %s56
      %62 = dma.hbm_to_vmem [thread:$0]  %s4, 256, %s57, [#allocation10], 64, 64, 4
    $region21: #{basic_transformer_block.25} parent=1 // pred_fallthru
      _
    // Predicated region
    $region22: #{basic_transformer_block.25} parent=1 // pred_check
      _
    $region23: #{basic_transformer_block.25} parent=1 // pred_check_branch
      %64 = sbr.rel (0) target = $region25
    $region24: #{basic_transformer_block.25} parent=1 // pred_region
      %65 = dma.done [#allocation4], 256
    $region25: #{basic_transformer_block.25} parent=1 // pred_fallthru
      _
    // Predicated region
    $region26: #{basic_transformer_block.25} parent=1 // pred_check
      _
    $region27: #{basic_transformer_block.25} parent=1 // pred_check_branch
      %67 = sbr.rel (0) target = $region29
    $region28: #{basic_transformer_block.25} parent=1 // pred_region
      %68 = dma.done [#allocation7], 1024
    $region29: #{basic_transformer_block.25} parent=1 // pred_fallthru
      _
    // Predicated region
    $region30: #{basic_transformer_block.25} parent=1 // pred_check
      _
    $region31: #{basic_transformer_block.25} parent=1 // pred_check_branch
      %70 = sbr.rel (0) target = $region33
    $region32: #{basic_transformer_block.25} parent=1 // pred_region
      %71 = dma.done [#allocation7], 16
    $region33: #{basic_transformer_block.25} parent=1 // pred_fallthru
      _
    // Predicated region
    $region34: #{basic_transformer_block.25} parent=1 // pred_check
      _
    $region35: #{basic_transformer_block.25} parent=1 // pred_check_branch
      %73 = sbr.rel (0) target = $region37
    $region36: #{basic_transformer_block.25} parent=1 // pred_region
      %74 = dma.done [#allocation10], 256
    $region37: #{basic_transformer_block.25} parent=1 // pred_fallthru
      _
    %v76 = vld [vmem:[#allocation3] sm:$0xf]
    %v77 = vld [vmem:[#allocation3 + $0x4] sm:$0xf]
    %v78 = vld [vmem:[#allocation3 + $0x8] sm:$0xf]
    %v79 = vld [vmem:[#allocation3 + $0xc] sm:$0xf]
    %v80 = vld [vmem:[#allocation6] sm:$0xf]
    %v81 = vld [vmem:[#allocation6 + $0x4] sm:$0xf]
    %v82 = vld [vmem:[#allocation6 + $0x8] sm:$0xf]
    %v83 = vld [vmem:[#allocation6 + $0xc] sm:$0xf]
    %v84 = vld [vmem:[#allocation6 + $0x10] sm:$0xf]
    %v85 = vld [vmem:[#allocation6 + $0x14] sm:$0xf]
    %v86 = vld [vmem:[#allocation6 + $0x18] sm:$0xf]
    %v87 = vld [vmem:[#allocation6 + $0x1c] sm:$0xf]
    %v88 = vld [vmem:[#allocation6 + $0x20] sm:$0xf]
    %v89 = vld [vmem:[#allocation6 + $0x24] sm:$0xf]
    %v90 = vld [vmem:[#allocation6 + $0x28] sm:$0xf]
    %v91 = vld [vmem:[#allocation6 + $0x2c] sm:$0xf]
    %v92 = vld [vmem:[#allocation6 + $0x30] sm:$0xf]
    %v93 = vld [vmem:[#allocation6 + $0x34] sm:$0xf]
    %v94 = vld [vmem:[#allocation6 + $0x38] sm:$0xf]
    %v95 = vld [vmem:[#allocation6 + $0x3c] sm:$0xf]
    %v96 = vld [vmem:[#allocation8] sm:$0x1]
    %v98 = vlaneseq
    %v99 = vshrl.u32 %v98, 7
    %v100 = vsub.s32 0, %v99
    %v101 = vrot.slane %v96, %v100
    %v107 = vunpack.c.l.b16 %v76
    %v108 = vunpack.c.l.b16 %v77
    %v109 = vunpack.c.l.b16 %v78
    %v110 = vunpack.c.l.b16 %v79
    %v111 = vpack.c.b16 %v108, %v107
    %v112 = vpack.c.b16 %v110, %v109
    %v131 = vunpack.c.l.b16 %v80
    %v132 = vunpack.c.l.b16 %v81
    %v133 = vunpack.c.l.b16 %v82
    %v134 = vunpack.c.l.b16 %v83
    %v135 = vunpack.c.l.b16 %v84
    %v136 = vunpack.c.l.b16 %v85
    %v137 = vunpack.c.l.b16 %v86
    %v138 = vunpack.c.l.b16 %v87
    %v139 = vunpack.c.l.b16 %v88
    %v140 = vunpack.c.l.b16 %v89
    %v141 = vunpack.c.l.b16 %v90
    %v142 = vunpack.c.l.b16 %v91
    %v143 = vunpack.c.l.b16 %v92
    %v144 = vunpack.c.l.b16 %v93
    %v145 = vunpack.c.l.b16 %v94
    %v146 = vunpack.c.l.b16 %v95
    %v147 = vpack.c.b16 %v132, %v131
    %v148 = vpack.c.b16 %v134, %v133
    %v149 = vpack.c.b16 %v136, %v135
    %v150 = vpack.c.b16 %v138, %v137
    %v151 = vpack.c.b16 %v140, %v139
    %v152 = vpack.c.b16 %v142, %v141
    %v153 = vpack.c.b16 %v144, %v143
    %v154 = vpack.c.b16 %v146, %v145
    %163 = vmatprep.subr.bf16.mxu0 0
    %164 = vmatpush1.bf16.msra.mxu0 %v147
    %165 = vmatprep.subr.bf16.mxu0 0
    %166 = vmatpush1.bf16.msra.mxu0 %v148
    %167 = vmatprep.subr.bf16.mxu0 0
    %168 = vmatpush1.bf16.msra.mxu0 %v149
    %169 = vmatprep.subr.bf16.mxu0 0
    %170 = vmatpush1.bf16.msra.mxu0 %v150
    %171 = vmatprep.subr.bf16.mxu0 0
    %172 = vmatpush1.bf16.msra.mxu0 %v151
    %173 = vmatprep.subr.bf16.mxu0 0
    %174 = vmatpush1.bf16.msra.mxu0 %v152
    %175 = vmatprep.subr.bf16.mxu0 0
    %176 = vmatpush1.bf16.msra.mxu0 %v153
    %177 = vmatprep.subr.bf16.mxu0 0
    %178 = vmatpush1.bf16.msra.mxu0 %v154
    %179 = vmatprep.subr.bf16.mxu0 0
    %180 = vmatpush1.bf16.msra.mxu0 0
    %181 = vmatprep.subr.bf16.mxu0 0
    %182 = vmatpush1.bf16.msra.mxu0 0
    %183 = vmatprep.subr.bf16.mxu0 0
    %184 = vmatpush1.bf16.msra.mxu0 0
    %185 = vmatprep.subr.bf16.mxu0 0
    %186 = vmatpush1.bf16.msra.mxu0 0
    %187 = vmatprep.subr.bf16.mxu0 0
    %188 = vmatpush1.bf16.msra.mxu0 0
    %189 = vmatprep.subr.bf16.mxu0 0
    %190 = vmatpush1.bf16.msra.mxu0 0
    %191 = vmatprep.subr.bf16.mxu0 0
    %192 = vmatpush1.bf16.msra.mxu0 0
    %193 = vmatprep.subr.bf16.mxu0 0
    %194 = vmatpush1.bf16.msra.mxu0 0
    %195 = vmatprep.mubr.bf16.mxu0 0
    %196 = vmatmul.mubr.bf16.gmra.mrb[0].mxu0 %v111
    %v197 = vpop.f32.mrb[0].mxu0
    %v198 = vadd.f32 %v101, %v197
    %v199 = vpop.f32.mrb[0].mxu0
    %v200 = vpop.f32.mrb[0].mxu0
    %v201 = vadd.f32 %v101, %v200
    %v202 = vpop.f32.mrb[0].mxu0
    %203 = vmatprep.mubr.bf16.mxu0 0
    %204 = vmatmul.mubr.bf16.gmra.mrb[0].mxu0 %v112
    %v205 = vpop.f32.mrb[0].mxu0
    %v206 = vadd.f32 %v101, %v205
    %v207 = vpop.f32.mrb[0].mxu0
    %v208 = vpop.f32.mrb[0].mxu0
    %v209 = vadd.f32 %v101, %v208
    %v210 = vpop.f32.mrb[0].mxu0
    %211 = vdwg.mxu0
    %v212 = vld [vmem:[#allocation9] sm:$0xf]
    %v213 = vld [vmem:[#allocation9 + $0x4] sm:$0xf]
    %v214 = vld [vmem:[#allocation9 + $0x8] sm:$0xf]
    %v215 = vld [vmem:[#allocation9 + $0xc] sm:$0xf]
    %v216 = vunpack.c.l.bf16 %v212
    %v217 = vunpack.c.l.bf16 %v213
    %v218 = vunpack.c.l.bf16 %v214
    %v219 = vunpack.c.l.bf16 %v215
    %s220 = sld [smem:[#allocation2]]
    %v221 = vstv %s220
    %v222 = vmul.f32 %v221, %v198
    %v223 = vmul.f32 %v221, %v201
    %v224 = vmul.f32 %v221, %v206
    %v225 = vmul.f32 %v221, %v209
    %v226 = vadd.f32 %v216, %v222
    %v227 = vadd.f32 %v217, %v223
    %v228 = vadd.f32 %v218, %v224
    %v229 = vadd.f32 %v219, %v225
    %v230 = vpack.c.bf16 %v227, %v226
    %v231 = vpack.c.bf16 %v229, %v228
    %v234 = vunpack.c.l.b16 %v230
    %v235 = vunpack.c.h.b16 %v230
    %v236 = vunpack.c.l.b16 %v231
    %v237 = vunpack.c.h.b16 %v231
    %v238 = vpack.c.b16 %v234, %v234
    %v239 = vpack.c.b16 %v235, %v235
    %v240 = vpack.c.b16 %v236, %v236
    %v241 = vpack.c.b16 %v237, %v237
    %vm246 = vcmask 257024
    %247 = vst.msk [vmem:[#allocation11] sm:$0xf] %vm246, %v238
    %248 = vst.msk [vmem:[#allocation11 + $0x4] sm:$0xf] %vm246, %v239
    %249 = vst.msk [vmem:[#allocation11 + $0x8] sm:$0xf] %vm246, %v240
    %250 = vst.msk [vmem:[#allocation11 + $0xc] sm:$0xf] %vm246, %v241
    // Predicated region
    $region38: #{basic_transformer_block.25} parent=1 // pred_check
      _
    $region39: #{basic_transformer_block.25} parent=1 // pred_check_branch
      %252 = sbr.rel (0) target = $region41
    $region40: #{basic_transformer_block.25} parent=1 // pred_region
      %s254 = ssub.s32 256, 256
      %255 = vsyncadd [#allocation5], %s254
      %s256 = sshll.u32 [#allocation11], 4
      %s257 = int_to_ptr.vmem [resolvable:$true] %s256
      %262 = dma.vmem_to_hbm [thread:$0]  %s257, 256, %s5, [#allocation5], 64, 64, 4
    $region41: #{basic_transformer_block.25} parent=1 // pred_fallthru
      _
    // Predicated region
    $region42: #{basic_transformer_block.25} parent=1 // pred_check
      _
    $region43: #{basic_transformer_block.25} parent=1 // pred_check_branch
      %264 = sbr.rel (0) target = $region45
    $region44: #{basic_transformer_block.25} parent=1 // pred_region
      %265 = dma.done [#allocation5], 256
    $region45: #{basic_transformer_block.25} parent=1 // pred_fallthru
      _
    %266 = vsyncpa [#allocation4], 1
    %267 = vsyncpa [#allocation7], 1
    %268 = vsyncpa [#allocation10], 1
    %269 = vsyncpa [#allocation5], 1

// kernel: basic_transformer_block.24
$region0: #{basic_transformer_block.24}
  #allocation0 [shape = 'u32[]', space=smem, size = 0x4, offset = 0x4, fixed_abs, tag = 'smem constant byte address 0x4 - core index']
  #allocation1 [shape = 'u32[144,128]{1,0:T(1,128)}', space=vmem, size = 0x12000, scoped, tag = 'internal scratch']
  #allocation2 [shape = 'bf16[32,32]{1,0:T(16,128)(2,1)}', space=vmem, size = 0x2000, scoped, tag = 'scratch operand']
  %s0 = inlined_call_operand.hbm [shape: bf16[32,32], index: 0, kind: input, shape index: {}]
  %s1 = inlined_call_operand.hbm [shape: f32[1,32], index: 1, kind: input, shape index: {}]
  %s2 = inlined_call_operand.hbm [shape: f32[1,32], index: 2, kind: input, shape index: {}]
  %s3 = inlined_call_operand.hbm [shape: bf16[32,128], index: 3, kind: input, shape index: {}]
  %s4 = inlined_call_operand.hbm [shape: f32[1,128], index: 4, kind: input, shape index: {}]
  %s5 = inlined_call_operand.hbm [shape: bf16[32,128], index: 5, kind: input, shape index: {}]
  %s6 = inlined_call_operand.hbm [shape: f32[1,128], index: 6, kind: input, shape index: {}]
  %s7 = inlined_call_operand.hbm [shape: bf16[32,128], index: 7, kind: output, shape index: {}]
  %s8 = sld [smem:[#allocation0]]
  $region70: #{basic_transformer_block.24} parent=0
    _
  %s10 = ssub.s32 1, %s8
  %s11 = scalar_select 0, %s10, %s8
  $region1: #{basic_transformer_block.24} parent=0
    #allocation3 [shape = 'u8[8192]{0}', space=vmem, size = 0x2000, scoped, tag = 'input window, operand 0, single buffered']
    #allocation4 [shape = 's32[1]{0}', space=sflag, size = 0x4, scoped, tag = 'scoped memory for basic_transformer_block.24']
    #allocation5 [shape = 's32[1]{0}', space=sflag, size = 0x4, scoped, tag = 'scoped memory for basic_transformer_block.24']
    #allocation6 [shape = 'u8[512]{0}', space=vmem, size = 0x400, scoped, tag = 'input window, operand 1, single buffered']
    #allocation7 [shape = 's32[1]{0}', space=sflag, size = 0x4, scoped, tag = 'scoped memory for basic_transformer_block.24']
    #allocation8 [shape = 'u8[512]{0}', space=vmem, size = 0x400, scoped, tag = 'input window, operand 2, single buffered']
    #allocation9 [shape = 'u8[8192]{0}', space=vmem, size = 0x2000, scoped, tag = 'input window, operand 3, single buffered']
    #allocation10 [shape = 's32[1]{0}', space=sflag, size = 0x4, scoped, tag = 'scoped memory for basic_transformer_block.24']
    #allocation11 [shape = 'u8[512]{0}', space=vmem, size = 0x400, scoped, tag = 'input window, operand 4, single buffered']
    #allocation12 [shape = 'u8[8192]{0}', space=vmem, size = 0x2000, scoped, tag = 'input window, operand 5, single buffered']
    #allocation13 [shape = 's32[1]{0}', space=sflag, size = 0x4, scoped, tag = 'scoped memory for basic_transformer_block.24']
    #allocation14 [shape = 'u8[512]{0}', space=vmem, size = 0x400, scoped, tag = 'input window, operand 6, single buffered']
    #allocation15 [shape = 'u8[8192]{0}', space=vmem, size = 0x2000, scoped, tag = 'output window, operand 0, single buffered']
    %12 = vsyncpa [#allocation4], 0
    %13 = vsyncpa [#allocation7], 0
    %14 = vsyncpa [#allocation10], 0
    %15 = vsyncpa [#allocation13], 0
    %16 = vsyncpa [#allocation5], 0
    // Predicated region
    $region2: #{basic_transformer_block.24} parent=1 // pred_check
      _
    $region3: #{basic_transformer_block.24} parent=1 // pred_check_branch
      %18 = sbr.rel (0) target = $region5
    $region4: #{basic_transformer_block.24} parent=1 // pred_region
      %s20 = ssub.s32 256, 256
      %21 = vsyncadd [#allocation4], %s20
      %s22 = sshll.u32 [#allocation3], 4
      %s23 = int_to_ptr.vmem [resolvable:$true] %s22
      %28 = dma.hbm_to_vmem [thread:$0]  %s0, 256, %s23, [#allocation4], 64, 64, 4
    $region5: #{basic_transformer_block.24} parent=1 // pred_fallthru
      _
    // Predicated region
    $region6: #{basic_transformer_block.24} parent=1 // pred_check
      _
    $region7: #{basic_transformer_block.24} parent=1 // pred_check_branch
      %30 = sbr.rel (0) target = $region9
    $region8: #{basic_transformer_block.24} parent=1 // pred_region
      %s32 = ssub.s32 16, 16
      %33 = vsyncadd [#allocation7], %s32
      %s35 = sshll.u32 [#allocation6], 4
      %s36 = int_to_ptr.vmem [resolvable:$true] %s35
      %38 = dma.hbm_to_vmem [thread:$0]  %s1, 16, %s36, [#allocation7]
    $region9: #{basic_transformer_block.24} parent=1 // pred_fallthru
      _
    // Predicated region
    $region10: #{basic_transformer_block.24} parent=1 // pred_check
      _
    $region11: #{basic_transformer_block.24} parent=1 // pred_check_branch
      %40 = sbr.rel (0) target = $region13
    $region12: #{basic_transformer_block.24} parent=1 // pred_region
      %s42 = ssub.s32 16, 16
      %43 = vsyncadd [#allocation7], %s42
      %s45 = sshll.u32 [#allocation8], 4
      %s46 = int_to_ptr.vmem [resolvable:$true] %s45
      %48 = dma.hbm_to_vmem [thread:$0]  %s2, 16, %s46, [#allocation7]
    $region13: #{basic_transformer_block.24} parent=1 // pred_fallthru
      _
    // Predicated region
    $region14: #{basic_transformer_block.24} parent=1 // pred_check
      _
    $region15: #{basic_transformer_block.24} parent=1 // pred_check_branch
      %50 = sbr.rel (0) target = $region17
    $region16: #{basic_transformer_block.24} parent=1 // pred_region
      %s52 = ssub.s32 256, 256
      %53 = vsyncadd [#allocation10], %s52
      %s54 = sshll.u32 [#allocation9], 4
      %s55 = int_to_ptr.vmem [resolvable:$true] %s54
      %60 = dma.hbm_to_vmem [thread:$0]  %s3, 256, %s55, [#allocation10], 64, 64, 4
    $region17: #{basic_transformer_block.24} parent=1 // pred_fallthru
      _
    // Predicated region
    $region18: #{basic_transformer_block.24} parent=1 // pred_check
      _
    $region19: #{basic_transformer_block.24} parent=1 // pred_check_branch
      %62 = sbr.rel (0) target = $region21
    $region20: #{basic_transformer_block.24} parent=1 // pred_region
      %s64 = ssub.s32 16, 16
      %65 = vsyncadd [#allocation10], %s64
      %s67 = sshll.u32 [#allocation11], 4
      %s68 = int_to_ptr.vmem [resolvable:$true] %s67
      %70 = dma.hbm_to_vmem [thread:$0]  %s4, 16, %s68, [#allocation10]
    $region21: #{basic_transformer_block.24} parent=1 // pred_fallthru
      _
    // Predicated region
    $region22: #{basic_transformer_block.24} parent=1 // pred_check
      _
    $region23: #{basic_transformer_block.24} parent=1 // pred_check_branch
      %72 = sbr.rel (0) target = $region25
    $region24: #{basic_transformer_block.24} parent=1 // pred_region
      %s74 = ssub.s32 256, 256
      %75 = vsyncadd [#allocation13], %s74
      %s76 = sshll.u32 [#allocation12], 4
      %s77 = int_to_ptr.vmem [resolvable:$true] %s76
      %82 = dma.hbm_to_vmem [thread:$0]  %s5, 256, %s77, [#allocation13], 64, 64, 4
    $region25: #{basic_transformer_block.24} parent=1 // pred_fallthru
      _
    // Predicated region
    $region26: #{basic_transformer_block.24} parent=1 // pred_check
      _
    $region27: #{basic_transformer_block.24} parent=1 // pred_check_branch
      %84 = sbr.rel (0) target = $region29
    $region28: #{basic_transformer_block.24} parent=1 // pred_region
      %s86 = ssub.s32 16, 16
      %87 = vsyncadd [#allocation13], %s86
      %s89 = sshll.u32 [#allocation14], 4
      %s90 = int_to_ptr.vmem [resolvable:$true] %s89
      %92 = dma.hbm_to_vmem [thread:$0]  %s6, 16, %s90, [#allocation13]
    $region29: #{basic_transformer_block.24} parent=1 // pred_fallthru
      _
    // Predicated region
    $region30: #{basic_transformer_block.24} parent=1 // pred_check
      _
    $region31: #{basic_transformer_block.24} parent=1 // pred_check_branch
      %94 = sbr.rel (0) target = $region33
    $region32: #{basic_transformer_block.24} parent=1 // pred_region
      %95 = dma.done [#allocation4], 256
    $region33: #{basic_transformer_block.24} parent=1 // pred_fallthru
      _
    // Predicated region
    $region34: #{basic_transformer_block.24} parent=1 // pred_check
      _
    $region35: #{basic_transformer_block.24} parent=1 // pred_check_branch
      %97 = sbr.rel (0) target = $region37
    $region36: #{basic_transformer_block.24} parent=1 // pred_region
      %98 = dma.done [#allocation7], 16
    $region37: #{basic_transformer_block.24} parent=1 // pred_fallthru
      _
    // Predicated region
    $region38: #{basic_transformer_block.24} parent=1 // pred_check
      _
    $region39: #{basic_transformer_block.24} parent=1 // pred_check_branch
      %100 = sbr.rel (0) target = $region41
    $region40: #{basic_transformer_block.24} parent=1 // pred_region
      %101 = dma.done [#allocation7], 16
    $region41: #{basic_transformer_block.24} parent=1 // pred_fallthru
      _
    // Predicated region
    $region42: #{basic_transformer_block.24} parent=1 // pred_check
      _
    $region43: #{basic_transformer_block.24} parent=1 // pred_check_branch
      %103 = sbr.rel (0) target = $region45
    $region44: #{basic_transformer_block.24} parent=1 // pred_region
      %104 = dma.done [#allocation10], 256
    $region45: #{basic_transformer_block.24} parent=1 // pred_fallthru
      _
    // Predicated region
    $region46: #{basic_transformer_block.24} parent=1 // pred_check
      _
    $region47: #{basic_transformer_block.24} parent=1 // pred_check_branch
      %106 = sbr.rel (0) target = $region49
    $region48: #{basic_transformer_block.24} parent=1 // pred_region
      %107 = dma.done [#allocation10], 16
    $region49: #{basic_transformer_block.24} parent=1 // pred_fallthru
      _
    // Predicated region
    $region50: #{basic_transformer_block.24} parent=1 // pred_check
      _
    $region51: #{basic_transformer_block.24} parent=1 // pred_check_branch
      %109 = sbr.rel (0) target = $region53
    $region52: #{basic_transformer_block.24} parent=1 // pred_region
      %110 = dma.done [#allocation13], 256
    $region53: #{basic_transformer_block.24} parent=1 // pred_fallthru
      _
    // Predicated region
    $region54: #{basic_transformer_block.24} parent=1 // pred_check
      _
    $region55: #{basic_transformer_block.24} parent=1 // pred_check_branch
      %112 = sbr.rel (0) target = $region57
    $region56: #{basic_transformer_block.24} parent=1 // pred_region
      %113 = dma.done [#allocation13], 16
    $region57: #{basic_transformer_block.24} parent=1 // pred_fallthru
      _
    %p115 = scmp.eq.s32.totalorder 0, 0
    // Predicated region
    $region58: #{basic_transformer_block.24} parent=1 // pred_check
      %p116 = pneg %p115
    $region59: #{basic_transformer_block.24} parent=1 // pred_check_branch
      %118 = sbr.rel (%p116) target = $region61
    $region60: #{basic_transformer_block.24} parent=1 // pred_region
      %v119 = vld [vmem:[#allocation3] sm:$0xf]
      %v120 = vld [vmem:[#allocation3 + $0x4] sm:$0xf]
      %v121 = vld [vmem:[#allocation3 + $0x8] sm:$0xf]
      %v122 = vld [vmem:[#allocation3 + $0xc] sm:$0xf]
      %v123 = vunpack.c.l.bf16 %v119
      %v124 = vunpack.c.l.bf16 %v120
      %v125 = vunpack.c.l.bf16 %v121
      %v126 = vunpack.c.l.bf16 %v122
      %vm127 = vcmask 261120
      %v128 = vsel %vm127, %v123, 0.0
      %129 = vadd.xlane.f32.xlu0 %v128
      %v130 = vpop.xlane.xlu0 %129
      %v131 = vsel %vm127, %v124, 0.0
      %132 = vadd.xlane.f32.xlu0 %v131
      %v133 = vpop.xlane.xlu0 %132
      %v134 = vsel %vm127, %v125, 0.0
      %135 = vadd.xlane.f32.xlu0 %v134
      %v136 = vpop.xlane.xlu0 %135
      %v137 = vsel %vm127, %v126, 0.0
      %138 = vadd.xlane.f32.xlu0 %v137
      %v139 = vpop.xlane.xlu0 %138
      %v140 = vrcp.pop 32.0
      %v141 = vmul.f32 %v130, %v140
      %v142 = vmul.f32 %v133, %v140
      %v143 = vmul.f32 %v136, %v140
      %v144 = vmul.f32 %v139, %v140
      %v145 = vsub.f32 %v123, %v141
      %v146 = vsub.f32 %v124, %v142
      %v147 = vsub.f32 %v125, %v143
      %v148 = vsub.f32 %v126, %v144
      %v149 = vmul.f32 %v145, %v145
      %v150 = vmul.f32 %v146, %v146
      %v151 = vmul.f32 %v147, %v147
      %v152 = vmul.f32 %v148, %v148
      %v153 = vsel %vm127, %v149, 0.0
      %154 = vadd.xlane.f32.xlu0 %v153
      %v155 = vpop.xlane.xlu0 %154
      %v156 = vsel %vm127, %v150, 0.0
      %157 = vadd.xlane.f32.xlu0 %v156
      %v158 = vpop.xlane.xlu0 %157
      %v159 = vsel %vm127, %v151, 0.0
      %160 = vadd.xlane.f32.xlu0 %v159
      %v161 = vpop.xlane.xlu0 %160
      %v162 = vsel %vm127, %v152, 0.0
      %163 = vadd.xlane.f32.xlu0 %v162
      %v164 = vpop.xlane.xlu0 %163
      %v165 = vmul.f32 %v155, %v140
      %v166 = vmul.f32 %v158, %v140
      %v167 = vmul.f32 %v161, %v140
      %v168 = vmul.f32 %v164, %v140
      %v169 = vadd.f32 %v165, 1e-05
      %v170 = vadd.f32 %v166, 1e-05
      %v171 = vadd.f32 %v167, 1e-05
      %v172 = vadd.f32 %v168, 1e-05
      %v173 = vrsqrt.pop %v169
      %v174 = vrsqrt.pop %v170
      %v175 = vrsqrt.pop %v171
      %v176 = vrsqrt.pop %v172
      %v177 = vmul.f32 %v145, %v173
      %v178 = vmul.f32 %v146, %v174
      %v179 = vmul.f32 %v147, %v175
      %v180 = vmul.f32 %v148, %v176
      %v181 = vld [vmem:[#allocation6] sm:$0x1]
      %v183 = vlaneseq
      %v184 = vshrl.u32 %v183, 7
      %v185 = vsub.s32 0, %v184
      %v186 = vrot.slane %v181, %v185
      %v188 = vmul.f32 %v177, %v186
      %v189 = vmul.f32 %v178, %v186
      %v190 = vmul.f32 %v179, %v186
      %v191 = vmul.f32 %v180, %v186
      %v192 = vld [vmem:[#allocation8] sm:$0x1]
      %v194 = vlaneseq
      %v195 = vshrl.u32 %v194, 7
      %v196 = vsub.s32 0, %v195
      %v197 = vrot.slane %v192, %v196
      %v199 = vadd.f32 %v188, %v197
      %v200 = vadd.f32 %v189, %v197
      %v201 = vadd.f32 %v190, %v197
      %v202 = vadd.f32 %v191, %v197
      %v203 = vpack.c.bf16 %v200, %v199
      %v204 = vpack.c.bf16 %v202, %v201
      %205 = vst.msk [vmem:[#allocation2] sm:$0xff] %vm127, %v203
      %206 = vst.msk [vmem:[#allocation2 + $0x8] sm:$0xff] %vm127, %v204
    $region61: #{basic_transformer_block.24} parent=1 // pred_fallthru
      _
    %v207 = vld [vmem:[#allocation2] sm:$0xff]
    %v208 = vld [vmem:[#allocation2 + $0x8] sm:$0xff]
    %v209 = vld [vmem:[#allocation9] sm:$0xf]
    %v210 = vld [vmem:[#allocation9 + $0x4] sm:$0xf]
    %v211 = vld [vmem:[#allocation9 + $0x8] sm:$0xf]
    %v212 = vld [vmem:[#allocation9 + $0xc] sm:$0xf]
    %v213 = vld [vmem:[#allocation11] sm:$0x1]
    %v215 = vlaneseq
    %v216 = vshrl.u32 %v215, 7
    %v217 = vsub.s32 0, %v216
    %v218 = vrot.slane %v213, %v217
    %v224 = vunpack.c.l.b16 %v209
    %v225 = vunpack.c.l.b16 %v210
    %v226 = vunpack.c.l.b16 %v211
    %v227 = vunpack.c.l.b16 %v212
    %v228 = vpack.c.b16 %v225, %v224
    %v229 = vpack.c.b16 %v227, %v226
    %vm232 = vcmask 261120
    %v234 = vsel %vm232, %v207, 0
    %v237 = vsel %vm232, %v208, 0
    %239 = vmatprep.subr.bf16.mxu0 0
    %240 = vmatpush1.bf16.msra.mxu0 %v228
    %241 = vmatprep.subr.bf16.mxu0 0
    %242 = vmatpush1.bf16.msra.mxu0 %v229
    %243 = vmatprep.subr.bf16.mxu0 0
    %244 = vmatpush1.bf16.msra.mxu0 0
    %245 = vmatprep.subr.bf16.mxu0 0
    %246 = vmatpush1.bf16.msra.mxu0 0
    %247 = vmatprep.subr.bf16.mxu0 0
    %248 = vmatpush1.bf16.msra.mxu0 0
    %249 = vmatprep.subr.bf16.mxu0 0
    %250 = vmatpush1.bf16.msra.mxu0 0
    %251 = vmatprep.subr.bf16.mxu0 0
    %252 = vmatpush1.bf16.msra.mxu0 0
    %253 = vmatprep.subr.bf16.mxu0 0
    %254 = vmatpush1.bf16.msra.mxu0 0
    %255 = vmatprep.subr.bf16.mxu0 0
    %256 = vmatpush1.bf16.msra.mxu0 0
    %257 = vmatprep.subr.bf16.mxu0 0
    %258 = vmatpush1.bf16.msra.mxu0 0
    %259 = vmatprep.subr.bf16.mxu0 0
    %260 = vmatpush1.bf16.msra.mxu0 0
    %261 = vmatprep.subr.bf16.mxu0 0
    %262 = vmatpush1.bf16.msra.mxu0 0
    %263 = vmatprep.subr.bf16.mxu0 0
    %264 = vmatpush1.bf16.msra.mxu0 0
    %265 = vmatprep.subr.bf16.mxu0 0
    %266 = vmatpush1.bf16.msra.mxu0 0
    %267 = vmatprep.subr.bf16.mxu0 0
    %268 = vmatpush1.bf16.msra.mxu0 0
    %269 = vmatprep.subr.bf16.mxu0 0
    %270 = vmatpush1.bf16.msra.mxu0 0
    %271 = vmatprep.mubr.bf16.mxu0 0
    %272 = vmatmul.mubr.bf16.gmra.mrb[0].mxu0 %v234
    %v273 = vpop.f32.mrb[0].mxu0
    %v274 = vadd.f32 %v218, %v273
    %v275 = vpop.f32.mrb[0].mxu0
    %v276 = vpop.f32.mrb[0].mxu0
    %v277 = vadd.f32 %v218, %v276
    %v278 = vpop.f32.mrb[0].mxu0
    %279 = vmatprep.mubr.bf16.mxu0 0
    %280 = vmatmul.mubr.bf16.gmra.mrb[0].mxu0 %v237
    %v281 = vpop.f32.mrb[0].mxu0
    %v282 = vadd.f32 %v218, %v281
    %v283 = vpop.f32.mrb[0].mxu0
    %v284 = vpop.f32.mrb[0].mxu0
    %v285 = vadd.f32 %v218, %v284
    %v286 = vpop.f32.mrb[0].mxu0
    %287 = vdwg.mxu0
    %v288 = vld [vmem:[#allocation12] sm:$0xf]
    %v289 = vld [vmem:[#allocation12 + $0x4] sm:$0xf]
    %v290 = vld [vmem:[#allocation12 + $0x8] sm:$0xf]
    %v291 = vld [vmem:[#allocation12 + $0xc] sm:$0xf]
    %v292 = vld [vmem:[#allocation14] sm:$0x1]
    %v294 = vlaneseq
    %v295 = vshrl.u32 %v294, 7
    %v296 = vsub.s32 0, %v295
    %v297 = vrot.slane %v292, %v296
    %v303 = vunpack.c.l.b16 %v288
    %v304 = vunpack.c.l.b16 %v289
    %v305 = vunpack.c.l.b16 %v290
    %v306 = vunpack.c.l.b16 %v291
    %v307 = vpack.c.b16 %v304, %v303
    %v308 = vpack.c.b16 %v306, %v305
    %311 = vmatprep.subr.bf16.mxu0 0
    %312 = vmatpush1.bf16.msra.mxu0 %v307
    %313 = vmatprep.subr.bf16.mxu0 0
    %314 = vmatpush1.bf16.msra.mxu0 %v308
    %315 = vmatprep.subr.bf16.mxu0 0
    %316 = vmatpush1.bf16.msra.mxu0 0
    %317 = vmatprep.subr.bf16.mxu0 0
    %318 = vmatpush1.bf16.msra.mxu0 0
    %319 = vmatprep.subr.bf16.mxu0 0
    %320 = vmatpush1.bf16.msra.mxu0 0
    %321 = vmatprep.subr.bf16.mxu0 0
    %322 = vmatpush1.bf16.msra.mxu0 0
    %323 = vmatprep.subr.bf16.mxu0 0
    %324 = vmatpush1.bf16.msra.mxu0 0
    %325 = vmatprep.subr.bf16.mxu0 0
    %326 = vmatpush1.bf16.msra.mxu0 0
    %327 = vmatprep.subr.bf16.mxu0 0
    %328 = vmatpush1.bf16.msra.mxu0 0
    %329 = vmatprep.subr.bf16.mxu0 0
    %330 = vmatpush1.bf16.msra.mxu0 0
    %331 = vmatprep.subr.bf16.mxu0 0
    %332 = vmatpush1.bf16.msra.mxu0 0
    %333 = vmatprep.subr.bf16.mxu0 0
    %334 = vmatpush1.bf16.msra.mxu0 0
    %335 = vmatprep.subr.bf16.mxu0 0
    %336 = vmatpush1.bf16.msra.mxu0 0
    %337 = vmatprep.subr.bf16.mxu0 0
    %338 = vmatpush1.bf16.msra.mxu0 0
    %339 = vmatprep.subr.bf16.mxu0 0
    %340 = vmatpush1.bf16.msra.mxu0 0
    %341 = vmatprep.subr.bf16.mxu0 0
    %342 = vmatpush1.bf16.msra.mxu0 0
    %343 = vmatprep.mubr.bf16.mxu0 0
    %344 = vmatmul.mubr.bf16.gmra.mrb[0].mxu0 %v234
    %v345 = vpop.f32.mrb[0].mxu0
    %v346 = vadd.f32 %v297, %v345
    %v347 = vpop.f32.mrb[0].mxu0
    %v348 = vpop.f32.mrb[0].mxu0
    %v349 = vadd.f32 %v297, %v348
    %v350 = vpop.f32.mrb[0].mxu0
    %351 = vmatprep.mubr.bf16.mxu0 0
    %352 = vmatmul.mubr.bf16.gmra.mrb[0].mxu0 %v237
    %v353 = vpop.f32.mrb[0].mxu0
    %v354 = vadd.f32 %v297, %v353
    %v355 = vpop.f32.mrb[0].mxu0
    %v356 = vpop.f32.mrb[0].mxu0
    %v357 = vadd.f32 %v297, %v356
    %v358 = vpop.f32.mrb[0].mxu0
    %359 = vdwg.mxu0
    %v360 = vmul.f32 %v346, 0.5
    %v361 = vmul.f32 %v349, 0.5
    %v362 = vmul.f32 %v354, 0.5
    %v363 = vmul.f32 %v357, 0.5
    %v364 = vmul.f32 %v346, 0.70710677
    %v365 = vmul.f32 %v349, 0.70710677
    %v366 = vmul.f32 %v354, 0.70710677
    %v367 = vmul.f32 %v357, 0.70710677
    %v368 = verf.f32.pop %v364
    %v369 = verf.f32.pop %v365
    %v370 = verf.f32.pop %v366
    %v371 = verf.f32.pop %v367
    %v372 = vadd.f32 %v368, 1.0
    %v373 = vadd.f32 %v369, 1.0
    %v374 = vadd.f32 %v370, 1.0
    %v375 = vadd.f32 %v371, 1.0
    %v376 = vmul.f32 %v360, %v372
    %v377 = vmul.f32 %v361, %v373
    %v378 = vmul.f32 %v362, %v374
    %v379 = vmul.f32 %v363, %v375
    %v380 = vmul.f32 %v274, %v376
    %v381 = vmul.f32 %v277, %v377
    %v382 = vmul.f32 %v282, %v378
    %v383 = vmul.f32 %v285, %v379
    %v384 = vpack.c.bf16 %v381, %v380
    %v385 = vpack.c.bf16 %v383, %v382
    %v388 = vunpack.c.l.b16 %v384
    %v389 = vunpack.c.h.b16 %v384
    %v390 = vunpack.c.l.b16 %v385
    %v391 = vunpack.c.h.b16 %v385
    %v392 = vpack.c.b16 %v388, %v388
    %v393 = vpack.c.b16 %v389, %v389
    %v394 = vpack.c.b16 %v390, %v390
    %v395 = vpack.c.b16 %v391, %v391
    %400 = vst [vmem:[#allocation15] sm:$0xf] %v392
    %401 = vst [vmem:[#allocation15 + $0x4] sm:$0xf] %v393
    %402 = vst [vmem:[#allocation15 + $0x8] sm:$0xf] %v394
    %403 = vst [vmem:[#allocation15 + $0xc] sm:$0xf] %v395
    // Predicated region
    $region62: #{basic_transformer_block.24} parent=1 // pred_check
      _
    $region63: #{basic_transformer_block.24} parent=1 // pred_check_branch
      %405 = sbr.rel (0) target = $region65
    $region64: #{basic_transformer_block.24} parent=1 // pred_region
      %s407 = ssub.s32 256, 256
      %408 = vsyncadd [#allocation5], %s407
      %s409 = sshll.u32 [#allocation15], 4
      %s410 = int_to_ptr.vmem [resolvable:$true] %s409
      %415 = dma.vmem_to_hbm [thread:$0]  %s410, 256, %s7, [#allocation5], 64, 64, 4
    $region65: #{basic_transformer_block.24} parent=1 // pred_fallthru
      _
    // Predicated region
    $region66: #{basic_transformer_block.24} parent=1 // pred_check
      _
    $region67: #{basic_transformer_block.24} parent=1 // pred_check_branch
      %417 = sbr.rel (0) target = $region69
    $region68: #{basic_transformer_block.24} parent=1 // pred_region
      %418 = dma.done [#allocation5], 256
    $region69: #{basic_transformer_block.24} parent=1 // pred_fallthru
      _
    %419 = vsyncpa [#allocation4], 1
    %420 = vsyncpa [#allocation7], 1
    %421 = vsyncpa [#allocation10], 1
    %422 = vsyncpa [#allocation13], 1
    %423 = vsyncpa [#allocation5], 1

// kernel: basic_transformer_block.22
$region0: #{basic_transformer_block.22}
  #allocation0 [shape = 'u32[]', space=smem, size = 0x4, offset = 0x4, fixed_abs, tag = 'smem constant byte address 0x4 - core index']
  #allocation1 [shape = 'u32[144,128]{1,0:T(1,128)}', space=vmem, size = 0x12000, scoped, tag = 'internal scratch']
  %s0 = inlined_call_operand.hbm [shape: bf16[2,16,96], index: 0, kind: input, shape index: {}]
  %s1 = inlined_call_operand.hbm [shape: bf16[2,4,96], index: 1, kind: input, shape index: {}]
  %s2 = inlined_call_operand.hbm [shape: bf16[2,16,32], index: 2, kind: output, shape index: {}]
  %s3 = sld [smem:[#allocation0]]
  $region49: #{basic_transformer_block.22} parent=0
    _
  %s5 = ssub.s32 1, %s3
  %s6 = scalar_select 0, %s5, %s3
  $region1: #{basic_transformer_block.22} parent=0
    #allocation2 [shape = 'u8[8192]{0}', space=vmem, size = 0x2000, scoped, tag = 'input window, operand 0']
    #allocation3 [shape = 's32[2]{0}', space=sflag, size = 0x8, scoped, tag = 'scoped memory for basic_transformer_block.22']
    #allocation4 [shape = 's32[2]{0}', space=sflag, size = 0x8, scoped, tag = 'scoped memory for basic_transformer_block.22']
    #allocation5 [shape = 'u8[2048]{0}', space=vmem, size = 0x800, scoped, tag = 'input window, operand 1']
    #allocation6 [shape = 's32[2]{0}', space=sflag, size = 0x8, scoped, tag = 'scoped memory for basic_transformer_block.22']
    #allocation7 [shape = 'u8[8192]{0}', space=vmem, size = 0x2000, scoped, tag = 'output window, operand 0']
    %7 = vsyncpa [#allocation3], 0
    %s8 = scalar_lea.sflag [#allocation3], 1
    %9 = vsyncpa %s8, 0
    %10 = vsyncpa [#allocation6], 0
    %s11 = scalar_lea.sflag [#allocation6], 1
    %12 = vsyncpa %s11, 0
    %13 = vsyncpa [#allocation4], 0
    %s14 = scalar_lea.sflag [#allocation4], 1
    %15 = vsyncpa %s14, 0
    loop: start=0, step=1, limit=4
    $region2: #{basic_transformer_block.22} parent=1 // loop_pre_header
      _
    $region3: #{basic_transformer_block.22} parent=1 // loop_header
      %s17 = sphi 0, %s21
      %p18 = scmp.ge.s32.totalorder %s17, 4
      %s27 = sphi 0, %s29
      %s30 = sphi 0, %s27
      %s31 = sphi 0, %s30
      %s47 = sphi 0, %s31
      %s53 = sphi 0, %s55
      %s56 = sphi 0, %s53
      %s57 = sphi 0, %s56
      %s73 = sphi 0, %s57
      %s79 = sphi 0, %s81
      %s82 = sphi 0, %s79
      %s83 = sphi 0, %s82
      %s99 = sphi 0, %s83
    $region4: #{basic_transformer_block.22} parent=1 // loop_header_branch
      %20 = sbr.rel (%p18) target = $region8
    $region5: #{basic_transformer_block.22} parent=1 // loop_body
      %s22 = ssub.s32 %s17, 1
      %s23 = ssub.s32 %s17, 2
      %s24 = sadd.s32 %s17, 1
      %s25 = ssub.s32 %s17, %s24
      %p26 = scmp.eq.s32.totalorder %s25, 0
      %s28 = sadd.s32 %s27, 1
      %s29 = scalar_select %p26, %s27, %s28
      %p32 = pneg %p26
      %p33 = scmp.eq.s32.totalorder %s17, 1
      %p34 = por %p32, %p33
      %p35 = scmp.ne.s32.totalorder %s27, %s30
      %p36 = scmp.eq.s32.totalorder %s17, 0
      %p37 = por %p35, %p36
      %p38 = scmp.ne.s32.totalorder %s27, %s30
      %p39 = scmp.eq.s32.totalorder %s22, 1
      %p40 = por %p38, %p39
      %p41 = scmp.ne.s32.totalorder %s30, %s31
      %p42 = scmp.eq.s32.totalorder %s22, 0
      %p43 = por %p41, %p42
      %p44 = scmp.ne.s32.totalorder %s30, %s31
      %p45 = scmp.eq.s32.totalorder %s23, 1
      %p46 = por %p44, %p45
      %p48 = scmp.ne.s32.totalorder %s31, %s47
      %p49 = scmp.eq.s32.totalorder %s23, 0
      %p50 = por %p48, %p49
      %s51 = ssub.s32 %s17, %s24
      %p52 = scmp.eq.s32.totalorder %s51, 0
      %s54 = sadd.s32 %s53, 1
      %s55 = scalar_select %p52, %s53, %s54
      %p58 = pneg %p52
      %p59 = scmp.eq.s32.totalorder %s17, 1
      %p60 = por %p58, %p59
      %p61 = scmp.ne.s32.totalorder %s53, %s56
      %p62 = scmp.eq.s32.totalorder %s17, 0
      %p63 = por %p61, %p62
      %p64 = scmp.ne.s32.totalorder %s53, %s56
      %p65 = scmp.eq.s32.totalorder %s22, 1
      %p66 = por %p64, %p65
      %p67 = scmp.ne.s32.totalorder %s56, %s57
      %p68 = scmp.eq.s32.totalorder %s22, 0
      %p69 = por %p67, %p68
      %p70 = scmp.ne.s32.totalorder %s56, %s57
      %p71 = scmp.eq.s32.totalorder %s23, 1
      %p72 = por %p70, %p71
      %p74 = scmp.ne.s32.totalorder %s57, %s73
      %p75 = scmp.eq.s32.totalorder %s23, 0
      %p76 = por %p74, %p75
      %s77 = ssub.s32 %s17, %s24
      %p78 = scmp.eq.s32.totalorder %s77, 0
      %s80 = sadd.s32 %s79, 1
      %s81 = scalar_select %p78, %s79, %s80
      %p84 = pneg %p78
      %p85 = scmp.eq.s32.totalorder %s17, 1
      %p86 = por %p84, %p85
      %p87 = scmp.ne.s32.totalorder %s79, %s82
      %p88 = scmp.eq.s32.totalorder %s17, 0
      %p89 = por %p87, %p88
      %p90 = scmp.ne.s32.totalorder %s79, %s82
      %p91 = scmp.eq.s32.totalorder %s22, 1
      %p92 = por %p90, %p91
      %p93 = scmp.ne.s32.totalorder %s82, %s83
      %p94 = scmp.eq.s32.totalorder %s22, 0
      %p95 = por %p93, %p94
      %p96 = scmp.ne.s32.totalorder %s82, %s83
      %p97 = scmp.eq.s32.totalorder %s23, 1
      %p98 = por %p96, %p97
      %p100 = scmp.ne.s32.totalorder %s83, %s99
      %p101 = scmp.eq.s32.totalorder %s23, 0
      %p102 = por %p100, %p101
      %p103 = scmp.le.s32.totalorder 1, %s17
      %p104 = scmp.lt.s32.totalorder %s17, 3
      %p105 = pnand %p103, %p104
      %p106 = pneg %p105
      // Predicated region
      $region9: #{basic_transformer_block.22} parent=5 // pred_check
        _
      $region10: #{basic_transformer_block.22} parent=5 // pred_check_branch
        %108 = sbr.rel (%p105) target = $region12
      $region11: #{basic_transformer_block.22} parent=5 // pred_region
        %s109 = ssub.s32 %s17, 1
      $region12: #{basic_transformer_block.22} parent=5 // pred_fallthru
        _
      %p110 = scmp.lt.s32.totalorder %s17, 2
      // Predicated region
      $region13: #{basic_transformer_block.22} parent=5 // pred_check
        %p111 = pneg %p110
      $region14: #{basic_transformer_block.22} parent=5 // pred_check_branch
        %113 = sbr.rel (%p111) target = $region16
      $region15: #{basic_transformer_block.22} parent=5 // pred_region
        // Predicated region
        $region17: #{basic_transformer_block.22} parent=15 // pred_check
          %p114 = pneg %p37
        $region18: #{basic_transformer_block.22} parent=15 // pred_check_branch
          %116 = sbr.rel (%p114) target = $region20
        $region19: #{basic_transformer_block.22} parent=15 // pred_region
          %s117 = sand.u32 %s27, 1
          %s118 = scalar_lea.sflag [#allocation3], %s117
          %s119 = sand.u32 %s27, 1
          %s120 = smul.addr %s119, 8
          %s121 = scalar_lea.vmem [#allocation2], %s120
          %s123 = ssub.s32 128, 128
          %124 = vsyncadd %s118, %s123
          %s125 = smul.addr %s17, 2
          %s126 = smul.addr %s125, 64
          %s127 = scalar_lea.hbm %s0, %s126
          %s128 = sshll.u32 %s121, 4
          %s129 = int_to_ptr.vmem [resolvable:$true] %s128
          %134 = dma.hbm_to_vmem [thread:$0]  %s127, 128, %s129, %s118, 64, 64, 4
        $region20: #{basic_transformer_block.22} parent=15 // pred_fallthru
          _
        // Predicated region
        $region21: #{basic_transformer_block.22} parent=15 // pred_check
          %p135 = pneg %p63
        $region22: #{basic_transformer_block.22} parent=15 // pred_check_branch
          %137 = sbr.rel (%p135) target = $region24
        $region23: #{basic_transformer_block.22} parent=15 // pred_region
          %s138 = sand.u32 %s53, 1
          %s139 = scalar_lea.sflag [#allocation6], %s138
          %s140 = sand.u32 %s53, 1
          %s141 = smul.addr %s140, 2
          %s142 = scalar_lea.vmem [#allocation5], %s141
          %s144 = ssub.s32 32, 32
          %145 = vsyncadd %s139, %s144
          %s146 = smul.addr %s17, 32
          %s147 = scalar_lea.hbm %s1, %s146
          %s149 = sshll.u32 %s142, 4
          %s150 = int_to_ptr.vmem [resolvable:$true] %s149
          %152 = dma.hbm_to_vmem [thread:$0]  %s147, 32, %s150, %s139
        $region24: #{basic_transformer_block.22} parent=15 // pred_fallthru
          _
      $region16: #{basic_transformer_block.22} parent=5 // pred_fallthru
        _
      %p153 = scmp.le.s32.totalorder 1, %s17
      %p154 = scmp.lt.s32.totalorder %s17, 3
      %p155 = pnand %p153, %p154
      %p156 = pneg %p155
      // Predicated region
      $region25: #{basic_transformer_block.22} parent=5 // pred_check
        _
      $region26: #{basic_transformer_block.22} parent=5 // pred_check_branch
        %158 = sbr.rel (%p155) target = $region28
      $region27: #{basic_transformer_block.22} parent=5 // pred_region
        %s159 = ssub.s32 %s17, 1
        %s160 = sand.u32 %s30, 1
        %s161 = scalar_lea.sflag [#allocation3], %s160
        %s162 = sand.u32 %s30, 1
        %s163 = smul.addr %s162, 8
        %s164 = scalar_lea.vmem [#allocation2], %s163
        // Predicated region
        $region29: #{basic_transformer_block.22} parent=27 // pred_check
          %p165 = pneg %p43
        $region30: #{basic_transformer_block.22} parent=27 // pred_check_branch
          %167 = sbr.rel (%p165) target = $region32
        $region31: #{basic_transformer_block.22} parent=27 // pred_region
          %168 = dma.done %s161, 128
        $region32: #{basic_transformer_block.22} parent=27 // pred_fallthru
          _
        %s169 = sand.u32 %s56, 1
        %s170 = scalar_lea.sflag [#allocation6], %s169
        %s171 = sand.u32 %s56, 1
        %s172 = smul.addr %s171, 2
        %s173 = scalar_lea.vmem [#allocation5], %s172
        // Predicated region
        $region33: #{basic_transformer_block.22} parent=27 // pred_check
          %p174 = pneg %p69
        $region34: #{basic_transformer_block.22} parent=27 // pred_check_branch
          %176 = sbr.rel (%p174) target = $region36
        $region35: #{basic_transformer_block.22} parent=27 // pred_region
          %177 = dma.done %s170, 32
        $region36: #{basic_transformer_block.22} parent=27 // pred_fallthru
          _
        %s178 = sand.u32 %s30, 1
        %s179 = scalar_lea.sflag [#allocation3], %s178
        %s180 = sand.u32 %s30, 1
        %s181 = smul.addr %s180, 8
        %s182 = scalar_lea.vmem [#allocation2], %s181
        %p183 = pneg %p43
        %p184 = pneg %p40
        %s185 = sand.u32 %s56, 1
        %s186 = scalar_lea.sflag [#allocation6], %s185
        %s187 = sand.u32 %s56, 1
        %s188 = smul.addr %s187, 2
        %s189 = scalar_lea.vmem [#allocation5], %s188
        %p190 = pneg %p69
        %p191 = pneg %p66
        %p192 = pneg %p95
        %p193 = pneg %p92
        %s194 = sand.u32 %s82, 1
        %s195 = scalar_lea.sflag [#allocation4], %s194
        %s196 = sand.u32 %s82, 1
        %s197 = smul.addr %s196, 8
        %s198 = scalar_lea.vmem [#allocation7], %s197
        %v200 = vld [vmem:[%s164] sm:$0xf]
        %v201 = vld [vmem:[%s164 + $0x4] sm:$0xf]
        %v202 = vld [vmem:[%s173] sm:$0x3]
        %v205 = vunpack.c.l.b16 %v200
        %v206 = vunpack.c.l.b16 %v201
        %v207 = vpack.c.b16 %v206, %v205
        %208 = vrot.lane.b32.xlu0 %v200, 120
        %v209 = vpop.permute.xlu0 %208
        %210 = vrot.lane.b32.xlu0 %v201, 120
        %v211 = vpop.permute.xlu0 %210
        %212 = vrot.lane.b32.xlu0 %v200, 112
        %v213 = vpop.permute.xlu0 %212
        %214 = vrot.lane.b32.xlu0 %v201, 112
        %v215 = vpop.permute.xlu0 %214
        %216 = vrot.lane.b32.xlu0 %v200, 104
        %v217 = vpop.permute.xlu0 %216
        %218 = vrot.lane.b32.xlu0 %v201, 104
        %v219 = vpop.permute.xlu0 %218
        %221 = vrot.lane.b32.xlu0 %v207, 120
        %v222 = vpop.permute.xlu0 %221
        %223 = vrot.lane.b32.xlu0 %v202, 120
        %v224 = vpop.permute.xlu0 %223
        %225 = vrot.lane.b32.xlu0 %v207, 112
        %v226 = vpop.permute.xlu0 %225
        %227 = vrot.lane.b32.xlu0 %v202, 112
        %v228 = vpop.permute.xlu0 %227
        %229 = vrot.lane.b32.xlu0 %v207, 104
        %v230 = vpop.permute.xlu0 %229
        %231 = vrot.lane.b32.xlu0 %v202, 104
        %v232 = vpop.permute.xlu0 %231
        %233 = vrot.lane.b32.xlu0 %v207, 96
        %v234 = vpop.permute.xlu0 %233
        %235 = vrot.lane.b32.xlu0 %v202, 96
        %v236 = vpop.permute.xlu0 %235
        %vm237 = vcmask 64512
        %v239 = vsel %vm237, %v207, 0
        %v242 = vsel %vm237, %v234, 0
        %v245 = vsel %vm237, %v236, 0
        %247 = vmatprep.subr.bf16.mxu0 0
        %248 = vmatpush1.bf16.xpose.msra.mxu0 %v242
        %249 = vmatprep.subr.bf16.mxu0 0
        %250 = vmatpush1.bf16.xpose.msra.mxu0 %v245
        %251 = vmatprep.subr.bf16.mxu0 0
        %252 = vmatpush1.bf16.xpose.msra.mxu0 0
        %253 = vmatprep.subr.bf16.mxu0 0
        %254 = vmatpush1.bf16.xpose.msra.mxu0 0
        %255 = vmatprep.subr.bf16.mxu0 0
        %256 = vmatpush1.bf16.xpose.msra.mxu0 0
        %257 = vmatprep.subr.bf16.mxu0 0
        %258 = vmatpush1.bf16.xpose.msra.mxu0 0
        %259 = vmatprep.subr.bf16.mxu0 0
        %260 = vmatpush1.bf16.xpose.msra.mxu0 0
        %261 = vmatprep.subr.bf16.mxu0 0
        %262 = vmatpush1.bf16.xpose.msra.mxu0 0
        %263 = vmatprep.subr.bf16.mxu0 0
        %264 = vmatpush1.bf16.xpose.msra.mxu0 0
        %265 = vmatprep.subr.bf16.mxu0 0
        %266 = vmatpush1.bf16.xpose.msra.mxu0 0
        %267 = vmatprep.subr.bf16.mxu0 0
        %268 = vmatpush1.bf16.xpose.msra.mxu0 0
        %269 = vmatprep.subr.bf16.mxu0 0
        %270 = vmatpush1.bf16.xpose.msra.mxu0 0
        %271 = vmatprep.subr.bf16.mxu0 0
        %272 = vmatpush1.bf16.xpose.msra.mxu0 0
        %273 = vmatprep.subr.bf16.mxu0 0
        %274 = vmatpush1.bf16.xpose.msra.mxu0 0
        %275 = vmatprep.subr.bf16.mxu0 0
        %276 = vmatpush1.bf16.xpose.msra.mxu0 0
        %277 = vmatprep.subr.bf16.mxu0 0
        %278 = vmatpush1.bf16.xpose.msra.mxu0 0
        %279 = vmatprep.mubr.bf16.mxu0 0
        %280 = vmatmul.mubr.bf16.gmra.mrb[0].mxu0 %v239
        %v281 = vpop.f32.mrb[0].mxu0
        %v282 = vadd.f32 0.0, %v281
        %v283 = vpop.f32.mrb[0].mxu0
        %v284 = vpop.f32.mrb[0].mxu0
        %v285 = vadd.f32 0.0, %v284
        %v286 = vpop.f32.mrb[0].mxu0
        %287 = vdwg.mxu0
        %v288 = vunpack.c.l.b16 %v209
        %v289 = vunpack.c.l.b16 %v211
        %v290 = vpack.c.b16 %v289, %v288
        %291 = vrot.lane.b32.xlu0 %v222, 96
        %v292 = vpop.permute.xlu0 %291
        %293 = vrot.lane.b32.xlu0 %v224, 96
        %v294 = vpop.permute.xlu0 %293
        %v296 = vsel %vm237, %v290, 0
        %v299 = vsel %vm237, %v292, 0
        %v302 = vsel %vm237, %v294, 0
        %304 = vmatprep.subr.bf16.mxu0 0
        %305 = vmatpush1.bf16.xpose.msra.mxu0 %v299
        %306 = vmatprep.subr.bf16.mxu0 0
        %307 = vmatpush1.bf16.xpose.msra.mxu0 %v302
        %308 = vmatprep.subr.bf16.mxu0 0
        %309 = vmatpush1.bf16.xpose.msra.mxu0 0
        %310 = vmatprep.subr.bf16.mxu0 0
        %311 = vmatpush1.bf16.xpose.msra.mxu0 0
        %312 = vmatprep.subr.bf16.mxu0 0
        %313 = vmatpush1.bf16.xpose.msra.mxu0 0
        %314 = vmatprep.subr.bf16.mxu0 0
        %315 = vmatpush1.bf16.xpose.msra.mxu0 0
        %316 = vmatprep.subr.bf16.mxu0 0
        %317 = vmatpush1.bf16.xpose.msra.mxu0 0
        %318 = vmatprep.subr.bf16.mxu0 0
        %319 = vmatpush1.bf16.xpose.msra.mxu0 0
        %320 = vmatprep.subr.bf16.mxu0 0
        %321 = vmatpush1.bf16.xpose.msra.mxu0 0
        %322 = vmatprep.subr.bf16.mxu0 0
        %323 = vmatpush1.bf16.xpose.msra.mxu0 0
        %324 = vmatprep.subr.bf16.mxu0 0
        %325 = vmatpush1.bf16.xpose.msra.mxu0 0
        %326 = vmatprep.subr.bf16.mxu0 0
        %327 = vmatpush1.bf16.xpose.msra.mxu0 0
        %328 = vmatprep.subr.bf16.mxu0 0
        %329 = vmatpush1.bf16.xpose.msra.mxu0 0
        %330 = vmatprep.subr.bf16.mxu0 0
        %331 = vmatpush1.bf16.xpose.msra.mxu0 0
        %332 = vmatprep.subr.bf16.mxu0 0
        %333 = vmatpush1.bf16.xpose.msra.mxu0 0
        %334 = vmatprep.subr.bf16.mxu0 0
        %335 = vmatpush1.bf16.xpose.msra.mxu0 0
        %336 = vmatprep.mubr.bf16.mxu0 0
        %337 = vmatmul.mubr.bf16.gmra.mrb[0].mxu0 %v296
        %v338 = vpop.f32.mrb[0].mxu0
        %v339 = vadd.f32 0.0, %v338
        %v340 = vpop.f32.mrb[0].mxu0
        %v341 = vpop.f32.mrb[0].mxu0
        %v342 = vadd.f32 0.0, %v341
        %v343 = vpop.f32.mrb[0].mxu0
        %344 = vdwg.mxu0
        %v345 = vunpack.c.l.b16 %v213
        %v346 = vunpack.c.l.b16 %v215
        %v347 = vpack.c.b16 %v346, %v345
        %348 = vrot.lane.b32.xlu0 %v226, 96
        %v349 = vpop.permute.xlu0 %348
        %350 = vrot.lane.b32.xlu0 %v228, 96
        %v351 = vpop.permute.xlu0 %350
        %v353 = vsel %vm237, %v347, 0
        %v356 = vsel %vm237, %v349, 0
        %v359 = vsel %vm237, %v351, 0
        %361 = vmatprep.subr.bf16.mxu0 0
        %362 = vmatpush1.bf16.xpose.msra.mxu0 %v356
        %363 = vmatprep.subr.bf16.mxu0 0
        %364 = vmatpush1.bf16.xpose.msra.mxu0 %v359
        %365 = vmatprep.subr.bf16.mxu0 0
        %366 = vmatpush1.bf16.xpose.msra.mxu0 0
        %367 = vmatprep.subr.bf16.mxu0 0
        %368 = vmatpush1.bf16.xpose.msra.mxu0 0
        %369 = vmatprep.subr.bf16.mxu0 0
        %370 = vmatpush1.bf16.xpose.msra.mxu0 0
        %371 = vmatprep.subr.bf16.mxu0 0
        %372 = vmatpush1.bf16.xpose.msra.mxu0 0
        %373 = vmatprep.subr.bf16.mxu0 0
        %374 = vmatpush1.bf16.xpose.msra.mxu0 0
        %375 = vmatprep.subr.bf16.mxu0 0
        %376 = vmatpush1.bf16.xpose.msra.mxu0 0
        %377 = vmatprep.subr.bf16.mxu0 0
        %378 = vmatpush1.bf16.xpose.msra.mxu0 0
        %379 = vmatprep.subr.bf16.mxu0 0
        %380 = vmatpush1.bf16.xpose.msra.mxu0 0
        %381 = vmatprep.subr.bf16.mxu0 0
        %382 = vmatpush1.bf16.xpose.msra.mxu0 0
        %383 = vmatprep.subr.bf16.mxu0 0
        %384 = vmatpush1.bf16.xpose.msra.mxu0 0
        %385 = vmatprep.subr.bf16.mxu0 0
        %386 = vmatpush1.bf16.xpose.msra.mxu0 0
        %387 = vmatprep.subr.bf16.mxu0 0
        %388 = vmatpush1.bf16.xpose.msra.mxu0 0
        %389 = vmatprep.subr.bf16.mxu0 0
        %390 = vmatpush1.bf16.xpose.msra.mxu0 0
        %391 = vmatprep.subr.bf16.mxu0 0
        %392 = vmatpush1.bf16.xpose.msra.mxu0 0
        %393 = vmatprep.mubr.bf16.mxu0 0
        %394 = vmatmul.mubr.bf16.gmra.mrb[0].mxu0 %v353
        %v395 = vpop.f32.mrb[0].mxu0
        %v396 = vadd.f32 0.0, %v395
        %v397 = vpop.f32.mrb[0].mxu0
        %v398 = vpop.f32.mrb[0].mxu0
        %v399 = vadd.f32 0.0, %v398
        %v400 = vpop.f32.mrb[0].mxu0
        %401 = vdwg.mxu0
        %v402 = vunpack.c.l.b16 %v217
        %v403 = vunpack.c.l.b16 %v219
        %v404 = vpack.c.b16 %v403, %v402
        %405 = vrot.lane.b32.xlu0 %v230, 96
        %v406 = vpop.permute.xlu0 %405
        %407 = vrot.lane.b32.xlu0 %v232, 96
        %v408 = vpop.permute.xlu0 %407
        %v410 = vsel %vm237, %v404, 0
        %v413 = vsel %vm237, %v406, 0
        %v416 = vsel %vm237, %v408, 0
        %418 = vmatprep.subr.bf16.mxu0 0
        %419 = vmatpush1.bf16.xpose.msra.mxu0 %v413
        %420 = vmatprep.subr.bf16.mxu0 0
        %421 = vmatpush1.bf16.xpose.msra.mxu0 %v416
        %422 = vmatprep.subr.bf16.mxu0 0
        %423 = vmatpush1.bf16.xpose.msra.mxu0 0
        %424 = vmatprep.subr.bf16.mxu0 0
        %425 = vmatpush1.bf16.xpose.msra.mxu0 0
        %426 = vmatprep.subr.bf16.mxu0 0
        %427 = vmatpush1.bf16.xpose.msra.mxu0 0
        %428 = vmatprep.subr.bf16.mxu0 0
        %429 = vmatpush1.bf16.xpose.msra.mxu0 0
        %430 = vmatprep.subr.bf16.mxu0 0
        %431 = vmatpush1.bf16.xpose.msra.mxu0 0
        %432 = vmatprep.subr.bf16.mxu0 0
        %433 = vmatpush1.bf16.xpose.msra.mxu0 0
        %434 = vmatprep.subr.bf16.mxu0 0
        %435 = vmatpush1.bf16.xpose.msra.mxu0 0
        %436 = vmatprep.subr.bf16.mxu0 0
        %437 = vmatpush1.bf16.xpose.msra.mxu0 0
        %438 = vmatprep.subr.bf16.mxu0 0
        %439 = vmatpush1.bf16.xpose.msra.mxu0 0
        %440 = vmatprep.subr.bf16.mxu0 0
        %441 = vmatpush1.bf16.xpose.msra.mxu0 0
        %442 = vmatprep.subr.bf16.mxu0 0
        %443 = vmatpush1.bf16.xpose.msra.mxu0 0
        %444 = vmatprep.subr.bf16.mxu0 0
        %445 = vmatpush1.bf16.xpose.msra.mxu0 0
        %446 = vmatprep.subr.bf16.mxu0 0
        %447 = vmatpush1.bf16.xpose.msra.mxu0 0
        %448 = vmatprep.subr.bf16.mxu0 0
        %449 = vmatpush1.bf16.xpose.msra.mxu0 0
        %450 = vmatprep.mubr.bf16.mxu0 0
        %451 = vmatmul.mubr.bf16.gmra.mrb[0].mxu0 %v410
        %v452 = vpop.f32.mrb[0].mxu0
        %v453 = vadd.f32 0.0, %v452
        %v454 = vpop.f32.mrb[0].mxu0
        %v455 = vpop.f32.mrb[0].mxu0
        %v456 = vadd.f32 0.0, %v455
        %v457 = vpop.f32.mrb[0].mxu0
        %458 = vdwg.mxu0
        %vm459 = vcmask 162816
        %v460 = vsel %vm459, %v282, -inf
        %461 = vmax.xlane.f32.xlu0 %v460
        %v462 = vpop.xlane.xlu0 %461
        %v463 = vsel %vm459, %v285, -inf
        %464 = vmax.xlane.f32.xlu0 %v463
        %v465 = vpop.xlane.xlu0 %464
        %v466 = vsel %vm459, %v339, -inf
        %467 = vmax.xlane.f32.xlu0 %v466
        %v468 = vpop.xlane.xlu0 %467
        %v469 = vsel %vm459, %v342, -inf
        %470 = vmax.xlane.f32.xlu0 %v469
        %v471 = vpop.xlane.xlu0 %470
        %v472 = vsel %vm459, %v396, -inf
        %473 = vmax.xlane.f32.xlu0 %v472
        %v474 = vpop.xlane.xlu0 %473
        %v475 = vsel %vm459, %v399, -inf
        %476 = vmax.xlane.f32.xlu0 %v475
        %v477 = vpop.xlane.xlu0 %476
        %v478 = vsel %vm459, %v453, -inf
        %479 = vmax.xlane.f32.xlu0 %v478
        %v480 = vpop.xlane.xlu0 %479
        %v481 = vsel %vm459, %v456, -inf
        %482 = vmax.xlane.f32.xlu0 %v481
        %v483 = vpop.xlane.xlu0 %482
        %v484 = vsub.f32 %v282, %v462
        %v485 = vsub.f32 %v285, %v465
        %v486 = vsub.f32 %v339, %v468
        %v487 = vsub.f32 %v342, %v471
        %v488 = vsub.f32 %v396, %v474
        %v489 = vsub.f32 %v399, %v477
        %v490 = vsub.f32 %v453, %v480
        %v491 = vsub.f32 %v456, %v483
        %v492 = vmul.f32 %v484, 1.442695
        %v493 = vpow.pop %v492
        %v494 = vmul.f32 %v485, 1.442695
        %v495 = vpow.pop %v494
        %v496 = vmul.f32 %v486, 1.442695
        %v497 = vpow.pop %v496
        %v498 = vmul.f32 %v487, 1.442695
        %v499 = vpow.pop %v498
        %v500 = vmul.f32 %v488, 1.442695
        %v501 = vpow.pop %v500
        %v502 = vmul.f32 %v489, 1.442695
        %v503 = vpow.pop %v502
        %v504 = vmul.f32 %v490, 1.442695
        %v505 = vpow.pop %v504
        %v506 = vmul.f32 %v491, 1.442695
        %v507 = vpow.pop %v506
        %v508 = vsel %vm459, %v493, 0.0
        %509 = vadd.xlane.f32.xlu0 %v508
        %v510 = vpop.xlane.xlu0 %509
        %v511 = vsel %vm459, %v495, 0.0
        %512 = vadd.xlane.f32.xlu0 %v511
        %v513 = vpop.xlane.xlu0 %512
        %v514 = vsel %vm459, %v497, 0.0
        %515 = vadd.xlane.f32.xlu0 %v514
        %v516 = vpop.xlane.xlu0 %515
        %v517 = vsel %vm459, %v499, 0.0
        %518 = vadd.xlane.f32.xlu0 %v517
        %v519 = vpop.xlane.xlu0 %518
        %v520 = vsel %vm459, %v501, 0.0
        %521 = vadd.xlane.f32.xlu0 %v520
        %v522 = vpop.xlane.xlu0 %521
        %v523 = vsel %vm459, %v503, 0.0
        %524 = vadd.xlane.f32.xlu0 %v523
        %v525 = vpop.xlane.xlu0 %524
        %v526 = vsel %vm459, %v505, 0.0
        %527 = vadd.xlane.f32.xlu0 %v526
        %v528 = vpop.xlane.xlu0 %527
        %v529 = vsel %vm459, %v507, 0.0
        %530 = vadd.xlane.f32.xlu0 %v529
        %v531 = vpop.xlane.xlu0 %530
        %v532 = vrcp.pop %v510
        %v533 = vrcp.pop %v513
        %v534 = vrcp.pop %v516
        %v535 = vrcp.pop %v519
        %v536 = vrcp.pop %v522
        %v537 = vrcp.pop %v525
        %v538 = vrcp.pop %v528
        %v539 = vrcp.pop %v531
        %v540 = vpack.c.bf16 %v495, %v493
        %v541 = vpack.c.bf16 %v499, %v497
        %v542 = vpack.c.bf16 %v503, %v501
        %v543 = vpack.c.bf16 %v507, %v505
        %544 = vrot.lane.b32.xlu0 %v207, 64
        %v545 = vpop.permute.xlu0 %544
        %546 = vrot.lane.b32.xlu0 %v202, 64
        %v547 = vpop.permute.xlu0 %546
        %v550 = vsel %vm459, %v540, 0
        %vm552 = vcmask 1041408
        %v554 = vsel %vm552, %v547, 0
        %556 = vmatprep.subr.bf16.mxu0 0
        %557 = vmatpush1.bf16.msra.mxu0 %v545
        %558 = vmatprep.subr.bf16.mxu0 0
        %559 = vmatpush1.bf16.msra.mxu0 %v554
        %560 = vmatprep.subr.bf16.mxu0 0
        %561 = vmatpush1.bf16.msra.mxu0 0
        %562 = vmatprep.subr.bf16.mxu0 0
        %563 = vmatpush1.bf16.msra.mxu0 0
        %564 = vmatprep.subr.bf16.mxu0 0
        %565 = vmatpush1.bf16.msra.mxu0 0
        %566 = vmatprep.subr.bf16.mxu0 0
        %567 = vmatpush1.bf16.msra.mxu0 0
        %568 = vmatprep.subr.bf16.mxu0 0
        %569 = vmatpush1.bf16.msra.mxu0 0
        %570 = vmatprep.subr.bf16.mxu0 0
        %571 = vmatpush1.bf16.msra.mxu0 0
        %572 = vmatprep.subr.bf16.mxu0 0
        %573 = vmatpush1.bf16.msra.mxu0 0
        %574 = vmatprep.subr.bf16.mxu0 0
        %575 = vmatpush1.bf16.msra.mxu0 0
        %576 = vmatprep.subr.bf16.mxu0 0
        %577 = vmatpush1.bf16.msra.mxu0 0
        %578 = vmatprep.subr.bf16.mxu0 0
        %579 = vmatpush1.bf16.msra.mxu0 0
        %580 = vmatprep.subr.bf16.mxu0 0
        %581 = vmatpush1.bf16.msra.mxu0 0
        %582 = vmatprep.subr.bf16.mxu0 0
        %583 = vmatpush1.bf16.msra.mxu0 0
        %584 = vmatprep.subr.bf16.mxu0 0
        %585 = vmatpush1.bf16.msra.mxu0 0
        %586 = vmatprep.subr.bf16.mxu0 0
        %587 = vmatpush1.bf16.msra.mxu0 0
        %588 = vmatprep.mubr.bf16.mxu0 0
        %589 = vmatmul.mubr.bf16.gmra.mrb[0].mxu0 %v550
        %v590 = vpop.f32.mrb[0].mxu0
        %v591 = vadd.f32 0.0, %v590
        %v592 = vpop.f32.mrb[0].mxu0
        %v593 = vpop.f32.mrb[0].mxu0
        %v594 = vadd.f32 0.0, %v593
        %v595 = vpop.f32.mrb[0].mxu0
        %596 = vdwg.mxu0
        %597 = vrot.lane.b32.xlu0 %v222, 64
        %v598 = vpop.permute.xlu0 %597
        %599 = vrot.lane.b32.xlu0 %v224, 64
        %v600 = vpop.permute.xlu0 %599
        %v603 = vsel %vm459, %v541, 0
        %v606 = vsel %vm552, %v600, 0
        %608 = vmatprep.subr.bf16.mxu0 0
        %609 = vmatpush1.bf16.msra.mxu0 %v598
        %610 = vmatprep.subr.bf16.mxu0 0
        %611 = vmatpush1.bf16.msra.mxu0 %v606
        %612 = vmatprep.subr.bf16.mxu0 0
        %613 = vmatpush1.bf16.msra.mxu0 0
        %614 = vmatprep.subr.bf16.mxu0 0
        %615 = vmatpush1.bf16.msra.mxu0 0
        %616 = vmatprep.subr.bf16.mxu0 0
        %617 = vmatpush1.bf16.msra.mxu0 0
        %618 = vmatprep.subr.bf16.mxu0 0
        %619 = vmatpush1.bf16.msra.mxu0 0
        %620 = vmatprep.subr.bf16.mxu0 0
        %621 = vmatpush1.bf16.msra.mxu0 0
        %622 = vmatprep.subr.bf16.mxu0 0
        %623 = vmatpush1.bf16.msra.mxu0 0
        %624 = vmatprep.subr.bf16.mxu0 0
        %625 = vmatpush1.bf16.msra.mxu0 0
        %626 = vmatprep.subr.bf16.mxu0 0
        %627 = vmatpush1.bf16.msra.mxu0 0
        %628 = vmatprep.subr.bf16.mxu0 0
        %629 = vmatpush1.bf16.msra.mxu0 0
        %630 = vmatprep.subr.bf16.mxu0 0
        %631 = vmatpush1.bf16.msra.mxu0 0
        %632 = vmatprep.subr.bf16.mxu0 0
        %633 = vmatpush1.bf16.msra.mxu0 0
        %634 = vmatprep.subr.bf16.mxu0 0
        %635 = vmatpush1.bf16.msra.mxu0 0
        %636 = vmatprep.subr.bf16.mxu0 0
        %637 = vmatpush1.bf16.msra.mxu0 0
        %638 = vmatprep.subr.bf16.mxu0 0
        %639 = vmatpush1.bf16.msra.mxu0 0
        %640 = vmatprep.mubr.bf16.mxu0 0
        %641 = vmatmul.mubr.bf16.gmra.mrb[0].mxu0 %v603
        %v642 = vpop.f32.mrb[0].mxu0
        %v643 = vadd.f32 0.0, %v642
        %v644 = vpop.f32.mrb[0].mxu0
        %v645 = vpop.f32.mrb[0].mxu0
        %v646 = vadd.f32 0.0, %v645
        %v647 = vpop.f32.mrb[0].mxu0
        %648 = vdwg.mxu0
        %649 = vrot.lane.b32.xlu0 %v226, 64
        %v650 = vpop.permute.xlu0 %649
        %651 = vrot.lane.b32.xlu0 %v228, 64
        %v652 = vpop.permute.xlu0 %651
        %v655 = vsel %vm459, %v542, 0
        %v658 = vsel %vm552, %v652, 0
        %660 = vmatprep.subr.bf16.mxu0 0
        %661 = vmatpush1.bf16.msra.mxu0 %v650
        %662 = vmatprep.subr.bf16.mxu0 0
        %663 = vmatpush1.bf16.msra.mxu0 %v658
        %664 = vmatprep.subr.bf16.mxu0 0
        %665 = vmatpush1.bf16.msra.mxu0 0
        %666 = vmatprep.subr.bf16.mxu0 0
        %667 = vmatpush1.bf16.msra.mxu0 0
        %668 = vmatprep.subr.bf16.mxu0 0
        %669 = vmatpush1.bf16.msra.mxu0 0
        %670 = vmatprep.subr.bf16.mxu0 0
        %671 = vmatpush1.bf16.msra.mxu0 0
        %672 = vmatprep.subr.bf16.mxu0 0
        %673 = vmatpush1.bf16.msra.mxu0 0
        %674 = vmatprep.subr.bf16.mxu0 0
        %675 = vmatpush1.bf16.msra.mxu0 0
        %676 = vmatprep.subr.bf16.mxu0 0
        %677 = vmatpush1.bf16.msra.mxu0 0
        %678 = vmatprep.subr.bf16.mxu0 0
        %679 = vmatpush1.bf16.msra.mxu0 0
        %680 = vmatprep.subr.bf16.mxu0 0
        %681 = vmatpush1.bf16.msra.mxu0 0
        %682 = vmatprep.subr.bf16.mxu0 0
        %683 = vmatpush1.bf16.msra.mxu0 0
        %684 = vmatprep.subr.bf16.mxu0 0
        %685 = vmatpush1.bf16.msra.mxu0 0
        %686 = vmatprep.subr.bf16.mxu0 0
        %687 = vmatpush1.bf16.msra.mxu0 0
        %688 = vmatprep.subr.bf16.mxu0 0
        %689 = vmatpush1.bf16.msra.mxu0 0
        %690 = vmatprep.subr.bf16.mxu0 0
        %691 = vmatpush1.bf16.msra.mxu0 0
        %692 = vmatprep.mubr.bf16.mxu0 0
        %693 = vmatmul.mubr.bf16.gmra.mrb[0].mxu0 %v655
        %v694 = vpop.f32.mrb[0].mxu0
        %v695 = vadd.f32 0.0, %v694
        %v696 = vpop.f32.mrb[0].mxu0
        %v697 = vpop.f32.mrb[0].mxu0
        %v698 = vadd.f32 0.0, %v697
        %v699 = vpop.f32.mrb[0].mxu0
        %700 = vdwg.mxu0
        %701 = vrot.lane.b32.xlu0 %v230, 64
        %v702 = vpop.permute.xlu0 %701
        %703 = vrot.lane.b32.xlu0 %v232, 64
        %v704 = vpop.permute.xlu0 %703
        %v707 = vsel %vm459, %v543, 0
        %v710 = vsel %vm552, %v704, 0
        %712 = vmatprep.subr.bf16.mxu0 0
        %713 = vmatpush1.bf16.msra.mxu0 %v702
        %714 = vmatprep.subr.bf16.mxu0 0
        %715 = vmatpush1.bf16.msra.mxu0 %v710
        %716 = vmatprep.subr.bf16.mxu0 0
        %717 = vmatpush1.bf16.msra.mxu0 0
        %718 = vmatprep.subr.bf16.mxu0 0
        %719 = vmatpush1.bf16.msra.mxu0 0
        %720 = vmatprep.subr.bf16.mxu0 0
        %721 = vmatpush1.bf16.msra.mxu0 0
        %722 = vmatprep.subr.bf16.mxu0 0
        %723 = vmatpush1.bf16.msra.mxu0 0
        %724 = vmatprep.subr.bf16.mxu0 0
        %725 = vmatpush1.bf16.msra.mxu0 0
        %726 = vmatprep.subr.bf16.mxu0 0
        %727 = vmatpush1.bf16.msra.mxu0 0
        %728 = vmatprep.subr.bf16.mxu0 0
        %729 = vmatpush1.bf16.msra.mxu0 0
        %730 = vmatprep.subr.bf16.mxu0 0
        %731 = vmatpush1.bf16.msra.mxu0 0
        %732 = vmatprep.subr.bf16.mxu0 0
        %733 = vmatpush1.bf16.msra.mxu0 0
        %734 = vmatprep.subr.bf16.mxu0 0
        %735 = vmatpush1.bf16.msra.mxu0 0
        %736 = vmatprep.subr.bf16.mxu0 0
        %737 = vmatpush1.bf16.msra.mxu0 0
        %738 = vmatprep.subr.bf16.mxu0 0
        %739 = vmatpush1.bf16.msra.mxu0 0
        %740 = vmatprep.subr.bf16.mxu0 0
        %741 = vmatpush1.bf16.msra.mxu0 0
        %742 = vmatprep.subr.bf16.mxu0 0
        %743 = vmatpush1.bf16.msra.mxu0 0
        %744 = vmatprep.mubr.bf16.mxu0 0
        %745 = vmatmul.mubr.bf16.gmra.mrb[0].mxu0 %v707
        %v746 = vpop.f32.mrb[0].mxu0
        %v747 = vadd.f32 0.0, %v746
        %v748 = vpop.f32.mrb[0].mxu0
        %v749 = vpop.f32.mrb[0].mxu0
        %v750 = vadd.f32 0.0, %v749
        %v751 = vpop.f32.mrb[0].mxu0
        %752 = vdwg.mxu0
        %v753 = vmul.f32 %v591, %v532
        %v754 = vmul.f32 %v594, %v533
        %v755 = vmul.f32 %v643, %v534
        %v756 = vmul.f32 %v646, %v535
        %v757 = vmul.f32 %v695, %v536
        %v758 = vmul.f32 %v698, %v537
        %v759 = vmul.f32 %v747, %v538
        %v760 = vmul.f32 %v750, %v539
        %763 = vrot.lane.b32.xlu0 %v755, 8
        %v764 = vpop.permute.xlu0 %763
        %765 = vrot.lane.b32.xlu0 %v756, 8
        %v766 = vpop.permute.xlu0 %765
        %771 = vrot.lane.b32.xlu0 %v757, 16
        %v772 = vpop.permute.xlu0 %771
        %773 = vrot.lane.b32.xlu0 %v758, 16
        %v774 = vpop.permute.xlu0 %773
        %779 = vrot.lane.b32.xlu0 %v759, 24
        %v780 = vpop.permute.xlu0 %779
        %781 = vrot.lane.b32.xlu0 %v760, 24
        %v782 = vpop.permute.xlu0 %781
        %v785 = vsel %vm237, %v753, %v764
        %v786 = vsel %vm237, %v754, %v766
        %vm787 = vcmask 130048
        %v788 = vsel %vm787, %v785, %v772
        %v789 = vsel %vm787, %v786, %v774
        %vm790 = vcmask 195584
        %v791 = vsel %vm790, %v788, %v780
        %v792 = vsel %vm790, %v789, %v782
        %v793 = vpack.c.bf16 %v792, %v791
        %v795 = vunpack.c.l.b16 %v793
        %v796 = vunpack.c.h.b16 %v793
        %v797 = vpack.c.b16 %v795, %v795
        %v798 = vpack.c.b16 %v796, %v796
        %vm801 = vcmask 257024
        %802 = vst.msk [vmem:[%s198] sm:$0xf] %vm801, %v797
        %803 = vst.msk [vmem:[%s198 + $0x4] sm:$0xf] %vm801, %v798
        %s804 = sand.u32 %s82, 1
        %s805 = scalar_lea.sflag [#allocation4], %s804
        %s806 = sand.u32 %s82, 1
        %s807 = smul.addr %s806, 8
        %s808 = scalar_lea.vmem [#allocation7], %s807
        // Predicated region
        $region37: #{basic_transformer_block.22} parent=27 // pred_check
          %p809 = pneg %p92
        $region38: #{basic_transformer_block.22} parent=27 // pred_check_branch
          %811 = sbr.rel (%p809) target = $region40
        $region39: #{basic_transformer_block.22} parent=27 // pred_region
          %s813 = ssub.s32 128, 128
          %814 = vsyncadd %s805, %s813
          %s815 = smul.addr %s22, 2
          %s816 = smul.addr %s815, 64
          %s817 = scalar_lea.hbm %s2, %s816
          %s818 = sshll.u32 %s808, 4
          %s819 = int_to_ptr.vmem [resolvable:$true] %s818
          %824 = dma.vmem_to_hbm [thread:$0]  %s819, 128, %s817, %s805, 64, 64, 4
        $region40: #{basic_transformer_block.22} parent=27 // pred_fallthru
          _
      $region28: #{basic_transformer_block.22} parent=5 // pred_fallthru
        _
      %p825 = scmp.le.s32.totalorder 2, %s17
      // Predicated region
      $region41: #{basic_transformer_block.22} parent=5 // pred_check
        %p826 = pneg %p825
      $region42: #{basic_transformer_block.22} parent=5 // pred_check_branch
        %828 = sbr.rel (%p826) target = $region44
      $region43: #{basic_transformer_block.22} parent=5 // pred_region
        %s829 = ssub.s32 %s17, 2
        // Predicated region
        $region45: #{basic_transformer_block.22} parent=43 // pred_check
          %p830 = pneg %p98
        $region46: #{basic_transformer_block.22} parent=43 // pred_check_branch
          %832 = sbr.rel (%p830) target = $region48
        $region47: #{basic_transformer_block.22} parent=43 // pred_region
          %s833 = sand.u32 %s83, 1
          %s834 = scalar_lea.sflag [#allocation4], %s833
          %s835 = sand.u32 %s83, 1
          %s836 = smul.addr %s835, 8
          %s837 = scalar_lea.vmem [#allocation7], %s836
          %838 = dma.done %s834, 128
        $region48: #{basic_transformer_block.22} parent=43 // pred_fallthru
          _
      $region44: #{basic_transformer_block.22} parent=5 // pred_fallthru
        _
    $region6: #{basic_transformer_block.22} parent=1 // loop_footer
      %s21 = sadd.s32 1, %s17
    $region7: #{basic_transformer_block.22} parent=1 // loop_footer_branch
      %16 = sbr.rel target = $region3
    $region8: #{basic_transformer_block.22} parent=1 // loop_exit
      _
    %839 = vsyncpa [#allocation3], 1
    %s840 = scalar_lea.sflag [#allocation3], 1
    %841 = vsyncpa %s840, 1
    %842 = vsyncpa [#allocation6], 1
    %s843 = scalar_lea.sflag [#allocation6], 1
    %844 = vsyncpa %s843, 1
    %845 = vsyncpa [#allocation4], 1
    %s846 = scalar_lea.sflag [#allocation4], 1
    %847 = vsyncpa %s846, 1

// kernel: basic_transformer_block.26
$region0: #{basic_transformer_block.26}
  #allocation0 [shape = 'u32[]', space=smem, size = 0x4, offset = 0x4, fixed_abs, tag = 'smem constant byte address 0x4 - core index']
  #allocation1 [shape = 'u32[144,128]{1,0:T(1,128)}', space=vmem, size = 0x12000, scoped, tag = 'internal scratch']
  #allocation2 [shape = 'bf16[32,32]{1,0:T(16,128)(2,1)}', space=vmem, size = 0x2000, scoped, tag = 'scratch operand']
  %s0 = inlined_call_operand.hbm [shape: bf16[32,32], index: 0, kind: input, shape index: {}]
  %s1 = inlined_call_operand.hbm [shape: f32[1,32], index: 1, kind: input, shape index: {}]
  %s2 = inlined_call_operand.hbm [shape: f32[1,32], index: 2, kind: input, shape index: {}]
  %s3 = inlined_call_operand.hbm [shape: bf16[32,32], index: 3, kind: input, shape index: {}]
  %s4 = inlined_call_operand.hbm [shape: bf16[32,32], index: 4, kind: output, shape index: {}]
  %s5 = sld [smem:[#allocation0]]
  $region46: #{basic_transformer_block.26} parent=0
    _
  %s7 = ssub.s32 1, %s5
  %s8 = scalar_select 0, %s7, %s5
  $region1: #{basic_transformer_block.26} parent=0
    #allocation3 [shape = 'u8[8192]{0}', space=vmem, size = 0x2000, scoped, tag = 'input window, operand 0, single buffered']
    #allocation4 [shape = 's32[1]{0}', space=sflag, size = 0x4, scoped, tag = 'scoped memory for basic_transformer_block.26']
    #allocation5 [shape = 's32[1]{0}', space=sflag, size = 0x4, scoped, tag = 'scoped memory for basic_transformer_block.26']
    #allocation6 [shape = 'u8[512]{0}', space=vmem, size = 0x400, scoped, tag = 'input window, operand 1, single buffered']
    #allocation7 [shape = 's32[1]{0}', space=sflag, size = 0x4, scoped, tag = 'scoped memory for basic_transformer_block.26']
    #allocation8 [shape = 'u8[512]{0}', space=vmem, size = 0x400, scoped, tag = 'input window, operand 2, single buffered']
    #allocation9 [shape = 'u8[8192]{0}', space=vmem, size = 0x2000, scoped, tag = 'input window, operand 3, single buffered']
    #allocation10 [shape = 's32[1]{0}', space=sflag, size = 0x4, scoped, tag = 'scoped memory for basic_transformer_block.26']
    #allocation11 [shape = 'u8[8192]{0}', space=vmem, size = 0x2000, scoped, tag = 'output window, operand 0, single buffered']
    %9 = vsyncpa [#allocation4], 0
    %10 = vsyncpa [#allocation7], 0
    %11 = vsyncpa [#allocation10], 0
    %12 = vsyncpa [#allocation5], 0
    // Predicated region
    $region2: #{basic_transformer_block.26} parent=1 // pred_check
      _
    $region3: #{basic_transformer_block.26} parent=1 // pred_check_branch
      %14 = sbr.rel (0) target = $region5
    $region4: #{basic_transformer_block.26} parent=1 // pred_region
      %s16 = ssub.s32 256, 256
      %17 = vsyncadd [#allocation4], %s16
      %s18 = sshll.u32 [#allocation3], 4
      %s19 = int_to_ptr.vmem [resolvable:$true] %s18
      %24 = dma.hbm_to_vmem [thread:$0]  %s0, 256, %s19, [#allocation4], 64, 64, 4
    $region5: #{basic_transformer_block.26} parent=1 // pred_fallthru
      _
    // Predicated region
    $region6: #{basic_transformer_block.26} parent=1 // pred_check
      _
    $region7: #{basic_transformer_block.26} parent=1 // pred_check_branch
      %26 = sbr.rel (0) target = $region9
    $region8: #{basic_transformer_block.26} parent=1 // pred_region
      %s28 = ssub.s32 16, 16
      %29 = vsyncadd [#allocation7], %s28
      %s31 = sshll.u32 [#allocation6], 4
      %s32 = int_to_ptr.vmem [resolvable:$true] %s31
      %34 = dma.hbm_to_vmem [thread:$0]  %s1, 16, %s32, [#allocation7]
    $region9: #{basic_transformer_block.26} parent=1 // pred_fallthru
      _
    // Predicated region
    $region10: #{basic_transformer_block.26} parent=1 // pred_check
      _
    $region11: #{basic_transformer_block.26} parent=1 // pred_check_branch
      %36 = sbr.rel (0) target = $region13
    $region12: #{basic_transformer_block.26} parent=1 // pred_region
      %s38 = ssub.s32 16, 16
      %39 = vsyncadd [#allocation7], %s38
      %s41 = sshll.u32 [#allocation8], 4
      %s42 = int_to_ptr.vmem [resolvable:$true] %s41
      %44 = dma.hbm_to_vmem [thread:$0]  %s2, 16, %s42, [#allocation7]
    $region13: #{basic_transformer_block.26} parent=1 // pred_fallthru
      _
    // Predicated region
    $region14: #{basic_transformer_block.26} parent=1 // pred_check
      _
    $region15: #{basic_transformer_block.26} parent=1 // pred_check_branch
      %46 = sbr.rel (0) target = $region17
    $region16: #{basic_transformer_block.26} parent=1 // pred_region
      %s48 = ssub.s32 256, 256
      %49 = vsyncadd [#allocation10], %s48
      %s50 = sshll.u32 [#allocation9], 4
      %s51 = int_to_ptr.vmem [resolvable:$true] %s50
      %56 = dma.hbm_to_vmem [thread:$0]  %s3, 256, %s51, [#allocation10], 64, 64, 4
    $region17: #{basic_transformer_block.26} parent=1 // pred_fallthru
      _
    // Predicated region
    $region18: #{basic_transformer_block.26} parent=1 // pred_check
      _
    $region19: #{basic_transformer_block.26} parent=1 // pred_check_branch
      %58 = sbr.rel (0) target = $region21
    $region20: #{basic_transformer_block.26} parent=1 // pred_region
      %59 = dma.done [#allocation4], 256
    $region21: #{basic_transformer_block.26} parent=1 // pred_fallthru
      _
    // Predicated region
    $region22: #{basic_transformer_block.26} parent=1 // pred_check
      _
    $region23: #{basic_transformer_block.26} parent=1 // pred_check_branch
      %61 = sbr.rel (0) target = $region25
    $region24: #{basic_transformer_block.26} parent=1 // pred_region
      %62 = dma.done [#allocation7], 16
    $region25: #{basic_transformer_block.26} parent=1 // pred_fallthru
      _
    // Predicated region
    $region26: #{basic_transformer_block.26} parent=1 // pred_check
      _
    $region27: #{basic_transformer_block.26} parent=1 // pred_check_branch
      %64 = sbr.rel (0) target = $region29
    $region28: #{basic_transformer_block.26} parent=1 // pred_region
      %65 = dma.done [#allocation7], 16
    $region29: #{basic_transformer_block.26} parent=1 // pred_fallthru
      _
    // Predicated region
    $region30: #{basic_transformer_block.26} parent=1 // pred_check
      _
    $region31: #{basic_transformer_block.26} parent=1 // pred_check_branch
      %67 = sbr.rel (0) target = $region33
    $region32: #{basic_transformer_block.26} parent=1 // pred_region
      %68 = dma.done [#allocation10], 256
    $region33: #{basic_transformer_block.26} parent=1 // pred_fallthru
      _
    %p70 = scmp.eq.s32.totalorder 0, 0
    // Predicated region
    $region34: #{basic_transformer_block.26} parent=1 // pred_check
      %p71 = pneg %p70
    $region35: #{basic_transformer_block.26} parent=1 // pred_check_branch
      %73 = sbr.rel (%p71) target = $region37
    $region36: #{basic_transformer_block.26} parent=1 // pred_region
      %v74 = vld [vmem:[#allocation3] sm:$0xf]
      %v75 = vld [vmem:[#allocation3 + $0x4] sm:$0xf]
      %v76 = vld [vmem:[#allocation3 + $0x8] sm:$0xf]
      %v77 = vld [vmem:[#allocation3 + $0xc] sm:$0xf]
      %v78 = vunpack.c.l.bf16 %v74
      %v79 = vunpack.c.l.bf16 %v75
      %v80 = vunpack.c.l.bf16 %v76
      %v81 = vunpack.c.l.bf16 %v77
      %vm82 = vcmask 261120
      %v83 = vsel %vm82, %v78, 0.0
      %84 = vadd.xlane.f32.xlu0 %v83
      %v85 = vpop.xlane.xlu0 %84
      %v86 = vsel %vm82, %v79, 0.0
      %87 = vadd.xlane.f32.xlu0 %v86
      %v88 = vpop.xlane.xlu0 %87
      %v89 = vsel %vm82, %v80, 0.0
      %90 = vadd.xlane.f32.xlu0 %v89
      %v91 = vpop.xlane.xlu0 %90
      %v92 = vsel %vm82, %v81, 0.0
      %93 = vadd.xlane.f32.xlu0 %v92
      %v94 = vpop.xlane.xlu0 %93
      %v95 = vrcp.pop 32.0
      %v96 = vmul.f32 %v85, %v95
      %v97 = vmul.f32 %v88, %v95
      %v98 = vmul.f32 %v91, %v95
      %v99 = vmul.f32 %v94, %v95
      %v100 = vsub.f32 %v78, %v96
      %v101 = vsub.f32 %v79, %v97
      %v102 = vsub.f32 %v80, %v98
      %v103 = vsub.f32 %v81, %v99
      %v104 = vmul.f32 %v100, %v100
      %v105 = vmul.f32 %v101, %v101
      %v106 = vmul.f32 %v102, %v102
      %v107 = vmul.f32 %v103, %v103
      %v108 = vsel %vm82, %v104, 0.0
      %109 = vadd.xlane.f32.xlu0 %v108
      %v110 = vpop.xlane.xlu0 %109
      %v111 = vsel %vm82, %v105, 0.0
      %112 = vadd.xlane.f32.xlu0 %v111
      %v113 = vpop.xlane.xlu0 %112
      %v114 = vsel %vm82, %v106, 0.0
      %115 = vadd.xlane.f32.xlu0 %v114
      %v116 = vpop.xlane.xlu0 %115
      %v117 = vsel %vm82, %v107, 0.0
      %118 = vadd.xlane.f32.xlu0 %v117
      %v119 = vpop.xlane.xlu0 %118
      %v120 = vmul.f32 %v110, %v95
      %v121 = vmul.f32 %v113, %v95
      %v122 = vmul.f32 %v116, %v95
      %v123 = vmul.f32 %v119, %v95
      %v124 = vadd.f32 %v120, 1e-05
      %v125 = vadd.f32 %v121, 1e-05
      %v126 = vadd.f32 %v122, 1e-05
      %v127 = vadd.f32 %v123, 1e-05
      %v128 = vrsqrt.pop %v124
      %v129 = vrsqrt.pop %v125
      %v130 = vrsqrt.pop %v126
      %v131 = vrsqrt.pop %v127
      %v132 = vmul.f32 %v100, %v128
      %v133 = vmul.f32 %v101, %v129
      %v134 = vmul.f32 %v102, %v130
      %v135 = vmul.f32 %v103, %v131
      %v136 = vld [vmem:[#allocation6] sm:$0x1]
      %v138 = vlaneseq
      %v139 = vshrl.u32 %v138, 7
      %v140 = vsub.s32 0, %v139
      %v141 = vrot.slane %v136, %v140
      %v143 = vmul.f32 %v132, %v141
      %v144 = vmul.f32 %v133, %v141
      %v145 = vmul.f32 %v134, %v141
      %v146 = vmul.f32 %v135, %v141
      %v147 = vld [vmem:[#allocation8] sm:$0x1]
      %v149 = vlaneseq
      %v150 = vshrl.u32 %v149, 7
      %v151 = vsub.s32 0, %v150
      %v152 = vrot.slane %v147, %v151
      %v154 = vadd.f32 %v143, %v152
      %v155 = vadd.f32 %v144, %v152
      %v156 = vadd.f32 %v145, %v152
      %v157 = vadd.f32 %v146, %v152
      %v158 = vpack.c.bf16 %v155, %v154
      %v159 = vpack.c.bf16 %v157, %v156
      %160 = vst.msk [vmem:[#allocation2] sm:$0xff] %vm82, %v158
      %161 = vst.msk [vmem:[#allocation2 + $0x8] sm:$0xff] %vm82, %v159
    $region37: #{basic_transformer_block.26} parent=1 // pred_fallthru
      _
    %v162 = vld [vmem:[#allocation2] sm:$0xff]
    %v163 = vld [vmem:[#allocation2 + $0x8] sm:$0xff]
    %v164 = vld [vmem:[#allocation9] sm:$0xf]
    %v165 = vld [vmem:[#allocation9 + $0x4] sm:$0xf]
    %v166 = vld [vmem:[#allocation9 + $0x8] sm:$0xf]
    %v167 = vld [vmem:[#allocation9 + $0xc] sm:$0xf]
    %v172 = vunpack.c.l.b16 %v164
    %v173 = vunpack.c.l.b16 %v165
    %v174 = vunpack.c.l.b16 %v166
    %v175 = vunpack.c.l.b16 %v167
    %v176 = vpack.c.b16 %v173, %v172
    %v177 = vpack.c.b16 %v175, %v174
    %vm180 = vcmask 261120
    %v182 = vsel %vm180, %v162, 0
    %v185 = vsel %vm180, %v163, 0
    %187 = vmatprep.subr.bf16.mxu0 0
    %188 = vmatpush1.bf16.msra.mxu0 %v176
    %189 = vmatprep.subr.bf16.mxu0 0
    %190 = vmatpush1.bf16.msra.mxu0 %v177
    %191 = vmatprep.subr.bf16.mxu0 0
    %192 = vmatpush1.bf16.msra.mxu0 0
    %193 = vmatprep.subr.bf16.mxu0 0
    %194 = vmatpush1.bf16.msra.mxu0 0
    %195 = vmatprep.subr.bf16.mxu0 0
    %196 = vmatpush1.bf16.msra.mxu0 0
    %197 = vmatprep.subr.bf16.mxu0 0
    %198 = vmatpush1.bf16.msra.mxu0 0
    %199 = vmatprep.subr.bf16.mxu0 0
    %200 = vmatpush1.bf16.msra.mxu0 0
    %201 = vmatprep.subr.bf16.mxu0 0
    %202 = vmatpush1.bf16.msra.mxu0 0
    %203 = vmatprep.subr.bf16.mxu0 0
    %204 = vmatpush1.bf16.msra.mxu0 0
    %205 = vmatprep.subr.bf16.mxu0 0
    %206 = vmatpush1.bf16.msra.mxu0 0
    %207 = vmatprep.subr.bf16.mxu0 0
    %208 = vmatpush1.bf16.msra.mxu0 0
    %209 = vmatprep.subr.bf16.mxu0 0
    %210 = vmatpush1.bf16.msra.mxu0 0
    %211 = vmatprep.subr.bf16.mxu0 0
    %212 = vmatpush1.bf16.msra.mxu0 0
    %213 = vmatprep.subr.bf16.mxu0 0
    %214 = vmatpush1.bf16.msra.mxu0 0
    %215 = vmatprep.subr.bf16.mxu0 0
    %216 = vmatpush1.bf16.msra.mxu0 0
    %217 = vmatprep.subr.bf16.mxu0 0
    %218 = vmatpush1.bf16.msra.mxu0 0
    %219 = vmatprep.mubr.bf16.mxu0 0
    %220 = vmatmul.mubr.bf16.gmra.mrb[0].mxu0 %v182
    %v221 = vpop.f32.mrb[0].mxu0
    %v222 = vadd.f32 0.0, %v221
    %v223 = vpop.f32.mrb[0].mxu0
    %v224 = vpop.f32.mrb[0].mxu0
    %v225 = vadd.f32 0.0, %v224
    %v226 = vpop.f32.mrb[0].mxu0
    %227 = vmatprep.mubr.bf16.mxu0 0
    %228 = vmatmul.mubr.bf16.gmra.mrb[0].mxu0 %v185
    %v229 = vpop.f32.mrb[0].mxu0
    %v230 = vadd.f32 0.0, %v229
    %v231 = vpop.f32.mrb[0].mxu0
    %v232 = vpop.f32.mrb[0].mxu0
    %v233 = vadd.f32 0.0, %v232
    %v234 = vpop.f32.mrb[0].mxu0
    %235 = vdwg.mxu0
    %v236 = vpack.c.bf16 %v225, %v222
    %v237 = vpack.c.bf16 %v233, %v230
    %v240 = vunpack.c.l.b16 %v236
    %v241 = vunpack.c.h.b16 %v236
    %v242 = vunpack.c.l.b16 %v237
    %v243 = vunpack.c.h.b16 %v237
    %v244 = vpack.c.b16 %v240, %v240
    %v245 = vpack.c.b16 %v241, %v241
    %v246 = vpack.c.b16 %v242, %v242
    %v247 = vpack.c.b16 %v243, %v243
    %vm252 = vcmask 257024
    %253 = vst.msk [vmem:[#allocation11] sm:$0xf] %vm252, %v244
    %254 = vst.msk [vmem:[#allocation11 + $0x4] sm:$0xf] %vm252, %v245
    %255 = vst.msk [vmem:[#allocation11 + $0x8] sm:$0xf] %vm252, %v246
    %256 = vst.msk [vmem:[#allocation11 + $0xc] sm:$0xf] %vm252, %v247
    // Predicated region
    $region38: #{basic_transformer_block.26} parent=1 // pred_check
      _
    $region39: #{basic_transformer_block.26} parent=1 // pred_check_branch
      %258 = sbr.rel (0) target = $region41
    $region40: #{basic_transformer_block.26} parent=1 // pred_region
      %s260 = ssub.s32 256, 256
      %261 = vsyncadd [#allocation5], %s260
      %s262 = sshll.u32 [#allocation11], 4
      %s263 = int_to_ptr.vmem [resolvable:$true] %s262
      %268 = dma.vmem_to_hbm [thread:$0]  %s263, 256, %s4, [#allocation5], 64, 64, 4
    $region41: #{basic_transformer_block.26} parent=1 // pred_fallthru
      _
    // Predicated region
    $region42: #{basic_transformer_block.26} parent=1 // pred_check
      _
    $region43: #{basic_transformer_block.26} parent=1 // pred_check_branch
      %270 = sbr.rel (0) target = $region45
    $region44: #{basic_transformer_block.26} parent=1 // pred_region
      %271 = dma.done [#allocation5], 256
    $region45: #{basic_transformer_block.26} parent=1 // pred_fallthru
      _
    %272 = vsyncpa [#allocation4], 1
    %273 = vsyncpa [#allocation7], 1
    %274 = vsyncpa [#allocation10], 1
    %275 = vsyncpa [#allocation5], 1

// kernel: basic_transformer_block.27
$region0: #{basic_transformer_block.27}
  #allocation0 [shape = 'u32[]', space=smem, size = 0x4, offset = 0x4, fixed_abs, tag = 'smem constant byte address 0x4 - core index']
  #allocation1 [shape = 'u32[144,128]{1,0:T(1,128)}', space=vmem, size = 0x12000, scoped, tag = 'internal scratch']
  %s0 = inlined_call_operand.hbm [shape: bf16[16,32], index: 0, kind: input, shape index: {}]
  %s1 = inlined_call_operand.hbm [shape: bf16[32,64], index: 1, kind: input, shape index: {}]
  %s2 = inlined_call_operand.hbm [shape: bf16[16,64], index: 2, kind: output, shape index: {}]
  %s3 = sld [smem:[#allocation0]]
  $region26: #{basic_transformer_block.27} parent=0
    _
  %s5 = ssub.s32 1, %s3
  %s6 = scalar_select 0, %s5, %s3
  $region1: #{basic_transformer_block.27} parent=0
    #allocation2 [shape = 'u8[4096]{0}', space=vmem, size = 0x1000, scoped, tag = 'input window, operand 0, single buffered']
    #allocation3 [shape = 's32[1]{0}', space=sflag, size = 0x4, scoped, tag = 'scoped memory for basic_transformer_block.27']
    #allocation4 [shape = 's32[1]{0}', space=sflag, size = 0x4, scoped, tag = 'scoped memory for basic_transformer_block.27']
    #allocation5 [shape = 'u8[8192]{0}', space=vmem, size = 0x2000, scoped, tag = 'input window, operand 1, single buffered']
    #allocation6 [shape = 's32[1]{0}', space=sflag, size = 0x4, scoped, tag = 'scoped memory for basic_transformer_block.27']
    #allocation7 [shape = 'u8[4096]{0}', space=vmem, size = 0x1000, scoped, tag = 'output window, operand 0, single buffered']
    %7 = vsyncpa [#allocation3], 0
    %8 = vsyncpa [#allocation6], 0
    %9 = vsyncpa [#allocation4], 0
    // Predicated region
    $region2: #{basic_transformer_block.27} parent=1 // pred_check
      _
    $region3: #{basic_transformer_block.27} parent=1 // pred_check_branch
      %11 = sbr.rel (0) target = $region5
    $region4: #{basic_transformer_block.27} parent=1 // pred_region
      %s13 = ssub.s32 128, 128
      %14 = vsyncadd [#allocation3], %s13
      %s15 = sshll.u32 [#allocation2], 4
      %s16 = int_to_ptr.vmem [resolvable:$true] %s15
      %21 = dma.hbm_to_vmem [thread:$0]  %s0, 128, %s16, [#allocation3], 64, 64, 4
    $region5: #{basic_transformer_block.27} parent=1 // pred_fallthru
      _
    // Predicated region
    $region6: #{basic_transformer_block.27} parent=1 // pred_check
      _
    $region7: #{basic_transformer_block.27} parent=1 // pred_check_branch
      %23 = sbr.rel (0) target = $region9
    $region8: #{basic_transformer_block.27} parent=1 // pred_region
      %s25 = ssub.s32 256, 256
      %26 = vsyncadd [#allocation6], %s25
      %s27 = sshll.u32 [#allocation5], 4
      %s28 = int_to_ptr.vmem [resolvable:$true] %s27
      %33 = dma.hbm_to_vmem [thread:$0]  %s1, 256, %s28, [#allocation6], 64, 64, 4
    $region9: #{basic_transformer_block.27} parent=1 // pred_fallthru
      _
    // Predicated region
    $region10: #{basic_transformer_block.27} parent=1 // pred_check
      _
    $region11: #{basic_transformer_block.27} parent=1 // pred_check_branch
      %35 = sbr.rel (0) target = $region13
    $region12: #{basic_transformer_block.27} parent=1 // pred_region
      %36 = dma.done [#allocation3], 128
    $region13: #{basic_transformer_block.27} parent=1 // pred_fallthru
      _
    // Predicated region
    $region14: #{basic_transformer_block.27} parent=1 // pred_check
      _
    $region15: #{basic_transformer_block.27} parent=1 // pred_check_branch
      %38 = sbr.rel (0) target = $region17
    $region16: #{basic_transformer_block.27} parent=1 // pred_region
      %39 = dma.done [#allocation6], 256
    $region17: #{basic_transformer_block.27} parent=1 // pred_fallthru
      _
    %v41 = vld [vmem:[#allocation2] sm:$0xf]
    %v42 = vld [vmem:[#allocation2 + $0x4] sm:$0xf]
    %v43 = vld [vmem:[#allocation5] sm:$0xf]
    %v44 = vld [vmem:[#allocation5 + $0x4] sm:$0xf]
    %v45 = vld [vmem:[#allocation5 + $0x8] sm:$0xf]
    %v46 = vld [vmem:[#allocation5 + $0xc] sm:$0xf]
    %v49 = vunpack.c.l.b16 %v41
    %v50 = vunpack.c.l.b16 %v42
    %v51 = vpack.c.b16 %v50, %v49
    %v56 = vunpack.c.l.b16 %v43
    %v57 = vunpack.c.l.b16 %v44
    %v58 = vunpack.c.l.b16 %v45
    %v59 = vunpack.c.l.b16 %v46
    %v60 = vpack.c.b16 %v57, %v56
    %v61 = vpack.c.b16 %v59, %v58
    %vm64 = vcmask 261120
    %v66 = vsel %vm64, %v51, 0
    %68 = vmatprep.subr.bf16.mxu0 0
    %69 = vmatpush1.bf16.msra.mxu0 %v60
    %70 = vmatprep.subr.bf16.mxu0 0
    %71 = vmatpush1.bf16.msra.mxu0 %v61
    %72 = vmatprep.subr.bf16.mxu0 0
    %73 = vmatpush1.bf16.msra.mxu0 0
    %74 = vmatprep.subr.bf16.mxu0 0
    %75 = vmatpush1.bf16.msra.mxu0 0
    %76 = vmatprep.subr.bf16.mxu0 0
    %77 = vmatpush1.bf16.msra.mxu0 0
    %78 = vmatprep.subr.bf16.mxu0 0
    %79 = vmatpush1.bf16.msra.mxu0 0
    %80 = vmatprep.subr.bf16.mxu0 0
    %81 = vmatpush1.bf16.msra.mxu0 0
    %82 = vmatprep.subr.bf16.mxu0 0
    %83 = vmatpush1.bf16.msra.mxu0 0
    %84 = vmatprep.subr.bf16.mxu0 0
    %85 = vmatpush1.bf16.msra.mxu0 0
    %86 = vmatprep.subr.bf16.mxu0 0
    %87 = vmatpush1.bf16.msra.mxu0 0
    %88 = vmatprep.subr.bf16.mxu0 0
    %89 = vmatpush1.bf16.msra.mxu0 0
    %90 = vmatprep.subr.bf16.mxu0 0
    %91 = vmatpush1.bf16.msra.mxu0 0
    %92 = vmatprep.subr.bf16.mxu0 0
    %93 = vmatpush1.bf16.msra.mxu0 0
    %94 = vmatprep.subr.bf16.mxu0 0
    %95 = vmatpush1.bf16.msra.mxu0 0
    %96 = vmatprep.subr.bf16.mxu0 0
    %97 = vmatpush1.bf16.msra.mxu0 0
    %98 = vmatprep.subr.bf16.mxu0 0
    %99 = vmatpush1.bf16.msra.mxu0 0
    %100 = vmatprep.mubr.bf16.mxu0 0
    %101 = vmatmul.mubr.bf16.gmra.mrb[0].mxu0 %v66
    %v102 = vpop.f32.mrb[0].mxu0
    %v103 = vadd.f32 0.0, %v102
    %v104 = vpop.f32.mrb[0].mxu0
    %v105 = vpop.f32.mrb[0].mxu0
    %v106 = vadd.f32 0.0, %v105
    %v107 = vpop.f32.mrb[0].mxu0
    %108 = vdwg.mxu0
    %v109 = vpack.c.bf16 %v106, %v103
    %v111 = vunpack.c.l.b16 %v109
    %v112 = vunpack.c.h.b16 %v109
    %v113 = vpack.c.b16 %v111, %v111
    %v114 = vpack.c.b16 %v112, %v112
    %vm117 = vcmask 519168
    %118 = vst.msk [vmem:[#allocation7] sm:$0xf] %vm117, %v113
    %119 = vst.msk [vmem:[#allocation7 + $0x4] sm:$0xf] %vm117, %v114
    // Predicated region
    $region18: #{basic_transformer_block.27} parent=1 // pred_check
      _
    $region19: #{basic_transformer_block.27} parent=1 // pred_check_branch
      %121 = sbr.rel (0) target = $region21
    $region20: #{basic_transformer_block.27} parent=1 // pred_region
      %s123 = ssub.s32 128, 128
      %124 = vsyncadd [#allocation4], %s123
      %s125 = sshll.u32 [#allocation7], 4
      %s126 = int_to_ptr.vmem [resolvable:$true] %s125
      %131 = dma.vmem_to_hbm [thread:$0]  %s126, 128, %s2, [#allocation4], 64, 64, 4
    $region21: #{basic_transformer_block.27} parent=1 // pred_fallthru
      _
    // Predicated region
    $region22: #{basic_transformer_block.27} parent=1 // pred_check
      _
    $region23: #{basic_transformer_block.27} parent=1 // pred_check_branch
      %133 = sbr.rel (0) target = $region25
    $region24: #{basic_transformer_block.27} parent=1 // pred_region
      %134 = dma.done [#allocation4], 128
    $region25: #{basic_transformer_block.27} parent=1 // pred_fallthru
      _
    %135 = vsyncpa [#allocation3], 1
    %136 = vsyncpa [#allocation6], 1
    %137 = vsyncpa [#allocation4], 1

// kernel: basic_transformer_block.28
$region0: #{basic_transformer_block.28}
  #allocation0 [shape = 'u32[]', space=smem, size = 0x4, offset = 0x4, fixed_abs, tag = 'smem constant byte address 0x4 - core index']
  #allocation1 [shape = 'u32[144,128]{1,0:T(1,128)}', space=vmem, size = 0x12000, scoped, tag = 'internal scratch']
  %s0 = inlined_call_operand.hbm [shape: bf16[2,16,32], index: 0, kind: input, shape index: {}]
  %s1 = inlined_call_operand.hbm [shape: bf16[2,8,64], index: 1, kind: input, shape index: {}]
  %s2 = inlined_call_operand.hbm [shape: bf16[2,16,32], index: 2, kind: output, shape index: {}]
  %s3 = sld [smem:[#allocation0]]
  $region49: #{basic_transformer_block.28} parent=0
    _
  %s5 = ssub.s32 1, %s3
  %s6 = scalar_select 0, %s5, %s3
  $region1: #{basic_transformer_block.28} parent=0
    #allocation2 [shape = 'u8[8192]{0}', space=vmem, size = 0x2000, scoped, tag = 'input window, operand 0']
    #allocation3 [shape = 's32[2]{0}', space=sflag, size = 0x8, scoped, tag = 'scoped memory for basic_transformer_block.28']
    #allocation4 [shape = 's32[2]{0}', space=sflag, size = 0x8, scoped, tag = 'scoped memory for basic_transformer_block.28']
    #allocation5 [shape = 'u8[4096]{0}', space=vmem, size = 0x1000, scoped, tag = 'input window, operand 1']
    #allocation6 [shape = 's32[2]{0}', space=sflag, size = 0x8, scoped, tag = 'scoped memory for basic_transformer_block.28']
    #allocation7 [shape = 'u8[8192]{0}', space=vmem, size = 0x2000, scoped, tag = 'output window, operand 0']
    %7 = vsyncpa [#allocation3], 0
    %s8 = scalar_lea.sflag [#allocation3], 1
    %9 = vsyncpa %s8, 0
    %10 = vsyncpa [#allocation6], 0
    %s11 = scalar_lea.sflag [#allocation6], 1
    %12 = vsyncpa %s11, 0
    %13 = vsyncpa [#allocation4], 0
    %s14 = scalar_lea.sflag [#allocation4], 1
    %15 = vsyncpa %s14, 0
    loop: start=0, step=1, limit=4
    $region2: #{basic_transformer_block.28} parent=1 // loop_pre_header
      _
    $region3: #{basic_transformer_block.28} parent=1 // loop_header
      %s17 = sphi 0, %s21
      %p18 = scmp.ge.s32.totalorder %s17, 4
      %s27 = sphi 0, %s29
      %s30 = sphi 0, %s27
      %s31 = sphi 0, %s30
      %s47 = sphi 0, %s31
      %s53 = sphi 0, %s55
      %s56 = sphi 0, %s53
      %s57 = sphi 0, %s56
      %s73 = sphi 0, %s57
      %s79 = sphi 0, %s81
      %s82 = sphi 0, %s79
      %s83 = sphi 0, %s82
      %s99 = sphi 0, %s83
    $region4: #{basic_transformer_block.28} parent=1 // loop_header_branch
      %20 = sbr.rel (%p18) target = $region8
    $region5: #{basic_transformer_block.28} parent=1 // loop_body
      %s22 = ssub.s32 %s17, 1
      %s23 = ssub.s32 %s17, 2
      %s24 = sadd.s32 %s17, 1
      %s25 = ssub.s32 %s17, %s24
      %p26 = scmp.eq.s32.totalorder %s25, 0
      %s28 = sadd.s32 %s27, 1
      %s29 = scalar_select %p26, %s27, %s28
      %p32 = pneg %p26
      %p33 = scmp.eq.s32.totalorder %s17, 1
      %p34 = por %p32, %p33
      %p35 = scmp.ne.s32.totalorder %s27, %s30
      %p36 = scmp.eq.s32.totalorder %s17, 0
      %p37 = por %p35, %p36
      %p38 = scmp.ne.s32.totalorder %s27, %s30
      %p39 = scmp.eq.s32.totalorder %s22, 1
      %p40 = por %p38, %p39
      %p41 = scmp.ne.s32.totalorder %s30, %s31
      %p42 = scmp.eq.s32.totalorder %s22, 0
      %p43 = por %p41, %p42
      %p44 = scmp.ne.s32.totalorder %s30, %s31
      %p45 = scmp.eq.s32.totalorder %s23, 1
      %p46 = por %p44, %p45
      %p48 = scmp.ne.s32.totalorder %s31, %s47
      %p49 = scmp.eq.s32.totalorder %s23, 0
      %p50 = por %p48, %p49
      %s51 = ssub.s32 %s17, %s24
      %p52 = scmp.eq.s32.totalorder %s51, 0
      %s54 = sadd.s32 %s53, 1
      %s55 = scalar_select %p52, %s53, %s54
      %p58 = pneg %p52
      %p59 = scmp.eq.s32.totalorder %s17, 1
      %p60 = por %p58, %p59
      %p61 = scmp.ne.s32.totalorder %s53, %s56
      %p62 = scmp.eq.s32.totalorder %s17, 0
      %p63 = por %p61, %p62
      %p64 = scmp.ne.s32.totalorder %s53, %s56
      %p65 = scmp.eq.s32.totalorder %s22, 1
      %p66 = por %p64, %p65
      %p67 = scmp.ne.s32.totalorder %s56, %s57
      %p68 = scmp.eq.s32.totalorder %s22, 0
      %p69 = por %p67, %p68
      %p70 = scmp.ne.s32.totalorder %s56, %s57
      %p71 = scmp.eq.s32.totalorder %s23, 1
      %p72 = por %p70, %p71
      %p74 = scmp.ne.s32.totalorder %s57, %s73
      %p75 = scmp.eq.s32.totalorder %s23, 0
      %p76 = por %p74, %p75
      %s77 = ssub.s32 %s17, %s24
      %p78 = scmp.eq.s32.totalorder %s77, 0
      %s80 = sadd.s32 %s79, 1
      %s81 = scalar_select %p78, %s79, %s80
      %p84 = pneg %p78
      %p85 = scmp.eq.s32.totalorder %s17, 1
      %p86 = por %p84, %p85
      %p87 = scmp.ne.s32.totalorder %s79, %s82
      %p88 = scmp.eq.s32.totalorder %s17, 0
      %p89 = por %p87, %p88
      %p90 = scmp.ne.s32.totalorder %s79, %s82
      %p91 = scmp.eq.s32.totalorder %s22, 1
      %p92 = por %p90, %p91
      %p93 = scmp.ne.s32.totalorder %s82, %s83
      %p94 = scmp.eq.s32.totalorder %s22, 0
      %p95 = por %p93, %p94
      %p96 = scmp.ne.s32.totalorder %s82, %s83
      %p97 = scmp.eq.s32.totalorder %s23, 1
      %p98 = por %p96, %p97
      %p100 = scmp.ne.s32.totalorder %s83, %s99
      %p101 = scmp.eq.s32.totalorder %s23, 0
      %p102 = por %p100, %p101
      %p103 = scmp.le.s32.totalorder 1, %s17
      %p104 = scmp.lt.s32.totalorder %s17, 3
      %p105 = pnand %p103, %p104
      %p106 = pneg %p105
      // Predicated region
      $region9: #{basic_transformer_block.28} parent=5 // pred_check
        _
      $region10: #{basic_transformer_block.28} parent=5 // pred_check_branch
        %108 = sbr.rel (%p105) target = $region12
      $region11: #{basic_transformer_block.28} parent=5 // pred_region
        %s109 = ssub.s32 %s17, 1
      $region12: #{basic_transformer_block.28} parent=5 // pred_fallthru
        _
      %p110 = scmp.lt.s32.totalorder %s17, 2
      // Predicated region
      $region13: #{basic_transformer_block.28} parent=5 // pred_check
        %p111 = pneg %p110
      $region14: #{basic_transformer_block.28} parent=5 // pred_check_branch
        %113 = sbr.rel (%p111) target = $region16
      $region15: #{basic_transformer_block.28} parent=5 // pred_region
        // Predicated region
        $region17: #{basic_transformer_block.28} parent=15 // pred_check
          %p114 = pneg %p37
        $region18: #{basic_transformer_block.28} parent=15 // pred_check_branch
          %116 = sbr.rel (%p114) target = $region20
        $region19: #{basic_transformer_block.28} parent=15 // pred_region
          %s117 = sand.u32 %s27, 1
          %s118 = scalar_lea.sflag [#allocation3], %s117
          %s119 = sand.u32 %s27, 1
          %s120 = smul.addr %s119, 8
          %s121 = scalar_lea.vmem [#allocation2], %s120
          %s123 = ssub.s32 128, 128
          %124 = vsyncadd %s118, %s123
          %s125 = smul.addr %s17, 2
          %s126 = smul.addr %s125, 64
          %s127 = scalar_lea.hbm %s0, %s126
          %s128 = sshll.u32 %s121, 4
          %s129 = int_to_ptr.vmem [resolvable:$true] %s128
          %134 = dma.hbm_to_vmem [thread:$0]  %s127, 128, %s129, %s118, 64, 64, 4
        $region20: #{basic_transformer_block.28} parent=15 // pred_fallthru
          _
        // Predicated region
        $region21: #{basic_transformer_block.28} parent=15 // pred_check
          %p135 = pneg %p63
        $region22: #{basic_transformer_block.28} parent=15 // pred_check_branch
          %137 = sbr.rel (%p135) target = $region24
        $region23: #{basic_transformer_block.28} parent=15 // pred_region
          %s138 = sand.u32 %s53, 1
          %s139 = scalar_lea.sflag [#allocation6], %s138
          %s140 = sand.u32 %s53, 1
          %s141 = smul.addr %s140, 4
          %s142 = scalar_lea.vmem [#allocation5], %s141
          %s144 = ssub.s32 64, 64
          %145 = vsyncadd %s139, %s144
          %s146 = smul.addr %s17, 64
          %s147 = scalar_lea.hbm %s1, %s146
          %s149 = sshll.u32 %s142, 4
          %s150 = int_to_ptr.vmem [resolvable:$true] %s149
          %152 = dma.hbm_to_vmem [thread:$0]  %s147, 64, %s150, %s139
        $region24: #{basic_transformer_block.28} parent=15 // pred_fallthru
          _
      $region16: #{basic_transformer_block.28} parent=5 // pred_fallthru
        _
      %p153 = scmp.le.s32.totalorder 1, %s17
      %p154 = scmp.lt.s32.totalorder %s17, 3
      %p155 = pnand %p153, %p154
      %p156 = pneg %p155
      // Predicated region
      $region25: #{basic_transformer_block.28} parent=5 // pred_check
        _
      $region26: #{basic_transformer_block.28} parent=5 // pred_check_branch
        %158 = sbr.rel (%p155) target = $region28
      $region27: #{basic_transformer_block.28} parent=5 // pred_region
        %s159 = ssub.s32 %s17, 1
        %s160 = sand.u32 %s30, 1
        %s161 = scalar_lea.sflag [#allocation3], %s160
        %s162 = sand.u32 %s30, 1
        %s163 = smul.addr %s162, 8
        %s164 = scalar_lea.vmem [#allocation2], %s163
        // Predicated region
        $region29: #{basic_transformer_block.28} parent=27 // pred_check
          %p165 = pneg %p43
        $region30: #{basic_transformer_block.28} parent=27 // pred_check_branch
          %167 = sbr.rel (%p165) target = $region32
        $region31: #{basic_transformer_block.28} parent=27 // pred_region
          %168 = dma.done %s161, 128
        $region32: #{basic_transformer_block.28} parent=27 // pred_fallthru
          _
        %s169 = sand.u32 %s56, 1
        %s170 = scalar_lea.sflag [#allocation6], %s169
        %s171 = sand.u32 %s56, 1
        %s172 = smul.addr %s171, 4
        %s173 = scalar_lea.vmem [#allocation5], %s172
        // Predicated region
        $region33: #{basic_transformer_block.28} parent=27 // pred_check
          %p174 = pneg %p69
        $region34: #{basic_transformer_block.28} parent=27 // pred_check_branch
          %176 = sbr.rel (%p174) target = $region36
        $region35: #{basic_transformer_block.28} parent=27 // pred_region
          %177 = dma.done %s170, 64
        $region36: #{basic_transformer_block.28} parent=27 // pred_fallthru
          _
        %s178 = sand.u32 %s30, 1
        %s179 = scalar_lea.sflag [#allocation3], %s178
        %s180 = sand.u32 %s30, 1
        %s181 = smul.addr %s180, 8
        %s182 = scalar_lea.vmem [#allocation2], %s181
        %p183 = pneg %p43
        %p184 = pneg %p40
        %s185 = sand.u32 %s56, 1
        %s186 = scalar_lea.sflag [#allocation6], %s185
        %s187 = sand.u32 %s56, 1
        %s188 = smul.addr %s187, 4
        %s189 = scalar_lea.vmem [#allocation5], %s188
        %p190 = pneg %p69
        %p191 = pneg %p66
        %p192 = pneg %p95
        %p193 = pneg %p92
        %s194 = sand.u32 %s82, 1
        %s195 = scalar_lea.sflag [#allocation4], %s194
        %s196 = sand.u32 %s82, 1
        %s197 = smul.addr %s196, 8
        %s198 = scalar_lea.vmem [#allocation7], %s197
        %v200 = vld [vmem:[%s164] sm:$0xf]
        %v201 = vld [vmem:[%s164 + $0x4] sm:$0xf]
        %v202 = vld [vmem:[%s173] sm:$0xf]
        %205 = vrot.lane.b32.xlu0 %v200, 120
        %v206 = vpop.permute.xlu0 %205
        %207 = vrot.lane.b32.xlu0 %v201, 120
        %v208 = vpop.permute.xlu0 %207
        %209 = vrot.lane.b32.xlu0 %v200, 112
        %v210 = vpop.permute.xlu0 %209
        %211 = vrot.lane.b32.xlu0 %v201, 112
        %v212 = vpop.permute.xlu0 %211
        %213 = vrot.lane.b32.xlu0 %v200, 104
        %v214 = vpop.permute.xlu0 %213
        %215 = vrot.lane.b32.xlu0 %v201, 104
        %v216 = vpop.permute.xlu0 %215
        %218 = vrot.lane.b32.xlu0 %v202, 120
        %v219 = vpop.permute.xlu0 %218
        %220 = vrot.lane.b32.xlu0 %v202, 112
        %v221 = vpop.permute.xlu0 %220
        %222 = vrot.lane.b32.xlu0 %v202, 104
        %v223 = vpop.permute.xlu0 %222
        %v224 = vunpack.c.l.b16 %v200
        %v225 = vunpack.c.l.b16 %v201
        %v226 = vpack.c.b16 %v225, %v224
        %vm227 = vcmask 64512
        %v229 = vsel %vm227, %v226, 0
        %v232 = vsel %vm227, %v202, 0
        %234 = vmatprep.subr.bf16.mxu0 0
        %235 = vmatpush1.bf16.xpose.msra.mxu0 %v232
        %236 = vmatprep.subr.bf16.mxu0 0
        %237 = vmatpush1.bf16.xpose.msra.mxu0 0
        %238 = vmatprep.subr.bf16.mxu0 0
        %239 = vmatpush1.bf16.xpose.msra.mxu0 0
        %240 = vmatprep.subr.bf16.mxu0 0
        %241 = vmatpush1.bf16.xpose.msra.mxu0 0
        %242 = vmatprep.subr.bf16.mxu0 0
        %243 = vmatpush1.bf16.xpose.msra.mxu0 0
        %244 = vmatprep.subr.bf16.mxu0 0
        %245 = vmatpush1.bf16.xpose.msra.mxu0 0
        %246 = vmatprep.subr.bf16.mxu0 0
        %247 = vmatpush1.bf16.xpose.msra.mxu0 0
        %248 = vmatprep.subr.bf16.mxu0 0
        %249 = vmatpush1.bf16.xpose.msra.mxu0 0
        %250 = vmatprep.subr.bf16.mxu0 0
        %251 = vmatpush1.bf16.xpose.msra.mxu0 0
        %252 = vmatprep.subr.bf16.mxu0 0
        %253 = vmatpush1.bf16.xpose.msra.mxu0 0
        %254 = vmatprep.subr.bf16.mxu0 0
        %255 = vmatpush1.bf16.xpose.msra.mxu0 0
        %256 = vmatprep.subr.bf16.mxu0 0
        %257 = vmatpush1.bf16.xpose.msra.mxu0 0
        %258 = vmatprep.subr.bf16.mxu0 0
        %259 = vmatpush1.bf16.xpose.msra.mxu0 0
        %260 = vmatprep.subr.bf16.mxu0 0
        %261 = vmatpush1.bf16.xpose.msra.mxu0 0
        %262 = vmatprep.subr.bf16.mxu0 0
        %263 = vmatpush1.bf16.xpose.msra.mxu0 0
        %264 = vmatprep.subr.bf16.mxu0 0
        %265 = vmatpush1.bf16.xpose.msra.mxu0 0
        %266 = vmatprep.mubr.bf16.mxu0 0
        %267 = vmatmul.mubr.bf16.gmra.mrb[0].mxu0 %v229
        %v268 = vpop.f32.mrb[0].mxu0
        %v269 = vadd.f32 0.0, %v268
        %v270 = vpop.f32.mrb[0].mxu0
        %v271 = vpop.f32.mrb[0].mxu0
        %v272 = vadd.f32 0.0, %v271
        %v273 = vpop.f32.mrb[0].mxu0
        %274 = vdwg.mxu0
        %v275 = vunpack.c.l.b16 %v206
        %v276 = vunpack.c.l.b16 %v208
        %v277 = vpack.c.b16 %v276, %v275
        %v279 = vsel %vm227, %v277, 0
        %v282 = vsel %vm227, %v219, 0
        %284 = vmatprep.subr.bf16.mxu0 0
        %285 = vmatpush1.bf16.xpose.msra.mxu0 %v282
        %286 = vmatprep.subr.bf16.mxu0 0
        %287 = vmatpush1.bf16.xpose.msra.mxu0 0
        %288 = vmatprep.subr.bf16.mxu0 0
        %289 = vmatpush1.bf16.xpose.msra.mxu0 0
        %290 = vmatprep.subr.bf16.mxu0 0
        %291 = vmatpush1.bf16.xpose.msra.mxu0 0
        %292 = vmatprep.subr.bf16.mxu0 0
        %293 = vmatpush1.bf16.xpose.msra.mxu0 0
        %294 = vmatprep.subr.bf16.mxu0 0
        %295 = vmatpush1.bf16.xpose.msra.mxu0 0
        %296 = vmatprep.subr.bf16.mxu0 0
        %297 = vmatpush1.bf16.xpose.msra.mxu0 0
        %298 = vmatprep.subr.bf16.mxu0 0
        %299 = vmatpush1.bf16.xpose.msra.mxu0 0
        %300 = vmatprep.subr.bf16.mxu0 0
        %301 = vmatpush1.bf16.xpose.msra.mxu0 0
        %302 = vmatprep.subr.bf16.mxu0 0
        %303 = vmatpush1.bf16.xpose.msra.mxu0 0
        %304 = vmatprep.subr.bf16.mxu0 0
        %305 = vmatpush1.bf16.xpose.msra.mxu0 0
        %306 = vmatprep.subr.bf16.mxu0 0
        %307 = vmatpush1.bf16.xpose.msra.mxu0 0
        %308 = vmatprep.subr.bf16.mxu0 0
        %309 = vmatpush1.bf16.xpose.msra.mxu0 0
        %310 = vmatprep.subr.bf16.mxu0 0
        %311 = vmatpush1.bf16.xpose.msra.mxu0 0
        %312 = vmatprep.subr.bf16.mxu0 0
        %313 = vmatpush1.bf16.xpose.msra.mxu0 0
        %314 = vmatprep.subr.bf16.mxu0 0
        %315 = vmatpush1.bf16.xpose.msra.mxu0 0
        %316 = vmatprep.mubr.bf16.mxu0 0
        %317 = vmatmul.mubr.bf16.gmra.mrb[0].mxu0 %v279
        %v318 = vpop.f32.mrb[0].mxu0
        %v319 = vadd.f32 0.0, %v318
        %v320 = vpop.f32.mrb[0].mxu0
        %v321 = vpop.f32.mrb[0].mxu0
        %v322 = vadd.f32 0.0, %v321
        %v323 = vpop.f32.mrb[0].mxu0
        %324 = vdwg.mxu0
        %v325 = vunpack.c.l.b16 %v210
        %v326 = vunpack.c.l.b16 %v212
        %v327 = vpack.c.b16 %v326, %v325
        %v329 = vsel %vm227, %v327, 0
        %v332 = vsel %vm227, %v221, 0
        %334 = vmatprep.subr.bf16.mxu0 0
        %335 = vmatpush1.bf16.xpose.msra.mxu0 %v332
        %336 = vmatprep.subr.bf16.mxu0 0
        %337 = vmatpush1.bf16.xpose.msra.mxu0 0
        %338 = vmatprep.subr.bf16.mxu0 0
        %339 = vmatpush1.bf16.xpose.msra.mxu0 0
        %340 = vmatprep.subr.bf16.mxu0 0
        %341 = vmatpush1.bf16.xpose.msra.mxu0 0
        %342 = vmatprep.subr.bf16.mxu0 0
        %343 = vmatpush1.bf16.xpose.msra.mxu0 0
        %344 = vmatprep.subr.bf16.mxu0 0
        %345 = vmatpush1.bf16.xpose.msra.mxu0 0
        %346 = vmatprep.subr.bf16.mxu0 0
        %347 = vmatpush1.bf16.xpose.msra.mxu0 0
        %348 = vmatprep.subr.bf16.mxu0 0
        %349 = vmatpush1.bf16.xpose.msra.mxu0 0
        %350 = vmatprep.subr.bf16.mxu0 0
        %351 = vmatpush1.bf16.xpose.msra.mxu0 0
        %352 = vmatprep.subr.bf16.mxu0 0
        %353 = vmatpush1.bf16.xpose.msra.mxu0 0
        %354 = vmatprep.subr.bf16.mxu0 0
        %355 = vmatpush1.bf16.xpose.msra.mxu0 0
        %356 = vmatprep.subr.bf16.mxu0 0
        %357 = vmatpush1.bf16.xpose.msra.mxu0 0
        %358 = vmatprep.subr.bf16.mxu0 0
        %359 = vmatpush1.bf16.xpose.msra.mxu0 0
        %360 = vmatprep.subr.bf16.mxu0 0
        %361 = vmatpush1.bf16.xpose.msra.mxu0 0
        %362 = vmatprep.subr.bf16.mxu0 0
        %363 = vmatpush1.bf16.xpose.msra.mxu0 0
        %364 = vmatprep.subr.bf16.mxu0 0
        %365 = vmatpush1.bf16.xpose.msra.mxu0 0
        %366 = vmatprep.mubr.bf16.mxu0 0
        %367 = vmatmul.mubr.bf16.gmra.mrb[0].mxu0 %v329
        %v368 = vpop.f32.mrb[0].mxu0
        %v369 = vadd.f32 0.0, %v368
        %v370 = vpop.f32.mrb[0].mxu0
        %v371 = vpop.f32.mrb[0].mxu0
        %v372 = vadd.f32 0.0, %v371
        %v373 = vpop.f32.mrb[0].mxu0
        %374 = vdwg.mxu0
        %v375 = vunpack.c.l.b16 %v214
        %v376 = vunpack.c.l.b16 %v216
        %v377 = vpack.c.b16 %v376, %v375
        %v379 = vsel %vm227, %v377, 0
        %v382 = vsel %vm227, %v223, 0
        %384 = vmatprep.subr.bf16.mxu0 0
        %385 = vmatpush1.bf16.xpose.msra.mxu0 %v382
        %386 = vmatprep.subr.bf16.mxu0 0
        %387 = vmatpush1.bf16.xpose.msra.mxu0 0
        %388 = vmatprep.subr.bf16.mxu0 0
        %389 = vmatpush1.bf16.xpose.msra.mxu0 0
        %390 = vmatprep.subr.bf16.mxu0 0
        %391 = vmatpush1.bf16.xpose.msra.mxu0 0
        %392 = vmatprep.subr.bf16.mxu0 0
        %393 = vmatpush1.bf16.xpose.msra.mxu0 0
        %394 = vmatprep.subr.bf16.mxu0 0
        %395 = vmatpush1.bf16.xpose.msra.mxu0 0
        %396 = vmatprep.subr.bf16.mxu0 0
        %397 = vmatpush1.bf16.xpose.msra.mxu0 0
        %398 = vmatprep.subr.bf16.mxu0 0
        %399 = vmatpush1.bf16.xpose.msra.mxu0 0
        %400 = vmatprep.subr.bf16.mxu0 0
        %401 = vmatpush1.bf16.xpose.msra.mxu0 0
        %402 = vmatprep.subr.bf16.mxu0 0
        %403 = vmatpush1.bf16.xpose.msra.mxu0 0
        %404 = vmatprep.subr.bf16.mxu0 0
        %405 = vmatpush1.bf16.xpose.msra.mxu0 0
        %406 = vmatprep.subr.bf16.mxu0 0
        %407 = vmatpush1.bf16.xpose.msra.mxu0 0
        %408 = vmatprep.subr.bf16.mxu0 0
        %409 = vmatpush1.bf16.xpose.msra.mxu0 0
        %410 = vmatprep.subr.bf16.mxu0 0
        %411 = vmatpush1.bf16.xpose.msra.mxu0 0
        %412 = vmatprep.subr.bf16.mxu0 0
        %413 = vmatpush1.bf16.xpose.msra.mxu0 0
        %414 = vmatprep.subr.bf16.mxu0 0
        %415 = vmatpush1.bf16.xpose.msra.mxu0 0
        %416 = vmatprep.mubr.bf16.mxu0 0
        %417 = vmatmul.mubr.bf16.gmra.mrb[0].mxu0 %v379
        %v418 = vpop.f32.mrb[0].mxu0
        %v419 = vadd.f32 0.0, %v418
        %v420 = vpop.f32.mrb[0].mxu0
        %v421 = vpop.f32.mrb[0].mxu0
        %v422 = vadd.f32 0.0, %v421
        %v423 = vpop.f32.mrb[0].mxu0
        %424 = vdwg.mxu0
        %v425 = vsel %vm227, %v269, -inf
        %426 = vmax.xlane.f32.xlu0 %v425
        %v427 = vpop.xlane.xlu0 %426
        %v428 = vsel %vm227, %v272, -inf
        %429 = vmax.xlane.f32.xlu0 %v428
        %v430 = vpop.xlane.xlu0 %429
        %v431 = vsel %vm227, %v319, -inf
        %432 = vmax.xlane.f32.xlu0 %v431
        %v433 = vpop.xlane.xlu0 %432
        %v434 = vsel %vm227, %v322, -inf
        %435 = vmax.xlane.f32.xlu0 %v434
        %v436 = vpop.xlane.xlu0 %435
        %v437 = vsel %vm227, %v369, -inf
        %438 = vmax.xlane.f32.xlu0 %v437
        %v439 = vpop.xlane.xlu0 %438
        %v440 = vsel %vm227, %v372, -inf
        %441 = vmax.xlane.f32.xlu0 %v440
        %v442 = vpop.xlane.xlu0 %441
        %v443 = vsel %vm227, %v419, -inf
        %444 = vmax.xlane.f32.xlu0 %v443
        %v445 = vpop.xlane.xlu0 %444
        %v446 = vsel %vm227, %v422, -inf
        %447 = vmax.xlane.f32.xlu0 %v446
        %v448 = vpop.xlane.xlu0 %447
        %v449 = vsub.f32 %v269, %v427
        %v450 = vsub.f32 %v272, %v430
        %v451 = vsub.f32 %v319, %v433
        %v452 = vsub.f32 %v322, %v436
        %v453 = vsub.f32 %v369, %v439
        %v454 = vsub.f32 %v372, %v442
        %v455 = vsub.f32 %v419, %v445
        %v456 = vsub.f32 %v422, %v448
        %v457 = vmul.f32 %v449, 1.442695
        %v458 = vpow.pop %v457
        %v459 = vmul.f32 %v450, 1.442695
        %v460 = vpow.pop %v459
        %v461 = vmul.f32 %v451, 1.442695
        %v462 = vpow.pop %v461
        %v463 = vmul.f32 %v452, 1.442695
        %v464 = vpow.pop %v463
        %v465 = vmul.f32 %v453, 1.442695
        %v466 = vpow.pop %v465
        %v467 = vmul.f32 %v454, 1.442695
        %v468 = vpow.pop %v467
        %v469 = vmul.f32 %v455, 1.442695
        %v470 = vpow.pop %v469
        %v471 = vmul.f32 %v456, 1.442695
        %v472 = vpow.pop %v471
        %v473 = vsel %vm227, %v458, 0.0
        %474 = vadd.xlane.f32.xlu0 %v473
        %v475 = vpop.xlane.xlu0 %474
        %v476 = vsel %vm227, %v460, 0.0
        %477 = vadd.xlane.f32.xlu0 %v476
        %v478 = vpop.xlane.xlu0 %477
        %v479 = vsel %vm227, %v462, 0.0
        %480 = vadd.xlane.f32.xlu0 %v479
        %v481 = vpop.xlane.xlu0 %480
        %v482 = vsel %vm227, %v464, 0.0
        %483 = vadd.xlane.f32.xlu0 %v482
        %v484 = vpop.xlane.xlu0 %483
        %v485 = vsel %vm227, %v466, 0.0
        %486 = vadd.xlane.f32.xlu0 %v485
        %v487 = vpop.xlane.xlu0 %486
        %v488 = vsel %vm227, %v468, 0.0
        %489 = vadd.xlane.f32.xlu0 %v488
        %v490 = vpop.xlane.xlu0 %489
        %v491 = vsel %vm227, %v470, 0.0
        %492 = vadd.xlane.f32.xlu0 %v491
        %v493 = vpop.xlane.xlu0 %492
        %v494 = vsel %vm227, %v472, 0.0
        %495 = vadd.xlane.f32.xlu0 %v494
        %v496 = vpop.xlane.xlu0 %495
        %v497 = vrcp.pop %v475
        %v498 = vrcp.pop %v478
        %v499 = vrcp.pop %v481
        %v500 = vrcp.pop %v484
        %v501 = vrcp.pop %v487
        %v502 = vrcp.pop %v490
        %v503 = vrcp.pop %v493
        %v504 = vrcp.pop %v496
        %v505 = vpack.c.bf16 %v460, %v458
        %v506 = vpack.c.bf16 %v464, %v462
        %v507 = vpack.c.bf16 %v468, %v466
        %v508 = vpack.c.bf16 %v472, %v470
        %v509 = vunpack.c.l.b16 %v202
        %v510 = vpack.c.b16 %v509, %v509
        %511 = vrot.lane.b32.xlu0 %v510, 96
        %v512 = vpop.permute.xlu0 %511
        %v514 = vsel %vm227, %v505, 0
        %vm516 = vcmask 1043456
        %v518 = vsel %vm516, %v512, 0
        %520 = vmatprep.subr.bf16.mxu0 0
        %521 = vmatpush1.bf16.msra.mxu0 %v518
        %522 = vmatprep.subr.bf16.mxu0 0
        %523 = vmatpush1.bf16.msra.mxu0 0
        %524 = vmatprep.subr.bf16.mxu0 0
        %525 = vmatpush1.bf16.msra.mxu0 0
        %526 = vmatprep.subr.bf16.mxu0 0
        %527 = vmatpush1.bf16.msra.mxu0 0
        %528 = vmatprep.subr.bf16.mxu0 0
        %529 = vmatpush1.bf16.msra.mxu0 0
        %530 = vmatprep.subr.bf16.mxu0 0
        %531 = vmatpush1.bf16.msra.mxu0 0
        %532 = vmatprep.subr.bf16.mxu0 0
        %533 = vmatpush1.bf16.msra.mxu0 0
        %534 = vmatprep.subr.bf16.mxu0 0
        %535 = vmatpush1.bf16.msra.mxu0 0
        %536 = vmatprep.subr.bf16.mxu0 0
        %537 = vmatpush1.bf16.msra.mxu0 0
        %538 = vmatprep.subr.bf16.mxu0 0
        %539 = vmatpush1.bf16.msra.mxu0 0
        %540 = vmatprep.subr.bf16.mxu0 0
        %541 = vmatpush1.bf16.msra.mxu0 0
        %542 = vmatprep.subr.bf16.mxu0 0
        %543 = vmatpush1.bf16.msra.mxu0 0
        %544 = vmatprep.subr.bf16.mxu0 0
        %545 = vmatpush1.bf16.msra.mxu0 0
        %546 = vmatprep.subr.bf16.mxu0 0
        %547 = vmatpush1.bf16.msra.mxu0 0
        %548 = vmatprep.subr.bf16.mxu0 0
        %549 = vmatpush1.bf16.msra.mxu0 0
        %550 = vmatprep.subr.bf16.mxu0 0
        %551 = vmatpush1.bf16.msra.mxu0 0
        %552 = vmatprep.mubr.bf16.mxu0 0
        %553 = vmatmul.mubr.bf16.gmra.mrb[0].mxu0 %v514
        %v554 = vpop.f32.mrb[0].mxu0
        %v555 = vadd.f32 0.0, %v554
        %v556 = vpop.f32.mrb[0].mxu0
        %v557 = vpop.f32.mrb[0].mxu0
        %v558 = vadd.f32 0.0, %v557
        %v559 = vpop.f32.mrb[0].mxu0
        %560 = vdwg.mxu0
        %v561 = vunpack.c.l.b16 %v219
        %v562 = vpack.c.b16 %v561, %v561
        %563 = vrot.lane.b32.xlu0 %v562, 96
        %v564 = vpop.permute.xlu0 %563
        %v566 = vsel %vm227, %v506, 0
        %v569 = vsel %vm516, %v564, 0
        %571 = vmatprep.subr.bf16.mxu0 0
        %572 = vmatpush1.bf16.msra.mxu0 %v569
        %573 = vmatprep.subr.bf16.mxu0 0
        %574 = vmatpush1.bf16.msra.mxu0 0
        %575 = vmatprep.subr.bf16.mxu0 0
        %576 = vmatpush1.bf16.msra.mxu0 0
        %577 = vmatprep.subr.bf16.mxu0 0
        %578 = vmatpush1.bf16.msra.mxu0 0
        %579 = vmatprep.subr.bf16.mxu0 0
        %580 = vmatpush1.bf16.msra.mxu0 0
        %581 = vmatprep.subr.bf16.mxu0 0
        %582 = vmatpush1.bf16.msra.mxu0 0
        %583 = vmatprep.subr.bf16.mxu0 0
        %584 = vmatpush1.bf16.msra.mxu0 0
        %585 = vmatprep.subr.bf16.mxu0 0
        %586 = vmatpush1.bf16.msra.mxu0 0
        %587 = vmatprep.subr.bf16.mxu0 0
        %588 = vmatpush1.bf16.msra.mxu0 0
        %589 = vmatprep.subr.bf16.mxu0 0
        %590 = vmatpush1.bf16.msra.mxu0 0
        %591 = vmatprep.subr.bf16.mxu0 0
        %592 = vmatpush1.bf16.msra.mxu0 0
        %593 = vmatprep.subr.bf16.mxu0 0
        %594 = vmatpush1.bf16.msra.mxu0 0
        %595 = vmatprep.subr.bf16.mxu0 0
        %596 = vmatpush1.bf16.msra.mxu0 0
        %597 = vmatprep.subr.bf16.mxu0 0
        %598 = vmatpush1.bf16.msra.mxu0 0
        %599 = vmatprep.subr.bf16.mxu0 0
        %600 = vmatpush1.bf16.msra.mxu0 0
        %601 = vmatprep.subr.bf16.mxu0 0
        %602 = vmatpush1.bf16.msra.mxu0 0
        %603 = vmatprep.mubr.bf16.mxu0 0
        %604 = vmatmul.mubr.bf16.gmra.mrb[0].mxu0 %v566
        %v605 = vpop.f32.mrb[0].mxu0
        %v606 = vadd.f32 0.0, %v605
        %v607 = vpop.f32.mrb[0].mxu0
        %v608 = vpop.f32.mrb[0].mxu0
        %v609 = vadd.f32 0.0, %v608
        %v610 = vpop.f32.mrb[0].mxu0
        %611 = vdwg.mxu0
        %v612 = vunpack.c.l.b16 %v221
        %v613 = vpack.c.b16 %v612, %v612
        %614 = vrot.lane.b32.xlu0 %v613, 96
        %v615 = vpop.permute.xlu0 %614
        %v617 = vsel %vm227, %v507, 0
        %v620 = vsel %vm516, %v615, 0
        %622 = vmatprep.subr.bf16.mxu0 0
        %623 = vmatpush1.bf16.msra.mxu0 %v620
        %624 = vmatprep.subr.bf16.mxu0 0
        %625 = vmatpush1.bf16.msra.mxu0 0
        %626 = vmatprep.subr.bf16.mxu0 0
        %627 = vmatpush1.bf16.msra.mxu0 0
        %628 = vmatprep.subr.bf16.mxu0 0
        %629 = vmatpush1.bf16.msra.mxu0 0
        %630 = vmatprep.subr.bf16.mxu0 0
        %631 = vmatpush1.bf16.msra.mxu0 0
        %632 = vmatprep.subr.bf16.mxu0 0
        %633 = vmatpush1.bf16.msra.mxu0 0
        %634 = vmatprep.subr.bf16.mxu0 0
        %635 = vmatpush1.bf16.msra.mxu0 0
        %636 = vmatprep.subr.bf16.mxu0 0
        %637 = vmatpush1.bf16.msra.mxu0 0
        %638 = vmatprep.subr.bf16.mxu0 0
        %639 = vmatpush1.bf16.msra.mxu0 0
        %640 = vmatprep.subr.bf16.mxu0 0
        %641 = vmatpush1.bf16.msra.mxu0 0
        %642 = vmatprep.subr.bf16.mxu0 0
        %643 = vmatpush1.bf16.msra.mxu0 0
        %644 = vmatprep.subr.bf16.mxu0 0
        %645 = vmatpush1.bf16.msra.mxu0 0
        %646 = vmatprep.subr.bf16.mxu0 0
        %647 = vmatpush1.bf16.msra.mxu0 0
        %648 = vmatprep.subr.bf16.mxu0 0
        %649 = vmatpush1.bf16.msra.mxu0 0
        %650 = vmatprep.subr.bf16.mxu0 0
        %651 = vmatpush1.bf16.msra.mxu0 0
        %652 = vmatprep.subr.bf16.mxu0 0
        %653 = vmatpush1.bf16.msra.mxu0 0
        %654 = vmatprep.mubr.bf16.mxu0 0
        %655 = vmatmul.mubr.bf16.gmra.mrb[0].mxu0 %v617
        %v656 = vpop.f32.mrb[0].mxu0
        %v657 = vadd.f32 0.0, %v656
        %v658 = vpop.f32.mrb[0].mxu0
        %v659 = vpop.f32.mrb[0].mxu0
        %v660 = vadd.f32 0.0, %v659
        %v661 = vpop.f32.mrb[0].mxu0
        %662 = vdwg.mxu0
        %v663 = vunpack.c.l.b16 %v223
        %v664 = vpack.c.b16 %v663, %v663
        %665 = vrot.lane.b32.xlu0 %v664, 96
        %v666 = vpop.permute.xlu0 %665
        %v668 = vsel %vm227, %v508, 0
        %v671 = vsel %vm516, %v666, 0
        %673 = vmatprep.subr.bf16.mxu0 0
        %674 = vmatpush1.bf16.msra.mxu0 %v671
        %675 = vmatprep.subr.bf16.mxu0 0
        %676 = vmatpush1.bf16.msra.mxu0 0
        %677 = vmatprep.subr.bf16.mxu0 0
        %678 = vmatpush1.bf16.msra.mxu0 0
        %679 = vmatprep.subr.bf16.mxu0 0
        %680 = vmatpush1.bf16.msra.mxu0 0
        %681 = vmatprep.subr.bf16.mxu0 0
        %682 = vmatpush1.bf16.msra.mxu0 0
        %683 = vmatprep.subr.bf16.mxu0 0
        %684 = vmatpush1.bf16.msra.mxu0 0
        %685 = vmatprep.subr.bf16.mxu0 0
        %686 = vmatpush1.bf16.msra.mxu0 0
        %687 = vmatprep.subr.bf16.mxu0 0
        %688 = vmatpush1.bf16.msra.mxu0 0
        %689 = vmatprep.subr.bf16.mxu0 0
        %690 = vmatpush1.bf16.msra.mxu0 0
        %691 = vmatprep.subr.bf16.mxu0 0
        %692 = vmatpush1.bf16.msra.mxu0 0
        %693 = vmatprep.subr.bf16.mxu0 0
        %694 = vmatpush1.bf16.msra.mxu0 0
        %695 = vmatprep.subr.bf16.mxu0 0
        %696 = vmatpush1.bf16.msra.mxu0 0
        %697 = vmatprep.subr.bf16.mxu0 0
        %698 = vmatpush1.bf16.msra.mxu0 0
        %699 = vmatprep.subr.bf16.mxu0 0
        %700 = vmatpush1.bf16.msra.mxu0 0
        %701 = vmatprep.subr.bf16.mxu0 0
        %702 = vmatpush1.bf16.msra.mxu0 0
        %703 = vmatprep.subr.bf16.mxu0 0
        %704 = vmatpush1.bf16.msra.mxu0 0
        %705 = vmatprep.mubr.bf16.mxu0 0
        %706 = vmatmul.mubr.bf16.gmra.mrb[0].mxu0 %v668
        %v707 = vpop.f32.mrb[0].mxu0
        %v708 = vadd.f32 0.0, %v707
        %v709 = vpop.f32.mrb[0].mxu0
        %v710 = vpop.f32.mrb[0].mxu0
        %v711 = vadd.f32 0.0, %v710
        %v712 = vpop.f32.mrb[0].mxu0
        %713 = vdwg.mxu0
        %v714 = vmul.f32 %v555, %v497
        %v715 = vmul.f32 %v558, %v498
        %v716 = vmul.f32 %v606, %v499
        %v717 = vmul.f32 %v609, %v500
        %v718 = vmul.f32 %v657, %v501
        %v719 = vmul.f32 %v660, %v502
        %v720 = vmul.f32 %v708, %v503
        %v721 = vmul.f32 %v711, %v504
        %724 = vrot.lane.b32.xlu0 %v716, 8
        %v725 = vpop.permute.xlu0 %724
        %726 = vrot.lane.b32.xlu0 %v717, 8
        %v727 = vpop.permute.xlu0 %726
        %732 = vrot.lane.b32.xlu0 %v718, 16
        %v733 = vpop.permute.xlu0 %732
        %734 = vrot.lane.b32.xlu0 %v719, 16
        %v735 = vpop.permute.xlu0 %734
        %740 = vrot.lane.b32.xlu0 %v720, 24
        %v741 = vpop.permute.xlu0 %740
        %742 = vrot.lane.b32.xlu0 %v721, 24
        %v743 = vpop.permute.xlu0 %742
        %v746 = vsel %vm227, %v714, %v725
        %v747 = vsel %vm227, %v715, %v727
        %vm748 = vcmask 130048
        %v749 = vsel %vm748, %v746, %v733
        %v750 = vsel %vm748, %v747, %v735
        %vm751 = vcmask 195584
        %v752 = vsel %vm751, %v749, %v741
        %v753 = vsel %vm751, %v750, %v743
        %v754 = vpack.c.bf16 %v753, %v752
        %v756 = vunpack.c.l.b16 %v754
        %v757 = vunpack.c.h.b16 %v754
        %v758 = vpack.c.b16 %v756, %v756
        %v759 = vpack.c.b16 %v757, %v757
        %vm762 = vcmask 257024
        %763 = vst.msk [vmem:[%s198] sm:$0xf] %vm762, %v758
        %764 = vst.msk [vmem:[%s198 + $0x4] sm:$0xf] %vm762, %v759
        %s765 = sand.u32 %s82, 1
        %s766 = scalar_lea.sflag [#allocation4], %s765
        %s767 = sand.u32 %s82, 1
        %s768 = smul.addr %s767, 8
        %s769 = scalar_lea.vmem [#allocation7], %s768
        // Predicated region
        $region37: #{basic_transformer_block.28} parent=27 // pred_check
          %p770 = pneg %p92
        $region38: #{basic_transformer_block.28} parent=27 // pred_check_branch
          %772 = sbr.rel (%p770) target = $region40
        $region39: #{basic_transformer_block.28} parent=27 // pred_region
          %s774 = ssub.s32 128, 128
          %775 = vsyncadd %s766, %s774
          %s776 = smul.addr %s22, 2
          %s777 = smul.addr %s776, 64
          %s778 = scalar_lea.hbm %s2, %s777
          %s779 = sshll.u32 %s769, 4
          %s780 = int_to_ptr.vmem [resolvable:$true] %s779
          %785 = dma.vmem_to_hbm [thread:$0]  %s780, 128, %s778, %s766, 64, 64, 4
        $region40: #{basic_transformer_block.28} parent=27 // pred_fallthru
          _
      $region28: #{basic_transformer_block.28} parent=5 // pred_fallthru
        _
      %p786 = scmp.le.s32.totalorder 2, %s17
      // Predicated region
      $region41: #{basic_transformer_block.28} parent=5 // pred_check
        %p787 = pneg %p786
      $region42: #{basic_transformer_block.28} parent=5 // pred_check_branch
        %789 = sbr.rel (%p787) target = $region44
      $region43: #{basic_transformer_block.28} parent=5 // pred_region
        %s790 = ssub.s32 %s17, 2
        // Predicated region
        $region45: #{basic_transformer_block.28} parent=43 // pred_check
          %p791 = pneg %p98
        $region46: #{basic_transformer_block.28} parent=43 // pred_check_branch
          %793 = sbr.rel (%p791) target = $region48
        $region47: #{basic_transformer_block.28} parent=43 // pred_region
          %s794 = sand.u32 %s83, 1
          %s795 = scalar_lea.sflag [#allocation4], %s794
          %s796 = sand.u32 %s83, 1
          %s797 = smul.addr %s796, 8
          %s798 = scalar_lea.vmem [#allocation7], %s797
          %799 = dma.done %s795, 128
        $region48: #{basic_transformer_block.28} parent=43 // pred_fallthru
          _
      $region44: #{basic_transformer_block.28} parent=5 // pred_fallthru
        _
    $region6: #{basic_transformer_block.28} parent=1 // loop_footer
      %s21 = sadd.s32 1, %s17
    $region7: #{basic_transformer_block.28} parent=1 // loop_footer_branch
      %16 = sbr.rel target = $region3
    $region8: #{basic_transformer_block.28} parent=1 // loop_exit
      _
    %800 = vsyncpa [#allocation3], 1
    %s801 = scalar_lea.sflag [#allocation3], 1
    %802 = vsyncpa %s801, 1
    %803 = vsyncpa [#allocation6], 1
    %s804 = scalar_lea.sflag [#allocation6], 1
    %805 = vsyncpa %s804, 1
    %806 = vsyncpa [#allocation4], 1
    %s807 = scalar_lea.sflag [#allocation4], 1
    %808 = vsyncpa %s807, 1

</llo_original>
